<compile_context>
chip_gen: v7x
topology: tpu7x:2x2x1
jax: 0.10.0
libtpu: 0.0.40
codegen_flags: <defaults>
</compile_context>

<pallas_src>
import math
import functools

import numpy as np
import jax
import jax.numpy as jnp
from jax.experimental import pallas as pl
from jax.experimental.pallas import tpu as pltpu


# ----------------------------------------------------------------------------
# ALiBi slopes + full (H, S, S) bias (host-side, static given num_heads, S).
# ----------------------------------------------------------------------------
def get_slopes(n):
    def get_slopes_power_of_2(n):
        start = 2 ** (-2 ** (-(math.log2(n) - 3)))
        ratio = start
        return [start * ratio ** i for i in range(n)]

    if math.log2(n).is_integer():
        return get_slopes_power_of_2(n)
    else:
        closest_power_of_2 = 2 ** math.floor(math.log2(n))
        return (get_slopes_power_of_2(closest_power_of_2)
                + get_slopes(2 * closest_power_of_2)[0::2][: n - closest_power_of_2])


def make_alibi_bias(num_heads: int, max_position: int,
                    neg: float = float("-inf")) -> jnp.ndarray:
    """(num_heads, S, S) float32 bias == alibi + non_sym_mask."""
    nh3 = num_heads // 3
    zeros = jnp.zeros((max_position, max_position), jnp.float32)
    mask_right = jnp.triu(jnp.full_like(zeros, neg), 1)    # heads [0, H/3): mask j > i
    mask_left = jnp.tril(jnp.full_like(zeros, neg), -1)    # heads [H/3, 2H/3): mask j < i
    mask = jnp.concatenate(
        [jnp.broadcast_to(mask_right, (nh3, max_position, max_position)),
         jnp.broadcast_to(mask_left, (nh3, max_position, max_position)),
         jnp.broadcast_to(zeros, (nh3, max_position, max_position))],
        axis=0)

    slopes = -jnp.asarray(get_slopes(nh3), jnp.float32)
    pos = jnp.arange(max_position, dtype=jnp.float32) ** 0.5
    rel = jnp.abs(pos[None, :] - pos[:, None])               # |sqrt(j) - sqrt(i)|
    alibi = slopes[:, None, None] * rel[None, :, :]
    alibi = jnp.tile(alibi, (3, 1, 1))
    return alibi + mask


# ----------------------------------------------------------------------------
# Pallas kernel: one batch element per grid step, all heads in one body.
# ----------------------------------------------------------------------------
def attn_kernel(x_ref, wqkv_ref, bqkv_ref, wo_ref, bo_ref, gamma_ref, beta_ref,
                bias_ref, o_ref, *, num_heads, att_size, eps, compute_dtype):
    H, A = num_heads, att_size
    S = x_ref.shape[1]
    E = x_ref.shape[2]

    x = x_ref[0]                                          # (S, E) f32
    xc = x.astype(compute_dtype)                          # cast once per batch
    xb = jnp.broadcast_to(xc[None, :, :], (3 * H, S, E))  # (3H, S, E)

    # Fused Q/K/V projection: ONE batched einsum over the stacked-head axis.
    qkv = (jnp.einsum("hse,hea->hsa", xb, wqkv_ref[...],
                      preferred_element_type=jnp.float32)
           + bqkv_ref[...])                               # (3H, S, A) f32
    q = qkv[0 * H:1 * H].astype(compute_dtype)            # (H, S, A)
    k = qkv[1 * H:2 * H].astype(compute_dtype)            # (H, S, A)
    v = qkv[2 * H:3 * H].astype(compute_dtype)            # (H, S, A)

    # scores = q @ k^T / sqrt(A) + precomputed ALiBi / non-symmetric bias
    s = jnp.einsum("hqa,hka->hqk", q, k,
                   preferred_element_type=jnp.float32)    # (H, S, S) f32
    s = s * (1.0 / math.sqrt(att_size)) + bias_ref[...]

    # softmax in f32; normalize after the P@V matmul.
    m = jnp.max(s, axis=-1, keepdims=True)
    p = jnp.exp(s - m)
    l = jnp.sum(p, axis=-1, keepdims=True)                # > 0: diagonal never masked
    ctx = jnp.einsum("hqk,hka->hqa", p.astype(compute_dtype), v,
                     preferred_element_type=jnp.float32)  # (H, S, A) f32
    inv_l = pl.reciprocal(l, approx=True)                 # EUP slot
    inv_l = inv_l * (2.0 - l * inv_l)                     # one Newton step -> ~f32 exact
    ctx = ctx * inv_l

    # Output projection per head, then reduce over heads (whole-tile adds).
    outh = jnp.einsum("hsa,hae->hse", ctx.astype(compute_dtype), wo_ref[...],
                      preferred_element_type=jnp.float32)  # (H, S, E) f32
    out = outh[0]
    for hh in range(1, H):                                 # H=6: trivial unrolled adds
        out = out + outh[hh]

    # bias + residual + LayerNorm (all f32).
    res = out + bo_ref[...] + x
    mean = jnp.mean(res, axis=-1, keepdims=True)
    cen = res - mean
    var = jnp.mean(cen * cen, axis=-1, keepdims=True)
    y = cen * jax.lax.rsqrt(var + eps)
    o_ref[0] = (y * gamma_ref[...] + beta_ref[...]).astype(o_ref.dtype)


def attention_forward(x, params, *, num_heads, att_size, eps,
                      compute_dtype=jnp.float32):
    B, S, E = x.shape
    H, A = num_heads, att_size
    HA = H * A
    assert H % 3 == 0, "non_symmetric attention requires num_heads % 3 == 0"

    # ---- host-side layout plumbing (free): fused, pre-transposed panels ----
    def head_panels(w):                                   # (HA, E) -> (H, E, A)
        return w.reshape(H, A, E).transpose(0, 2, 1)

    wqkv = jnp.concatenate([head_panels(params["wq"]),
                            head_panels(params["wk"]),
                            head_panels(params["wv"])],
                           axis=0).astype(compute_dtype)            # (3H, E, A)
    bqkv = jnp.concatenate([params["bq"].reshape(H, 1, A),
                            params["bk"].reshape(H, 1, A),
                            params["bv"].reshape(H, 1, A)],
                           axis=0).astype(jnp.float32)              # (3H, 1, A)
    wo3 = params["wo"].reshape(E, H, A).transpose(1, 2, 0).astype(compute_dtype)  # (H, A, E)
    bo = params["bo"].reshape(1, E).astype(jnp.float32)
    gamma = params["gamma"].reshape(1, E).astype(jnp.float32)
    beta = params["beta"].reshape(1, E).astype(jnp.float32)
    # Finite -1e30 instead of -inf: exp underflows to exactly 0, robust for f32.
    bias = make_alibi_bias(H, S, neg=-1e30).astype(jnp.float32)     # (H, S, S)

    kernel = functools.partial(attn_kernel, num_heads=H, att_size=A,
                               eps=eps, compute_dtype=compute_dtype)

    def shared_spec(shape):
        nd = len(shape)
        return pl.BlockSpec(shape, lambda b, _nd=nd: (0,) * _nd)

    cdt_bytes = int(jnp.dtype(compute_dtype).itemsize)
    cost = pl.CostEstimate(
        flops=int(2 * B * (S * E * 3 * HA + 2 * H * S * S * A + H * S * A * E)),
        transcendentals=int(B * (H * S * S + H * S + S)),
        bytes_accessed=int(2 * B * S * E * 4                         # x in + out
                           + B * (3 * HA * E + HA * E) * cdt_bytes   # fused weight slabs
                           + B * (3 * HA + 3 * E + H * S * S) * 4))  # biases / LN / alibi

    return pl.pallas_call(
        kernel,
        out_shape=jax.ShapeDtypeStruct((B, S, E), jnp.float32),
        grid=(B,),                                        # 1 step per batch element
        in_specs=[
            pl.BlockSpec((1, S, E), lambda b: (b, 0, 0)),  # x
            shared_spec((3 * H, E, A)),                    # fused Wq|Wk|Wv panels
            shared_spec((3 * H, 1, A)),                    # fused bq|bk|bv
            shared_spec((H, A, E)),                        # Wo panels
            shared_spec((1, E)),                           # bo
            shared_spec((1, E)), shared_spec((1, E)),      # gamma, beta
            shared_spec((H, S, S)),                        # precomputed alibi+mask bias
        ],
        out_specs=pl.BlockSpec((1, S, E), lambda b: (b, 0, 0)),
        compiler_params=pltpu.CompilerParams(
            dimension_semantics=("parallel",)),            # batch -> 2 TCs on v7x
        cost_estimate=cost,
    )(x, wqkv, bqkv, wo3, bo, gamma, beta, bias)


# ----------------------------------------------------------------------------
# Pure-JAX reference (mirrors the PyTorch forward, dropout = identity).
# ----------------------------------------------------------------------------
def reference(x, p, bias, *, num_heads, att_size, eps):
    B, S, E = x.shape

    def proj(w, b):
        y = x @ w.T + b.reshape(-1)[None, None, :]
        return jnp.transpose(y.reshape(B, S, num_heads, att_size), (0, 2, 1, 3))

    q = proj(p["wq"], p["bq"])
    k = proj(p["wk"], p["bk"])
    v = proj(p["wv"], p["bv"])
    scores = jnp.einsum("bhsa,bhta->bhst", q, k) / math.sqrt(att_size)
    scores = scores + bias[None]
    probs = jax.nn.softmax(scores, axis=-1)
    ctx = jnp.einsum("bhst,bhta->bhsa", probs, v)
    ctx = jnp.transpose(ctx, (0, 2, 1, 3)).reshape(B, S, num_heads * att_size)
    out = ctx @ p["wo"].T + p["bo"].reshape(-1)[None, None, :]
    res = out + x
    mean = jnp.mean(res, axis=-1, keepdims=True)
    var = jnp.mean(jnp.square(res - mean), axis=-1, keepdims=True)
    y = (res - mean) / jnp.sqrt(var + eps)
    return y * p["gamma"].reshape(-1) + p["beta"].reshape(-1)


# ----------------------------------------------------------------------------
if __name__ == "__main__":
    # "config": kernel_size (embed) = 32, num_heads = 6, attention_size = 8,
    # layer_norm_eps = 1e-12, attention_type = 'non_symmetric'
    B, S, E = 2, 8, 32
    H, A = 6, 8
    HA = H * A
    EPS = 1e-12

    key = jax.random.PRNGKey(0)
    ks = jax.random.split(key, 8)
    params = {
        "wq": 0.02 * jax.random.normal(ks[0], (HA, E), jnp.float32),
        "bq": 0.02 * jax.random.normal(ks[1], (1, HA), jnp.float32),
        "wk": 0.02 * jax.random.normal(ks[2], (HA, E), jnp.float32),
        "bk": 0.02 * jax.random.normal(ks[3], (1, HA), jnp.float32),
        "wv": 0.02 * jax.random.normal(ks[4], (HA, E), jnp.float32),
        "bv": 0.02 * jax.random.normal(ks[5], (1, HA), jnp.float32),
        "wo": 0.02 * jax.random.normal(ks[6], (E, HA), jnp.float32),
        "bo": jnp.zeros((1, E), jnp.float32),
        "gamma": jnp.ones((1, E), jnp.float32),
        "beta": jnp.zeros((1, E), jnp.float32),
    }

    x = jax.random.normal(jax.random.PRNGKey(1), (B, S, E), jnp.float32)

    bias_ref = make_alibi_bias(H, S)                     # -inf bias, reference only
    ref = reference(x, params, bias_ref, num_heads=H, att_size=A, eps=EPS)

    # f32 path (default; best on v5e) — strict check against the reference.
    out = attention_forward(x, params, num_heads=H, att_size=A, eps=EPS)
    out = jax.block_until_ready(out)
    np.testing.assert_allclose(np.asarray(out), np.asarray(ref),
                               rtol=1e-3, atol=1e-4)

    # bf16 MXU-operand path (v6e/v7x): softmax stats / residual / LayerNorm
    # stay in f32 — looser tolerance vs. the f32 reference.
    out_bf16 = attention_forward(x, params, num_heads=H, att_size=A, eps=EPS,
                                 compute_dtype=jnp.bfloat16)
    out_bf16 = jax.block_until_ready(out_bf16)
    np.testing.assert_allclose(np.asarray(out_bf16), np.asarray(ref),
                               rtol=5e-2, atol=5e-2)

    print("KERNEL_OK")
</pallas_src>

<mosaic_0001>
module attributes {stable_mosaic.version = 11 : i64} {
  func.func @attn_kernel(%arg0: i32, %arg1: memref<1x8x32xf32, #tpu.memory_space<vmem>>, %arg2: memref<18x32x8xf32, #tpu.memory_space<vmem>>, %arg3: memref<18x1x8xf32, #tpu.memory_space<vmem>>, %arg4: memref<6x8x32xf32, #tpu.memory_space<vmem>>, %arg5: memref<1x32xf32, #tpu.memory_space<vmem>>, %arg6: memref<1x32xf32, #tpu.memory_space<vmem>>, %arg7: memref<1x32xf32, #tpu.memory_space<vmem>>, %arg8: memref<6x8x8xf32, #tpu.memory_space<vmem>>, %arg9: memref<1x8x32xf32, #tpu.memory_space<vmem>>) attributes {dimension_semantics = [#tpu.dimension_semantics<parallel>], iteration_bounds = array<i64: 2>, scalar_prefetch = 0 : i64, scratch_operands = 0 : i64, tpu.core_type = #tpu.core_type<tc>, window_params = [{transform_indices = @transform_0, window_bounds = array<i64: 1, 8, 32>}, {pipeline_mode = #tpu.pipeline_mode<synchronous>, transform_indices = @transform_1, window_bounds = array<i64: 18, 32, 8>}, {pipeline_mode = #tpu.pipeline_mode<synchronous>, transform_indices = @transform_2, window_bounds = array<i64: 18, 1, 8>}, {pipeline_mode = #tpu.pipeline_mode<synchronous>, transform_indices = @transform_3, window_bounds = array<i64: 6, 8, 32>}, {pipeline_mode = #tpu.pipeline_mode<synchronous>, transform_indices = @transform_4, window_bounds = array<i64: 1, 32>}, {pipeline_mode = #tpu.pipeline_mode<synchronous>, transform_indices = @transform_5, window_bounds = array<i64: 1, 32>}, {pipeline_mode = #tpu.pipeline_mode<synchronous>, transform_indices = @transform_6, window_bounds = array<i64: 1, 32>}, {pipeline_mode = #tpu.pipeline_mode<synchronous>, transform_indices = @transform_7, window_bounds = array<i64: 6, 8, 8>}, {transform_indices = @transform_8, window_bounds = array<i64: 1, 8, 32>}]} {
    %c0 = arith.constant 0 : index
    %c0_0 = arith.constant 0 : index
    %c0_1 = arith.constant 0 : index
    %0 = vector.load %arg1[%c0, %c0_0, %c0_1] : memref<1x8x32xf32, #tpu.memory_space<vmem>>, vector<1x8x32xf32>
    %1 = vector.shape_cast %0 : vector<1x8x32xf32> to vector<8x32xf32>
    %2 = vector.shape_cast %1 : vector<8x32xf32> to vector<1x8x32xf32>
    %3 = vector.shape_cast %2 : vector<1x8x32xf32> to vector<1x8x32xf32>
    %4 = vector.broadcast %3 : vector<1x8x32xf32> to vector<18x8x32xf32>
    %c0_2 = arith.constant 0 : index
    %c0_3 = arith.constant 0 : index
    %c0_4 = arith.constant 0 : index
    %5 = vector.load %arg2[%c0_2, %c0_3, %c0_4] : memref<18x32x8xf32, #tpu.memory_space<vmem>>, vector<18x32x8xf32>
    "tpu.trace_start"() <{level = 10 : i32, message = "hse,hea->hsa"}> : () -> ()
    %cst = arith.constant dense<0.000000e+00> : vector<18x8x8xf32>
    %6 = tpu.matmul %4, %5, %cst {dimension_numbers = #tpu.dot_dimension_numbers<[2], [1], [1], [2], [0, 0, 0, 1, 1, 2], [0], [0]>} : vector<18x8x32xf32>, vector<18x32x8xf32>, vector<18x8x8xf32> -> vector<18x8x8xf32>
    "tpu.trace_stop"() : () -> ()
    %c0_5 = arith.constant 0 : index
    %c0_6 = arith.constant 0 : index
    %c0_7 = arith.constant 0 : index
    %7 = vector.load %arg3[%c0_5, %c0_6, %c0_7] : memref<18x1x8xf32, #tpu.memory_space<vmem>>, vector<18x1x8xf32>
    %8 = vector.broadcast %7 : vector<18x1x8xf32> to vector<18x8x8xf32>
    %9 = arith.addf %6, %8 : vector<18x8x8xf32>
    %10 = vector.extract_strided_slice %9 {offsets = [0, 0, 0], sizes = [6, 8, 8], strides = [1, 1, 1]} : vector<18x8x8xf32> to vector<6x8x8xf32>
    %11 = vector.extract_strided_slice %9 {offsets = [6, 0, 0], sizes = [6, 8, 8], strides = [1, 1, 1]} : vector<18x8x8xf32> to vector<6x8x8xf32>
    %12 = vector.extract_strided_slice %9 {offsets = [12, 0, 0], sizes = [6, 8, 8], strides = [1, 1, 1]} : vector<18x8x8xf32> to vector<6x8x8xf32>
    "tpu.trace_start"() <{level = 10 : i32, message = "hqa,hka->hqk"}> : () -> ()
    %cst_8 = arith.constant dense<0.000000e+00> : vector<6x8x8xf32>
    %13 = tpu.matmul %10, %11, %cst_8 {dimension_numbers = #tpu.dot_dimension_numbers<[2], [2], [1], [1], [0, 0, 0, 1, 1, 1], [0], [0]>} : vector<6x8x8xf32>, vector<6x8x8xf32>, vector<6x8x8xf32> -> vector<6x8x8xf32>
    "tpu.trace_stop"() : () -> ()
    %cst_9 = arith.constant 0.353553385 : f32
    %14 = vector.broadcast %cst_9 : f32 to vector<6x8x8xf32>
    %15 = arith.mulf %13, %14 : vector<6x8x8xf32>
    %c0_10 = arith.constant 0 : index
    %c0_11 = arith.constant 0 : index
    %c0_12 = arith.constant 0 : index
    %16 = vector.load %arg8[%c0_10, %c0_11, %c0_12] : memref<6x8x8xf32, #tpu.memory_space<vmem>>, vector<6x8x8xf32>
    %17 = arith.addf %15, %16 : vector<6x8x8xf32>
    %cst_13 = arith.constant dense<0xFF800000> : vector<6x8xf32>
    %18 = vector.multi_reduction <maximumf>, %17, %cst_13 [2] : vector<6x8x8xf32> to vector<6x8xf32>
    %19 = vector.shape_cast %18 : vector<6x8xf32> to vector<6x8x1xf32>
    %20 = vector.broadcast %19 : vector<6x8x1xf32> to vector<6x8x8xf32>
    %21 = arith.subf %17, %20 : vector<6x8x8xf32>
    %22 = math.exp %21 : vector<6x8x8xf32>
    %cst_14 = arith.constant dense<0.000000e+00> : vector<6x8xf32>
    %23 = vector.multi_reduction <add>, %22, %cst_14 [2] : vector<6x8x8xf32> to vector<6x8xf32>
    %24 = vector.shape_cast %23 : vector<6x8xf32> to vector<6x8x1xf32>
    "tpu.trace_start"() <{level = 10 : i32, message = "hqk,hka->hqa"}> : () -> ()
    %cst_15 = arith.constant dense<0.000000e+00> : vector<6x8x8xf32>
    %25 = tpu.matmul %22, %12, %cst_15 {dimension_numbers = #tpu.dot_dimension_numbers<[2], [1], [1], [2], [0, 0, 0, 1, 1, 2], [0], [0]>} : vector<6x8x8xf32>, vector<6x8x8xf32>, vector<6x8x8xf32> -> vector<6x8x8xf32>
    "tpu.trace_stop"() : () -> ()
    %26 = tpu.reciprocal %24 {approx = true} : vector<6x8x1xf32> -> vector<6x8x1xf32>
    %27 = arith.mulf %24, %26 : vector<6x8x1xf32>
    %cst_16 = arith.constant 2.000000e+00 : f32
    %28 = vector.broadcast %cst_16 : f32 to vector<6x8x1xf32>
    %29 = arith.subf %28, %27 : vector<6x8x1xf32>
    %30 = arith.mulf %26, %29 : vector<6x8x1xf32>
    %31 = vector.broadcast %30 : vector<6x8x1xf32> to vector<6x8x8xf32>
    %32 = arith.mulf %25, %31 : vector<6x8x8xf32>
    %c0_17 = arith.constant 0 : index
    %c0_18 = arith.constant 0 : index
    %c0_19 = arith.constant 0 : index
    %33 = vector.load %arg4[%c0_17, %c0_18, %c0_19] : memref<6x8x32xf32, #tpu.memory_space<vmem>>, vector<6x8x32xf32>
    "tpu.trace_start"() <{level = 10 : i32, message = "hsa,hae->hse"}> : () -> ()
    %cst_20 = arith.constant dense<0.000000e+00> : vector<6x8x32xf32>
    %34 = tpu.matmul %32, %33, %cst_20 {dimension_numbers = #tpu.dot_dimension_numbers<[2], [1], [1], [2], [0, 0, 0, 1, 1, 2], [0], [0]>} : vector<6x8x8xf32>, vector<6x8x32xf32>, vector<6x8x32xf32> -> vector<6x8x32xf32>
    "tpu.trace_stop"() : () -> ()
    %35 = vector.extract_strided_slice %34 {offsets = [0, 0, 0], sizes = [1, 8, 32], strides = [1, 1, 1]} : vector<6x8x32xf32> to vector<1x8x32xf32>
    %36 = vector.shape_cast %35 : vector<1x8x32xf32> to vector<8x32xf32>
    %37 = vector.extract_strided_slice %34 {offsets = [1, 0, 0], sizes = [1, 8, 32], strides = [1, 1, 1]} : vector<6x8x32xf32> to vector<1x8x32xf32>
    %38 = vector.shape_cast %37 : vector<1x8x32xf32> to vector<8x32xf32>
    %39 = arith.addf %36, %38 : vector<8x32xf32>
    %40 = vector.extract_strided_slice %34 {offsets = [2, 0, 0], sizes = [1, 8, 32], strides = [1, 1, 1]} : vector<6x8x32xf32> to vector<1x8x32xf32>
    %41 = vector.shape_cast %40 : vector<1x8x32xf32> to vector<8x32xf32>
    %42 = arith.addf %39, %41 : vector<8x32xf32>
    %43 = vector.extract_strided_slice %34 {offsets = [3, 0, 0], sizes = [1, 8, 32], strides = [1, 1, 1]} : vector<6x8x32xf32> to vector<1x8x32xf32>
    %44 = vector.shape_cast %43 : vector<1x8x32xf32> to vector<8x32xf32>
    %45 = arith.addf %42, %44 : vector<8x32xf32>
    %46 = vector.extract_strided_slice %34 {offsets = [4, 0, 0], sizes = [1, 8, 32], strides = [1, 1, 1]} : vector<6x8x32xf32> to vector<1x8x32xf32>
    %47 = vector.shape_cast %46 : vector<1x8x32xf32> to vector<8x32xf32>
    %48 = arith.addf %45, %47 : vector<8x32xf32>
    %49 = vector.extract_strided_slice %34 {offsets = [5, 0, 0], sizes = [1, 8, 32], strides = [1, 1, 1]} : vector<6x8x32xf32> to vector<1x8x32xf32>
    %50 = vector.shape_cast %49 : vector<1x8x32xf32> to vector<8x32xf32>
    %51 = arith.addf %48, %50 : vector<8x32xf32>
    %c0_21 = arith.constant 0 : index
    %c0_22 = arith.constant 0 : index
    %52 = vector.load %arg5[%c0_21, %c0_22] : memref<1x32xf32, #tpu.memory_space<vmem>>, vector<1x32xf32>
    %53 = vector.broadcast %52 : vector<1x32xf32> to vector<8x32xf32>
    %54 = arith.addf %51, %53 : vector<8x32xf32>
    %55 = arith.addf %54, %1 : vector<8x32xf32>
    %cst_23 = arith.constant dense<0.000000e+00> : vector<8xf32>
    %56 = vector.multi_reduction <add>, %55, %cst_23 [1] : vector<8x32xf32> to vector<8xf32>
    %57 = vector.shape_cast %56 : vector<8xf32> to vector<8x1xf32>
    %cst_24 = arith.constant 3.200000e+01 : f32
    %58 = vector.broadcast %cst_24 : f32 to vector<8x1xf32>
    %59 = arith.divf %57, %58 : vector<8x1xf32>
    %60 = vector.broadcast %59 : vector<8x1xf32> to vector<8x32xf32>
    %61 = arith.subf %55, %60 : vector<8x32xf32>
    %62 = arith.mulf %61, %61 : vector<8x32xf32>
    %cst_25 = arith.constant dense<0.000000e+00> : vector<8xf32>
    %63 = vector.multi_reduction <add>, %62, %cst_25 [1] : vector<8x32xf32> to vector<8xf32>
    %64 = vector.shape_cast %63 : vector<8xf32> to vector<8x1xf32>
    %cst_26 = arith.constant 3.200000e+01 : f32
    %65 = vector.broadcast %cst_26 : f32 to vector<8x1xf32>
    %66 = arith.divf %64, %65 : vector<8x1xf32>
    %cst_27 = arith.constant 9.99999996E-13 : f32
    %67 = vector.broadcast %cst_27 : f32 to vector<8x1xf32>
    %68 = arith.addf %66, %67 : vector<8x1xf32>
    %69 = math.rsqrt %68 : vector<8x1xf32>
    %70 = vector.broadcast %69 : vector<8x1xf32> to vector<8x32xf32>
    %71 = arith.mulf %61, %70 : vector<8x32xf32>
    %c0_28 = arith.constant 0 : index
    %c0_29 = arith.constant 0 : index
    %72 = vector.load %arg6[%c0_28, %c0_29] : memref<1x32xf32, #tpu.memory_space<vmem>>, vector<1x32xf32>
    %73 = vector.broadcast %72 : vector<1x32xf32> to vector<8x32xf32>
    %74 = arith.mulf %71, %73 : vector<8x32xf32>
    %c0_30 = arith.constant 0 : index
    %c0_31 = arith.constant 0 : index
    %75 = vector.load %arg7[%c0_30, %c0_31] : memref<1x32xf32, #tpu.memory_space<vmem>>, vector<1x32xf32>
    %76 = vector.broadcast %75 : vector<1x32xf32> to vector<8x32xf32>
    %77 = arith.addf %74, %76 : vector<8x32xf32>
    %c0_32 = arith.constant 0 : index
    %c0_33 = arith.constant 0 : index
    %c0_34 = arith.constant 0 : index
    %78 = vector.load %arg9[%c0_32, %c0_33, %c0_34] : memref<1x8x32xf32, #tpu.memory_space<vmem>>, vector<1x8x32xf32>
    %79 = vector.shape_cast %78 : vector<1x8x32xf32> to vector<8x32xf32>
    %80 = vector.shape_cast %77 : vector<8x32xf32> to vector<1x8x32xf32>
    tpu.vector_store %arg9[%c0_32, %c0_33, %c0_34], %80 {strides = array<i32>} : memref<1x8x32xf32, #tpu.memory_space<vmem>>, vector<1x8x32xf32>,
    return
  }
  func.func @transform_0(%arg0: i32) -> (i32, i32, i32) {
    %c0_i32 = arith.constant 0 : i32
    %c0_i32_0 = arith.constant 0 : i32
    %c0_i32_1 = arith.constant 0 : i32
    return %arg0, %c0_i32, %c0_i32_0 : i32, i32, i32
  }
  func.func @transform_1(%arg0: i32) -> (i32, i32, i32) {
    %c0_i32 = arith.constant 0 : i32
    %c0_i32_0 = arith.constant 0 : i32
    %c0_i32_1 = arith.constant 0 : i32
    %c0_i32_2 = arith.constant 0 : i32
    return %c0_i32, %c0_i32_0, %c0_i32_1 : i32, i32, i32
  }
  func.func @transform_2(%arg0: i32) -> (i32, i32, i32) {
    %c0_i32 = arith.constant 0 : i32
    %c0_i32_0 = arith.constant 0 : i32
    %c0_i32_1 = arith.constant 0 : i32
    %c0_i32_2 = arith.constant 0 : i32
    return %c0_i32, %c0_i32_0, %c0_i32_1 : i32, i32, i32
  }
  func.func @transform_3(%arg0: i32) -> (i32, i32, i32) {
    %c0_i32 = arith.constant 0 : i32
    %c0_i32_0 = arith.constant 0 : i32
    %c0_i32_1 = arith.constant 0 : i32
    %c0_i32_2 = arith.constant 0 : i32
    return %c0_i32, %c0_i32_0, %c0_i32_1 : i32, i32, i32
  }
  func.func @transform_4(%arg0: i32) -> (i32, i32) {
    %c0_i32 = arith.constant 0 : i32
    %c0_i32_0 = arith.constant 0 : i32
    %c0_i32_1 = arith.constant 0 : i32
    return %c0_i32, %c0_i32_0 : i32, i32
  }
  func.func @transform_5(%arg0: i32) -> (i32, i32) {
    %c0_i32 = arith.constant 0 : i32
    %c0_i32_0 = arith.constant 0 : i32
    %c0_i32_1 = arith.constant 0 : i32
    return %c0_i32, %c0_i32_0 : i32, i32
  }
  func.func @transform_6(%arg0: i32) -> (i32, i32) {
    %c0_i32 = arith.constant 0 : i32
    %c0_i32_0 = arith.constant 0 : i32
    %c0_i32_1 = arith.constant 0 : i32
    return %c0_i32, %c0_i32_0 : i32, i32
  }
  func.func @transform_7(%arg0: i32) -> (i32, i32, i32) {
    %c0_i32 = arith.constant 0 : i32
    %c0_i32_0 = arith.constant 0 : i32
    %c0_i32_1 = arith.constant 0 : i32
    %c0_i32_2 = arith.constant 0 : i32
    return %c0_i32, %c0_i32_0, %c0_i32_1 : i32, i32, i32
  }
  func.func @transform_8(%arg0: i32) -> (i32, i32, i32) {
    %c0_i32 = arith.constant 0 : i32
    %c0_i32_0 = arith.constant 0 : i32
    %c0_i32_1 = arith.constant 0 : i32
    return %arg0, %c0_i32, %c0_i32_0 : i32, i32, i32
  }
}

</mosaic_0001>

<llo_original>
// kernel: tpu_custom_call.1
$region0: #{tpu_custom_call.1}
  #allocation0 [shape = 'u32[]', space=smem, size = 0x4, offset = 0x4, fixed_abs, tag = 'smem constant byte address 0x4 - core index']
  #allocation1 [shape = 'u32[144,128]{1,0:T(1,128)}', space=vmem, size = 0x12000, scoped, tag = 'internal scratch']
  %s0 = inlined_call_operand.vmem [shape: f32[2,8,32], index: 0, kind: input, shape index: {}]
  %s1 = inlined_call_operand.vmem [shape: f32[18,32,8], index: 1, kind: input, shape index: {}]
  %s2 = inlined_call_operand.vmem [shape: f32[18,1,8], index: 2, kind: input, shape index: {}]
  %s3 = inlined_call_operand.vmem [shape: f32[6,8,32], index: 3, kind: input, shape index: {}]
  %s4 = inlined_call_operand.vmem [shape: f32[1,32], index: 4, kind: input, shape index: {}]
  %s5 = inlined_call_operand.vmem [shape: f32[1,32], index: 5, kind: input, shape index: {}]
  %s6 = inlined_call_operand.vmem [shape: f32[1,32], index: 6, kind: input, shape index: {}]
  %s7 = inlined_call_operand.vmem [shape: f32[6,8,8], index: 7, kind: input, shape index: {}]
  %s8 = inlined_call_operand.hbm [shape: f32[2,8,32], index: 8, kind: output, shape index: {}]
  %s9 = sld [smem:[#allocation0]]
  $region65: #{tpu_custom_call.1} parent=0
    _
  %s11 = ssub.s32 1, %s9
  %s12 = scalar_select 0, %s11, %s9
  $region1: #{tpu_custom_call.1} parent=0
    #allocation2 [shape = 'u8[8192]{0}', space=vmem, size = 0x2000, scoped, tag = 'output window, operand 0']
    #allocation3 [shape = 's32[2]{0}', space=sflag, size = 0x8, scoped, tag = 'scoped memory for tpu_custom_call.1']
    %13 = vsyncpa [#allocation3], 0
    %s14 = scalar_lea.sflag [#allocation3], 1
    %15 = vsyncpa %s14, 0
    loop: start=0, step=1, limit=4
    $region2: #{tpu_custom_call.1} parent=1 // loop_pre_header
      _
    $region3: #{tpu_custom_call.1} parent=1 // loop_header
      %s17 = sphi 0, %s21
      %p18 = scmp.ge.s32.totalorder %s17, 4
      %s27 = sphi 0, %s29
      %s30 = sphi 0, %s27
      %s31 = sphi 0, %s30
      %s47 = sphi 0, %s31
      %s51 = sphi 0, %s51
      %s53 = sphi 0, %s51
      %s54 = sphi 0, %s53
      %s68 = sphi 0, %s54
      %s72 = sphi 0, %s72
      %s74 = sphi 0, %s72
      %s75 = sphi 0, %s74
      %s89 = sphi 0, %s75
      %s93 = sphi 0, %s93
      %s95 = sphi 0, %s93
      %s96 = sphi 0, %s95
      %s110 = sphi 0, %s96
      %s114 = sphi 0, %s114
      %s116 = sphi 0, %s114
      %s117 = sphi 0, %s116
      %s131 = sphi 0, %s117
      %s135 = sphi 0, %s135
      %s137 = sphi 0, %s135
      %s138 = sphi 0, %s137
      %s152 = sphi 0, %s138
      %s156 = sphi 0, %s156
      %s158 = sphi 0, %s156
      %s159 = sphi 0, %s158
      %s173 = sphi 0, %s159
      %s177 = sphi 0, %s177
      %s179 = sphi 0, %s177
      %s180 = sphi 0, %s179
      %s194 = sphi 0, %s180
      %s200 = sphi 0, %s202
      %s203 = sphi 0, %s200
      %s204 = sphi 0, %s203
      %s220 = sphi 0, %s204
    $region4: #{tpu_custom_call.1} parent=1 // loop_header_branch
      %20 = sbr.rel (%p18) target = $region8
    $region5: #{tpu_custom_call.1} parent=1 // loop_body
      %s22 = ssub.s32 %s17, 1
      %s23 = ssub.s32 %s17, 2
      %s24 = sadd.s32 %s17, 1
      %s25 = ssub.s32 %s17, %s24
      %p26 = scmp.eq.s32.totalorder %s25, 0
      %s28 = sadd.s32 %s27, 1
      %s29 = scalar_select %p26, %s27, %s28
      %p32 = pneg %p26
      %p33 = scmp.eq.s32.totalorder %s17, 1
      %p34 = por %p32, %p33
      %p35 = scmp.ne.s32.totalorder %s27, %s30
      %p36 = scmp.eq.s32.totalorder %s17, 0
      %p37 = por %p35, %p36
      %p38 = scmp.ne.s32.totalorder %s27, %s30
      %p39 = scmp.eq.s32.totalorder %s22, 1
      %p40 = por %p38, %p39
      %p41 = scmp.ne.s32.totalorder %s30, %s31
      %p42 = scmp.eq.s32.totalorder %s22, 0
      %p43 = por %p41, %p42
      %p44 = scmp.ne.s32.totalorder %s30, %s31
      %p45 = scmp.eq.s32.totalorder %s23, 1
      %p46 = por %p44, %p45
      %p48 = scmp.ne.s32.totalorder %s31, %s47
      %p49 = scmp.eq.s32.totalorder %s23, 0
      %p50 = por %p48, %p49
      %s52 = sadd.s32 %s51, 1
      %p55 = scmp.eq.s32.totalorder %s17, 1
      %p56 = scmp.ne.s32.totalorder %s51, %s53
      %p57 = scmp.eq.s32.totalorder %s17, 0
      %p58 = por %p56, %p57
      %p59 = scmp.ne.s32.totalorder %s51, %s53
      %p60 = scmp.eq.s32.totalorder %s22, 1
      %p61 = por %p59, %p60
      %p62 = scmp.ne.s32.totalorder %s53, %s54
      %p63 = scmp.eq.s32.totalorder %s22, 0
      %p64 = por %p62, %p63
      %p65 = scmp.ne.s32.totalorder %s53, %s54
      %p66 = scmp.eq.s32.totalorder %s23, 1
      %p67 = por %p65, %p66
      %p69 = scmp.ne.s32.totalorder %s54, %s68
      %p70 = scmp.eq.s32.totalorder %s23, 0
      %p71 = por %p69, %p70
      %s73 = sadd.s32 %s72, 1
      %p76 = scmp.eq.s32.totalorder %s17, 1
      %p77 = scmp.ne.s32.totalorder %s72, %s74
      %p78 = scmp.eq.s32.totalorder %s17, 0
      %p79 = por %p77, %p78
      %p80 = scmp.ne.s32.totalorder %s72, %s74
      %p81 = scmp.eq.s32.totalorder %s22, 1
      %p82 = por %p80, %p81
      %p83 = scmp.ne.s32.totalorder %s74, %s75
      %p84 = scmp.eq.s32.totalorder %s22, 0
      %p85 = por %p83, %p84
      %p86 = scmp.ne.s32.totalorder %s74, %s75
      %p87 = scmp.eq.s32.totalorder %s23, 1
      %p88 = por %p86, %p87
      %p90 = scmp.ne.s32.totalorder %s75, %s89
      %p91 = scmp.eq.s32.totalorder %s23, 0
      %p92 = por %p90, %p91
      %s94 = sadd.s32 %s93, 1
      %p97 = scmp.eq.s32.totalorder %s17, 1
      %p98 = scmp.ne.s32.totalorder %s93, %s95
      %p99 = scmp.eq.s32.totalorder %s17, 0
      %p100 = por %p98, %p99
      %p101 = scmp.ne.s32.totalorder %s93, %s95
      %p102 = scmp.eq.s32.totalorder %s22, 1
      %p103 = por %p101, %p102
      %p104 = scmp.ne.s32.totalorder %s95, %s96
      %p105 = scmp.eq.s32.totalorder %s22, 0
      %p106 = por %p104, %p105
      %p107 = scmp.ne.s32.totalorder %s95, %s96
      %p108 = scmp.eq.s32.totalorder %s23, 1
      %p109 = por %p107, %p108
      %p111 = scmp.ne.s32.totalorder %s96, %s110
      %p112 = scmp.eq.s32.totalorder %s23, 0
      %p113 = por %p111, %p112
      %s115 = sadd.s32 %s114, 1
      %p118 = scmp.eq.s32.totalorder %s17, 1
      %p119 = scmp.ne.s32.totalorder %s114, %s116
      %p120 = scmp.eq.s32.totalorder %s17, 0
      %p121 = por %p119, %p120
      %p122 = scmp.ne.s32.totalorder %s114, %s116
      %p123 = scmp.eq.s32.totalorder %s22, 1
      %p124 = por %p122, %p123
      %p125 = scmp.ne.s32.totalorder %s116, %s117
      %p126 = scmp.eq.s32.totalorder %s22, 0
      %p127 = por %p125, %p126
      %p128 = scmp.ne.s32.totalorder %s116, %s117
      %p129 = scmp.eq.s32.totalorder %s23, 1
      %p130 = por %p128, %p129
      %p132 = scmp.ne.s32.totalorder %s117, %s131
      %p133 = scmp.eq.s32.totalorder %s23, 0
      %p134 = por %p132, %p133
      %s136 = sadd.s32 %s135, 1
      %p139 = scmp.eq.s32.totalorder %s17, 1
      %p140 = scmp.ne.s32.totalorder %s135, %s137
      %p141 = scmp.eq.s32.totalorder %s17, 0
      %p142 = por %p140, %p141
      %p143 = scmp.ne.s32.totalorder %s135, %s137
      %p144 = scmp.eq.s32.totalorder %s22, 1
      %p145 = por %p143, %p144
      %p146 = scmp.ne.s32.totalorder %s137, %s138
      %p147 = scmp.eq.s32.totalorder %s22, 0
      %p148 = por %p146, %p147
      %p149 = scmp.ne.s32.totalorder %s137, %s138
      %p150 = scmp.eq.s32.totalorder %s23, 1
      %p151 = por %p149, %p150
      %p153 = scmp.ne.s32.totalorder %s138, %s152
      %p154 = scmp.eq.s32.totalorder %s23, 0
      %p155 = por %p153, %p154
      %s157 = sadd.s32 %s156, 1
      %p160 = scmp.eq.s32.totalorder %s17, 1
      %p161 = scmp.ne.s32.totalorder %s156, %s158
      %p162 = scmp.eq.s32.totalorder %s17, 0
      %p163 = por %p161, %p162
      %p164 = scmp.ne.s32.totalorder %s156, %s158
      %p165 = scmp.eq.s32.totalorder %s22, 1
      %p166 = por %p164, %p165
      %p167 = scmp.ne.s32.totalorder %s158, %s159
      %p168 = scmp.eq.s32.totalorder %s22, 0
      %p169 = por %p167, %p168
      %p170 = scmp.ne.s32.totalorder %s158, %s159
      %p171 = scmp.eq.s32.totalorder %s23, 1
      %p172 = por %p170, %p171
      %p174 = scmp.ne.s32.totalorder %s159, %s173
      %p175 = scmp.eq.s32.totalorder %s23, 0
      %p176 = por %p174, %p175
      %s178 = sadd.s32 %s177, 1
      %p181 = scmp.eq.s32.totalorder %s17, 1
      %p182 = scmp.ne.s32.totalorder %s177, %s179
      %p183 = scmp.eq.s32.totalorder %s17, 0
      %p184 = por %p182, %p183
      %p185 = scmp.ne.s32.totalorder %s177, %s179
      %p186 = scmp.eq.s32.totalorder %s22, 1
      %p187 = por %p185, %p186
      %p188 = scmp.ne.s32.totalorder %s179, %s180
      %p189 = scmp.eq.s32.totalorder %s22, 0
      %p190 = por %p188, %p189
      %p191 = scmp.ne.s32.totalorder %s179, %s180
      %p192 = scmp.eq.s32.totalorder %s23, 1
      %p193 = por %p191, %p192
      %p195 = scmp.ne.s32.totalorder %s180, %s194
      %p196 = scmp.eq.s32.totalorder %s23, 0
      %p197 = por %p195, %p196
      %s198 = ssub.s32 %s17, %s24
      %p199 = scmp.eq.s32.totalorder %s198, 0
      %s201 = sadd.s32 %s200, 1
      %s202 = scalar_select %p199, %s200, %s201
      %p205 = pneg %p199
      %p206 = scmp.eq.s32.totalorder %s17, 1
      %p207 = por %p205, %p206
      %p208 = scmp.ne.s32.totalorder %s200, %s203
      %p209 = scmp.eq.s32.totalorder %s17, 0
      %p210 = por %p208, %p209
      %p211 = scmp.ne.s32.totalorder %s200, %s203
      %p212 = scmp.eq.s32.totalorder %s22, 1
      %p213 = por %p211, %p212
      %p214 = scmp.ne.s32.totalorder %s203, %s204
      %p215 = scmp.eq.s32.totalorder %s22, 0
      %p216 = por %p214, %p215
      %p217 = scmp.ne.s32.totalorder %s203, %s204
      %p218 = scmp.eq.s32.totalorder %s23, 1
      %p219 = por %p217, %p218
      %p221 = scmp.ne.s32.totalorder %s204, %s220
      %p222 = scmp.eq.s32.totalorder %s23, 0
      %p223 = por %p221, %p222
      %p224 = scmp.le.s32.totalorder 1, %s17
      %p225 = scmp.lt.s32.totalorder %s17, 3
      %p226 = pnand %p224, %p225
      %p227 = pneg %p226
      // Predicated region
      $region9: #{tpu_custom_call.1} parent=5 // pred_check
        _
      $region10: #{tpu_custom_call.1} parent=5 // pred_check_branch
        %229 = sbr.rel (%p226) target = $region12
      $region11: #{tpu_custom_call.1} parent=5 // pred_region
        %s230 = ssub.s32 %s17, 1
        // Predicated region
        $region13: #{tpu_custom_call.1} parent=11 // pred_check
          %p231 = pneg %p64
        $region14: #{tpu_custom_call.1} parent=11 // pred_check_branch
          %233 = sbr.rel (%p231) target = $region16
        $region15: #{tpu_custom_call.1} parent=11 // pred_region
          _
        $region16: #{tpu_custom_call.1} parent=11 // pred_fallthru
          _
        // Predicated region
        $region17: #{tpu_custom_call.1} parent=11 // pred_check
          %p234 = pneg %p85
        $region18: #{tpu_custom_call.1} parent=11 // pred_check_branch
          %236 = sbr.rel (%p234) target = $region20
        $region19: #{tpu_custom_call.1} parent=11 // pred_region
          _
        $region20: #{tpu_custom_call.1} parent=11 // pred_fallthru
          _
        // Predicated region
        $region21: #{tpu_custom_call.1} parent=11 // pred_check
          %p237 = pneg %p106
        $region22: #{tpu_custom_call.1} parent=11 // pred_check_branch
          %239 = sbr.rel (%p237) target = $region24
        $region23: #{tpu_custom_call.1} parent=11 // pred_region
          _
        $region24: #{tpu_custom_call.1} parent=11 // pred_fallthru
          _
        // Predicated region
        $region25: #{tpu_custom_call.1} parent=11 // pred_check
          %p240 = pneg %p127
        $region26: #{tpu_custom_call.1} parent=11 // pred_check_branch
          %242 = sbr.rel (%p240) target = $region28
        $region27: #{tpu_custom_call.1} parent=11 // pred_region
          _
        $region28: #{tpu_custom_call.1} parent=11 // pred_fallthru
          _
        // Predicated region
        $region29: #{tpu_custom_call.1} parent=11 // pred_check
          %p243 = pneg %p148
        $region30: #{tpu_custom_call.1} parent=11 // pred_check_branch
          %245 = sbr.rel (%p243) target = $region32
        $region31: #{tpu_custom_call.1} parent=11 // pred_region
          _
        $region32: #{tpu_custom_call.1} parent=11 // pred_fallthru
          _
        // Predicated region
        $region33: #{tpu_custom_call.1} parent=11 // pred_check
          %p246 = pneg %p169
        $region34: #{tpu_custom_call.1} parent=11 // pred_check_branch
          %248 = sbr.rel (%p246) target = $region36
        $region35: #{tpu_custom_call.1} parent=11 // pred_region
          _
        $region36: #{tpu_custom_call.1} parent=11 // pred_fallthru
          _
        // Predicated region
        $region37: #{tpu_custom_call.1} parent=11 // pred_check
          %p249 = pneg %p190
        $region38: #{tpu_custom_call.1} parent=11 // pred_check_branch
          %251 = sbr.rel (%p249) target = $region40
        $region39: #{tpu_custom_call.1} parent=11 // pred_region
          _
        $region40: #{tpu_custom_call.1} parent=11 // pred_fallthru
          _
      $region12: #{tpu_custom_call.1} parent=5 // pred_fallthru
        _
      %p252 = scmp.lt.s32.totalorder %s17, 2
      // Predicated region
      $region41: #{tpu_custom_call.1} parent=5 // pred_check
        %p253 = pneg %p252
      $region42: #{tpu_custom_call.1} parent=5 // pred_check_branch
        %255 = sbr.rel (%p253) target = $region44
      $region43: #{tpu_custom_call.1} parent=5 // pred_region
        // Predicated region
        $region45: #{tpu_custom_call.1} parent=43 // pred_check
          %p256 = pneg %p37
        $region46: #{tpu_custom_call.1} parent=43 // pred_check_branch
          %258 = sbr.rel (%p256) target = $region48
        $region47: #{tpu_custom_call.1} parent=43 // pred_region
          %p259 = scmp.lt.s32.totalorder %s17, 1
          %s260 = scalar_select %p259, %s17, 1
          %s261 = smul.addr %s260, 8
          %s262 = scalar_lea.vmem %s0, %s261
        $region48: #{tpu_custom_call.1} parent=43 // pred_fallthru
          _
      $region44: #{tpu_custom_call.1} parent=5 // pred_fallthru
        _
      %p263 = scmp.le.s32.totalorder 1, %s17
      %p264 = scmp.lt.s32.totalorder %s17, 3
      %p265 = pnand %p263, %p264
      %p266 = pneg %p265
      // Predicated region
      $region49: #{tpu_custom_call.1} parent=5 // pred_check
        _
      $region50: #{tpu_custom_call.1} parent=5 // pred_check_branch
        %268 = sbr.rel (%p265) target = $region52
      $region51: #{tpu_custom_call.1} parent=5 // pred_region
        %s269 = ssub.s32 %s17, 1
        %p270 = scmp.lt.s32.totalorder %s22, 1
        %s271 = scalar_select %p270, %s22, 1
        %s272 = smul.addr %s271, 8
        %s273 = scalar_lea.vmem %s0, %s272
        %p274 = pneg %p43
        %p275 = pneg %p40
        %p276 = pneg %p64
        %p277 = pneg %p61
        %p278 = pneg %p85
        %p279 = pneg %p82
        %p280 = pneg %p106
        %p281 = pneg %p103
        %p282 = pneg %p127
        %p283 = pneg %p124
        %p284 = pneg %p148
        %p285 = pneg %p145
        %p286 = pneg %p169
        %p287 = pneg %p166
        %p288 = pneg %p190
        %p289 = pneg %p187
        %p290 = pneg %p216
        %p291 = pneg %p213
        %s292 = sand.u32 %s203, 1
        %s293 = scalar_lea.sflag [#allocation3], %s292
        %s294 = sand.u32 %s203, 1
        %s295 = smul.addr %s294, 8
        %s296 = scalar_lea.vmem [#allocation2], %s295
        %p297 = scmp.lt.s32.totalorder %s22, 1
        %s298 = scalar_select %p297, %s22, 1
        %s299 = smul.addr %s298, 8
        %s300 = scalar_lea.vmem %s0, %s299
        %v301 = vld [vmem:[%s300] sm:$0xff]
        %v302 = vld [vmem:[%s1] sm:$0xff]
        %v303 = vld [vmem:[%s1 + $0x8] sm:$0xff]
        %v304 = vld [vmem:[%s1 + $0x10] sm:$0xff]
        %v305 = vld [vmem:[%s1 + $0x18] sm:$0xff]
        %v306 = vld [vmem:[%s1 + $0x20] sm:$0xff]
        %v307 = vld [vmem:[%s1 + $0x28] sm:$0xff]
        %v308 = vld [vmem:[%s1 + $0x30] sm:$0xff]
        %v309 = vld [vmem:[%s1 + $0x38] sm:$0xff]
        %v310 = vld [vmem:[%s1 + $0x40] sm:$0xff]
        %v311 = vld [vmem:[%s1 + $0x48] sm:$0xff]
        %v312 = vld [vmem:[%s1 + $0x50] sm:$0xff]
        %v313 = vld [vmem:[%s1 + $0x58] sm:$0xff]
        %v314 = vld [vmem:[%s1 + $0x60] sm:$0xff]
        %v315 = vld [vmem:[%s1 + $0x68] sm:$0xff]
        %v316 = vld [vmem:[%s1 + $0x70] sm:$0xff]
        %v317 = vld [vmem:[%s1 + $0x78] sm:$0xff]
        %v318 = vld [vmem:[%s1 + $0x80] sm:$0xff]
        %v319 = vld [vmem:[%s1 + $0x88] sm:$0xff]
        %v320 = vld [vmem:[%s1 + $0x90] sm:$0xff]
        %v321 = vld [vmem:[%s1 + $0x98] sm:$0xff]
        %v322 = vld [vmem:[%s1 + $0xa0] sm:$0xff]
        %v323 = vld [vmem:[%s1 + $0xa8] sm:$0xff]
        %v324 = vld [vmem:[%s1 + $0xb0] sm:$0xff]
        %v325 = vld [vmem:[%s1 + $0xb8] sm:$0xff]
        %v326 = vld [vmem:[%s1 + $0xc0] sm:$0xff]
        %v327 = vld [vmem:[%s1 + $0xc8] sm:$0xff]
        %v328 = vld [vmem:[%s1 + $0xd0] sm:$0xff]
        %v329 = vld [vmem:[%s1 + $0xd8] sm:$0xff]
        %v330 = vld [vmem:[%s1 + $0xe0] sm:$0xff]
        %v331 = vld [vmem:[%s1 + $0xe8] sm:$0xff]
        %v332 = vld [vmem:[%s1 + $0xf0] sm:$0xff]
        %v333 = vld [vmem:[%s1 + $0xf8] sm:$0xff]
        %v334 = vld [vmem:[%s1 + $0x100] sm:$0xff]
        %v335 = vld [vmem:[%s1 + $0x108] sm:$0xff]
        %v336 = vld [vmem:[%s1 + $0x110] sm:$0xff]
        %v337 = vld [vmem:[%s1 + $0x118] sm:$0xff]
        %v338 = vld [vmem:[%s1 + $0x120] sm:$0xff]
        %v339 = vld [vmem:[%s1 + $0x128] sm:$0xff]
        %v340 = vld [vmem:[%s1 + $0x130] sm:$0xff]
        %v341 = vld [vmem:[%s1 + $0x138] sm:$0xff]
        %v342 = vld [vmem:[%s1 + $0x140] sm:$0xff]
        %v343 = vld [vmem:[%s1 + $0x148] sm:$0xff]
        %v344 = vld [vmem:[%s1 + $0x150] sm:$0xff]
        %v345 = vld [vmem:[%s1 + $0x158] sm:$0xff]
        %v346 = vld [vmem:[%s1 + $0x160] sm:$0xff]
        %v347 = vld [vmem:[%s1 + $0x168] sm:$0xff]
        %v348 = vld [vmem:[%s1 + $0x170] sm:$0xff]
        %v349 = vld [vmem:[%s1 + $0x178] sm:$0xff]
        %v350 = vld [vmem:[%s1 + $0x180] sm:$0xff]
        %v351 = vld [vmem:[%s1 + $0x188] sm:$0xff]
        %v352 = vld [vmem:[%s1 + $0x190] sm:$0xff]
        %v353 = vld [vmem:[%s1 + $0x198] sm:$0xff]
        %v354 = vld [vmem:[%s1 + $0x1a0] sm:$0xff]
        %v355 = vld [vmem:[%s1 + $0x1a8] sm:$0xff]
        %v356 = vld [vmem:[%s1 + $0x1b0] sm:$0xff]
        %v357 = vld [vmem:[%s1 + $0x1b8] sm:$0xff]
        %v358 = vld [vmem:[%s1 + $0x1c0] sm:$0xff]
        %v359 = vld [vmem:[%s1 + $0x1c8] sm:$0xff]
        %v360 = vld [vmem:[%s1 + $0x1d0] sm:$0xff]
        %v361 = vld [vmem:[%s1 + $0x1d8] sm:$0xff]
        %v362 = vld [vmem:[%s1 + $0x1e0] sm:$0xff]
        %v363 = vld [vmem:[%s1 + $0x1e8] sm:$0xff]
        %v364 = vld [vmem:[%s1 + $0x1f0] sm:$0xff]
        %v365 = vld [vmem:[%s1 + $0x1f8] sm:$0xff]
        %v366 = vld [vmem:[%s1 + $0x200] sm:$0xff]
        %v367 = vld [vmem:[%s1 + $0x208] sm:$0xff]
        %v368 = vld [vmem:[%s1 + $0x210] sm:$0xff]
        %v369 = vld [vmem:[%s1 + $0x218] sm:$0xff]
        %v370 = vld [vmem:[%s1 + $0x220] sm:$0xff]
        %v371 = vld [vmem:[%s1 + $0x228] sm:$0xff]
        %v372 = vld [vmem:[%s1 + $0x230] sm:$0xff]
        %v373 = vld [vmem:[%s1 + $0x238] sm:$0xff]
        %v374 = vld [vmem:[%s2] sm:$0x1]
        %v375 = vld [vmem:[%s2 + $0x1] sm:$0x1]
        %v376 = vld [vmem:[%s2 + $0x2] sm:$0x1]
        %v377 = vld [vmem:[%s2 + $0x3] sm:$0x1]
        %v378 = vld [vmem:[%s2 + $0x4] sm:$0x1]
        %v379 = vld [vmem:[%s2 + $0x5] sm:$0x1]
        %v380 = vld [vmem:[%s2 + $0x6] sm:$0x1]
        %v381 = vld [vmem:[%s2 + $0x7] sm:$0x1]
        %v382 = vld [vmem:[%s2 + $0x8] sm:$0x1]
        %v383 = vld [vmem:[%s2 + $0x9] sm:$0x1]
        %v384 = vld [vmem:[%s2 + $0xa] sm:$0x1]
        %v385 = vld [vmem:[%s2 + $0xb] sm:$0x1]
        %v386 = vld [vmem:[%s2 + $0xc] sm:$0x1]
        %v387 = vld [vmem:[%s2 + $0xd] sm:$0x1]
        %v388 = vld [vmem:[%s2 + $0xe] sm:$0x1]
        %v389 = vld [vmem:[%s2 + $0xf] sm:$0x1]
        %v390 = vld [vmem:[%s2 + $0x10] sm:$0x1]
        %v391 = vld [vmem:[%s2 + $0x11] sm:$0x1]
        %v410 = vlaneseq
        %v411 = vshrl.u32 %v410, 7
        %v412 = vsub.s32 0, %v411
        %v413 = vrot.slane %v374, %v412
        %v414 = vlaneseq
        %v415 = vshrl.u32 %v414, 7
        %v416 = vsub.s32 0, %v415
        %v417 = vrot.slane %v375, %v416
        %v418 = vlaneseq
        %v419 = vshrl.u32 %v418, 7
        %v420 = vsub.s32 0, %v419
        %v421 = vrot.slane %v376, %v420
        %v422 = vlaneseq
        %v423 = vshrl.u32 %v422, 7
        %v424 = vsub.s32 0, %v423
        %v425 = vrot.slane %v377, %v424
        %v426 = vlaneseq
        %v427 = vshrl.u32 %v426, 7
        %v428 = vsub.s32 0, %v427
        %v429 = vrot.slane %v378, %v428
        %v430 = vlaneseq
        %v431 = vshrl.u32 %v430, 7
        %v432 = vsub.s32 0, %v431
        %v433 = vrot.slane %v379, %v432
        %v434 = vlaneseq
        %v435 = vshrl.u32 %v434, 7
        %v436 = vsub.s32 0, %v435
        %v437 = vrot.slane %v380, %v436
        %v438 = vlaneseq
        %v439 = vshrl.u32 %v438, 7
        %v440 = vsub.s32 0, %v439
        %v441 = vrot.slane %v381, %v440
        %v442 = vlaneseq
        %v443 = vshrl.u32 %v442, 7
        %v444 = vsub.s32 0, %v443
        %v445 = vrot.slane %v382, %v444
        %v446 = vlaneseq
        %v447 = vshrl.u32 %v446, 7
        %v448 = vsub.s32 0, %v447
        %v449 = vrot.slane %v383, %v448
        %v450 = vlaneseq
        %v451 = vshrl.u32 %v450, 7
        %v452 = vsub.s32 0, %v451
        %v453 = vrot.slane %v384, %v452
        %v454 = vlaneseq
        %v455 = vshrl.u32 %v454, 7
        %v456 = vsub.s32 0, %v455
        %v457 = vrot.slane %v385, %v456
        %v458 = vlaneseq
        %v459 = vshrl.u32 %v458, 7
        %v460 = vsub.s32 0, %v459
        %v461 = vrot.slane %v386, %v460
        %v462 = vlaneseq
        %v463 = vshrl.u32 %v462, 7
        %v464 = vsub.s32 0, %v463
        %v465 = vrot.slane %v387, %v464
        %v466 = vlaneseq
        %v467 = vshrl.u32 %v466, 7
        %v468 = vsub.s32 0, %v467
        %v469 = vrot.slane %v388, %v468
        %v470 = vlaneseq
        %v471 = vshrl.u32 %v470, 7
        %v472 = vsub.s32 0, %v471
        %v473 = vrot.slane %v389, %v472
        %v474 = vlaneseq
        %v475 = vshrl.u32 %v474, 7
        %v476 = vsub.s32 0, %v475
        %v477 = vrot.slane %v390, %v476
        %v478 = vlaneseq
        %v479 = vshrl.u32 %v478, 7
        %v480 = vsub.s32 0, %v479
        %v481 = vrot.slane %v391, %v480
        %vm500 = vcmask 261120
        %v502 = vsel %vm500, %v301, 0
        %504 = vmatprep.subr.mxu0 0.0
        %505 = vmatpush1.msra.mxu0 %v302
        %506 = vmatprep.subr.mxu0 0.0
        %507 = vmatpush1.msra.mxu0 %v303
        %508 = vmatprep.subr.mxu0 0.0
        %509 = vmatpush1.msra.mxu0 %v304
        %510 = vmatprep.subr.mxu0 0.0
        %511 = vmatpush1.msra.mxu0 %v305
        %512 = vmatprep.subr.mxu0 0.0
        %513 = vmatpush1.msra.mxu0 0.0
        %514 = vmatprep.subr.mxu0 0.0
        %515 = vmatpush1.msra.mxu0 0.0
        %516 = vmatprep.subr.mxu0 0.0
        %517 = vmatpush1.msra.mxu0 0.0
        %518 = vmatprep.subr.mxu0 0.0
        %519 = vmatpush1.msra.mxu0 0.0
        %520 = vmatprep.subr.mxu0 0.0
        %521 = vmatpush1.msra.mxu0 0.0
        %522 = vmatprep.subr.mxu0 0.0
        %523 = vmatpush1.msra.mxu0 0.0
        %524 = vmatprep.subr.mxu0 0.0
        %525 = vmatpush1.msra.mxu0 0.0
        %526 = vmatprep.subr.mxu0 0.0
        %527 = vmatpush1.msra.mxu0 0.0
        %528 = vmatprep.subr.mxu0 0.0
        %529 = vmatpush1.msra.mxu0 0.0
        %530 = vmatprep.subr.mxu0 0.0
        %531 = vmatpush1.msra.mxu0 0.0
        %532 = vmatprep.subr.mxu0 0.0
        %533 = vmatpush1.msra.mxu0 0.0
        %534 = vmatprep.subr.mxu0 0.0
        %535 = vmatpush1.msra.mxu0 0.0
        %536 = vmatprep.subr.mxu0 0.0
        %537 = vmatpush1.msra.mxu0 0.0
        %538 = vmatprep.subr.mxu0 0.0
        %539 = vmatpush1.msra.mxu0 0.0
        %540 = vmatprep.subr.mxu0 0.0
        %541 = vmatpush1.msra.mxu0 0.0
        %542 = vmatprep.subr.mxu0 0.0
        %543 = vmatpush1.msra.mxu0 0.0
        %544 = vmatprep.subr.mxu0 0.0
        %545 = vmatpush1.msra.mxu0 0.0
        %546 = vmatprep.subr.mxu0 0.0
        %547 = vmatpush1.msra.mxu0 0.0
        %548 = vmatprep.subr.mxu0 0.0
        %549 = vmatpush1.msra.mxu0 0.0
        %550 = vmatprep.subr.mxu0 0.0
        %551 = vmatpush1.msra.mxu0 0.0
        %552 = vmatprep.subr.mxu0 0.0
        %553 = vmatpush1.msra.mxu0 0.0
        %554 = vmatprep.subr.mxu0 0.0
        %555 = vmatpush1.msra.mxu0 0.0
        %556 = vmatprep.subr.mxu0 0.0
        %557 = vmatpush1.msra.mxu0 0.0
        %558 = vmatprep.subr.mxu0 0.0
        %559 = vmatpush1.msra.mxu0 0.0
        %560 = vmatprep.subr.mxu0 0.0
        %561 = vmatpush1.msra.mxu0 0.0
        %562 = vmatprep.subr.mxu0 0.0
        %563 = vmatpush1.msra.mxu0 0.0
        %564 = vmatprep.subr.mxu0 0.0
        %565 = vmatpush1.msra.mxu0 0.0
        %566 = vmatprep.subr.mxu0 0.0
        %567 = vmatpush1.msra.mxu0 0.0
        %568 = vmatprep.mubr.f32.mxu0 0.0
        %569 = vmatmul.mubr.f32.gmra.mrb[0].mxu0 %v502
        %v570 = vpop.f32.mrb[0].mxu0
        %v571 = vadd.f32 %v413, %v570
        %v572 = vpop.f32.mrb[0].mxu0
        %573 = vdwg.mxu0
        %574 = vmatprep.subr.mxu0 0.0
        %575 = vmatpush1.msra.mxu0 %v306
        %576 = vmatprep.subr.mxu0 0.0
        %577 = vmatpush1.msra.mxu0 %v307
        %578 = vmatprep.subr.mxu0 0.0
        %579 = vmatpush1.msra.mxu0 %v308
        %580 = vmatprep.subr.mxu0 0.0
        %581 = vmatpush1.msra.mxu0 %v309
        %582 = vmatprep.subr.mxu0 0.0
        %583 = vmatpush1.msra.mxu0 0.0
        %584 = vmatprep.subr.mxu0 0.0
        %585 = vmatpush1.msra.mxu0 0.0
        %586 = vmatprep.subr.mxu0 0.0
        %587 = vmatpush1.msra.mxu0 0.0
        %588 = vmatprep.subr.mxu0 0.0
        %589 = vmatpush1.msra.mxu0 0.0
        %590 = vmatprep.subr.mxu0 0.0
        %591 = vmatpush1.msra.mxu0 0.0
        %592 = vmatprep.subr.mxu0 0.0
        %593 = vmatpush1.msra.mxu0 0.0
        %594 = vmatprep.subr.mxu0 0.0
        %595 = vmatpush1.msra.mxu0 0.0
        %596 = vmatprep.subr.mxu0 0.0
        %597 = vmatpush1.msra.mxu0 0.0
        %598 = vmatprep.subr.mxu0 0.0
        %599 = vmatpush1.msra.mxu0 0.0
        %600 = vmatprep.subr.mxu0 0.0
        %601 = vmatpush1.msra.mxu0 0.0
        %602 = vmatprep.subr.mxu0 0.0
        %603 = vmatpush1.msra.mxu0 0.0
        %604 = vmatprep.subr.mxu0 0.0
        %605 = vmatpush1.msra.mxu0 0.0
        %606 = vmatprep.subr.mxu0 0.0
        %607 = vmatpush1.msra.mxu0 0.0
        %608 = vmatprep.subr.mxu0 0.0
        %609 = vmatpush1.msra.mxu0 0.0
        %610 = vmatprep.subr.mxu0 0.0
        %611 = vmatpush1.msra.mxu0 0.0
        %612 = vmatprep.subr.mxu0 0.0
        %613 = vmatpush1.msra.mxu0 0.0
        %614 = vmatprep.subr.mxu0 0.0
        %615 = vmatpush1.msra.mxu0 0.0
        %616 = vmatprep.subr.mxu0 0.0
        %617 = vmatpush1.msra.mxu0 0.0
        %618 = vmatprep.subr.mxu0 0.0
        %619 = vmatpush1.msra.mxu0 0.0
        %620 = vmatprep.subr.mxu0 0.0
        %621 = vmatpush1.msra.mxu0 0.0
        %622 = vmatprep.subr.mxu0 0.0
        %623 = vmatpush1.msra.mxu0 0.0
        %624 = vmatprep.subr.mxu0 0.0
        %625 = vmatpush1.msra.mxu0 0.0
        %626 = vmatprep.subr.mxu0 0.0
        %627 = vmatpush1.msra.mxu0 0.0
        %628 = vmatprep.subr.mxu0 0.0
        %629 = vmatpush1.msra.mxu0 0.0
        %630 = vmatprep.subr.mxu0 0.0
        %631 = vmatpush1.msra.mxu0 0.0
        %632 = vmatprep.subr.mxu0 0.0
        %633 = vmatpush1.msra.mxu0 0.0
        %634 = vmatprep.subr.mxu0 0.0
        %635 = vmatpush1.msra.mxu0 0.0
        %636 = vmatprep.subr.mxu0 0.0
        %637 = vmatpush1.msra.mxu0 0.0
        %638 = vmatprep.mubr.f32.mxu0 0.0
        %639 = vmatmul.mubr.f32.gmra.mrb[0].mxu0 %v502
        %v640 = vpop.f32.mrb[0].mxu0
        %v641 = vadd.f32 %v417, %v640
        %v642 = vpop.f32.mrb[0].mxu0
        %643 = vdwg.mxu0
        %644 = vmatprep.subr.mxu0 0.0
        %645 = vmatpush1.msra.mxu0 %v310
        %646 = vmatprep.subr.mxu0 0.0
        %647 = vmatpush1.msra.mxu0 %v311
        %648 = vmatprep.subr.mxu0 0.0
        %649 = vmatpush1.msra.mxu0 %v312
        %650 = vmatprep.subr.mxu0 0.0
        %651 = vmatpush1.msra.mxu0 %v313
        %652 = vmatprep.subr.mxu0 0.0
        %653 = vmatpush1.msra.mxu0 0.0
        %654 = vmatprep.subr.mxu0 0.0
        %655 = vmatpush1.msra.mxu0 0.0
        %656 = vmatprep.subr.mxu0 0.0
        %657 = vmatpush1.msra.mxu0 0.0
        %658 = vmatprep.subr.mxu0 0.0
        %659 = vmatpush1.msra.mxu0 0.0
        %660 = vmatprep.subr.mxu0 0.0
        %661 = vmatpush1.msra.mxu0 0.0
        %662 = vmatprep.subr.mxu0 0.0
        %663 = vmatpush1.msra.mxu0 0.0
        %664 = vmatprep.subr.mxu0 0.0
        %665 = vmatpush1.msra.mxu0 0.0
        %666 = vmatprep.subr.mxu0 0.0
        %667 = vmatpush1.msra.mxu0 0.0
        %668 = vmatprep.subr.mxu0 0.0
        %669 = vmatpush1.msra.mxu0 0.0
        %670 = vmatprep.subr.mxu0 0.0
        %671 = vmatpush1.msra.mxu0 0.0
        %672 = vmatprep.subr.mxu0 0.0
        %673 = vmatpush1.msra.mxu0 0.0
        %674 = vmatprep.subr.mxu0 0.0
        %675 = vmatpush1.msra.mxu0 0.0
        %676 = vmatprep.subr.mxu0 0.0
        %677 = vmatpush1.msra.mxu0 0.0
        %678 = vmatprep.subr.mxu0 0.0
        %679 = vmatpush1.msra.mxu0 0.0
        %680 = vmatprep.subr.mxu0 0.0
        %681 = vmatpush1.msra.mxu0 0.0
        %682 = vmatprep.subr.mxu0 0.0
        %683 = vmatpush1.msra.mxu0 0.0
        %684 = vmatprep.subr.mxu0 0.0
        %685 = vmatpush1.msra.mxu0 0.0
        %686 = vmatprep.subr.mxu0 0.0
        %687 = vmatpush1.msra.mxu0 0.0
        %688 = vmatprep.subr.mxu0 0.0
        %689 = vmatpush1.msra.mxu0 0.0
        %690 = vmatprep.subr.mxu0 0.0
        %691 = vmatpush1.msra.mxu0 0.0
        %692 = vmatprep.subr.mxu0 0.0
        %693 = vmatpush1.msra.mxu0 0.0
        %694 = vmatprep.subr.mxu0 0.0
        %695 = vmatpush1.msra.mxu0 0.0
        %696 = vmatprep.subr.mxu0 0.0
        %697 = vmatpush1.msra.mxu0 0.0
        %698 = vmatprep.subr.mxu0 0.0
        %699 = vmatpush1.msra.mxu0 0.0
        %700 = vmatprep.subr.mxu0 0.0
        %701 = vmatpush1.msra.mxu0 0.0
        %702 = vmatprep.subr.mxu0 0.0
        %703 = vmatpush1.msra.mxu0 0.0
        %704 = vmatprep.subr.mxu0 0.0
        %705 = vmatpush1.msra.mxu0 0.0
        %706 = vmatprep.subr.mxu0 0.0
        %707 = vmatpush1.msra.mxu0 0.0
        %708 = vmatprep.mubr.f32.mxu0 0.0
        %709 = vmatmul.mubr.f32.gmra.mrb[0].mxu0 %v502
        %v710 = vpop.f32.mrb[0].mxu0
        %v711 = vadd.f32 %v421, %v710
        %v712 = vpop.f32.mrb[0].mxu0
        %713 = vdwg.mxu0
        %714 = vmatprep.subr.mxu0 0.0
        %715 = vmatpush1.msra.mxu0 %v314
        %716 = vmatprep.subr.mxu0 0.0
        %717 = vmatpush1.msra.mxu0 %v315
        %718 = vmatprep.subr.mxu0 0.0
        %719 = vmatpush1.msra.mxu0 %v316
        %720 = vmatprep.subr.mxu0 0.0
        %721 = vmatpush1.msra.mxu0 %v317
        %722 = vmatprep.subr.mxu0 0.0
        %723 = vmatpush1.msra.mxu0 0.0
        %724 = vmatprep.subr.mxu0 0.0
        %725 = vmatpush1.msra.mxu0 0.0
        %726 = vmatprep.subr.mxu0 0.0
        %727 = vmatpush1.msra.mxu0 0.0
        %728 = vmatprep.subr.mxu0 0.0
        %729 = vmatpush1.msra.mxu0 0.0
        %730 = vmatprep.subr.mxu0 0.0
        %731 = vmatpush1.msra.mxu0 0.0
        %732 = vmatprep.subr.mxu0 0.0
        %733 = vmatpush1.msra.mxu0 0.0
        %734 = vmatprep.subr.mxu0 0.0
        %735 = vmatpush1.msra.mxu0 0.0
        %736 = vmatprep.subr.mxu0 0.0
        %737 = vmatpush1.msra.mxu0 0.0
        %738 = vmatprep.subr.mxu0 0.0
        %739 = vmatpush1.msra.mxu0 0.0
        %740 = vmatprep.subr.mxu0 0.0
        %741 = vmatpush1.msra.mxu0 0.0
        %742 = vmatprep.subr.mxu0 0.0
        %743 = vmatpush1.msra.mxu0 0.0
        %744 = vmatprep.subr.mxu0 0.0
        %745 = vmatpush1.msra.mxu0 0.0
        %746 = vmatprep.subr.mxu0 0.0
        %747 = vmatpush1.msra.mxu0 0.0
        %748 = vmatprep.subr.mxu0 0.0
        %749 = vmatpush1.msra.mxu0 0.0
        %750 = vmatprep.subr.mxu0 0.0
        %751 = vmatpush1.msra.mxu0 0.0
        %752 = vmatprep.subr.mxu0 0.0
        %753 = vmatpush1.msra.mxu0 0.0
        %754 = vmatprep.subr.mxu0 0.0
        %755 = vmatpush1.msra.mxu0 0.0
        %756 = vmatprep.subr.mxu0 0.0
        %757 = vmatpush1.msra.mxu0 0.0
        %758 = vmatprep.subr.mxu0 0.0
        %759 = vmatpush1.msra.mxu0 0.0
        %760 = vmatprep.subr.mxu0 0.0
        %761 = vmatpush1.msra.mxu0 0.0
        %762 = vmatprep.subr.mxu0 0.0
        %763 = vmatpush1.msra.mxu0 0.0
        %764 = vmatprep.subr.mxu0 0.0
        %765 = vmatpush1.msra.mxu0 0.0
        %766 = vmatprep.subr.mxu0 0.0
        %767 = vmatpush1.msra.mxu0 0.0
        %768 = vmatprep.subr.mxu0 0.0
        %769 = vmatpush1.msra.mxu0 0.0
        %770 = vmatprep.subr.mxu0 0.0
        %771 = vmatpush1.msra.mxu0 0.0
        %772 = vmatprep.subr.mxu0 0.0
        %773 = vmatpush1.msra.mxu0 0.0
        %774 = vmatprep.subr.mxu0 0.0
        %775 = vmatpush1.msra.mxu0 0.0
        %776 = vmatprep.subr.mxu0 0.0
        %777 = vmatpush1.msra.mxu0 0.0
        %778 = vmatprep.mubr.f32.mxu0 0.0
        %779 = vmatmul.mubr.f32.gmra.mrb[0].mxu0 %v502
        %v780 = vpop.f32.mrb[0].mxu0
        %v781 = vadd.f32 %v425, %v780
        %v782 = vpop.f32.mrb[0].mxu0
        %783 = vdwg.mxu0
        %784 = vmatprep.subr.mxu0 0.0
        %785 = vmatpush1.msra.mxu0 %v318
        %786 = vmatprep.subr.mxu0 0.0
        %787 = vmatpush1.msra.mxu0 %v319
        %788 = vmatprep.subr.mxu0 0.0
        %789 = vmatpush1.msra.mxu0 %v320
        %790 = vmatprep.subr.mxu0 0.0
        %791 = vmatpush1.msra.mxu0 %v321
        %792 = vmatprep.subr.mxu0 0.0
        %793 = vmatpush1.msra.mxu0 0.0
        %794 = vmatprep.subr.mxu0 0.0
        %795 = vmatpush1.msra.mxu0 0.0
        %796 = vmatprep.subr.mxu0 0.0
        %797 = vmatpush1.msra.mxu0 0.0
        %798 = vmatprep.subr.mxu0 0.0
        %799 = vmatpush1.msra.mxu0 0.0
        %800 = vmatprep.subr.mxu0 0.0
        %801 = vmatpush1.msra.mxu0 0.0
        %802 = vmatprep.subr.mxu0 0.0
        %803 = vmatpush1.msra.mxu0 0.0
        %804 = vmatprep.subr.mxu0 0.0
        %805 = vmatpush1.msra.mxu0 0.0
        %806 = vmatprep.subr.mxu0 0.0
        %807 = vmatpush1.msra.mxu0 0.0
        %808 = vmatprep.subr.mxu0 0.0
        %809 = vmatpush1.msra.mxu0 0.0
        %810 = vmatprep.subr.mxu0 0.0
        %811 = vmatpush1.msra.mxu0 0.0
        %812 = vmatprep.subr.mxu0 0.0
        %813 = vmatpush1.msra.mxu0 0.0
        %814 = vmatprep.subr.mxu0 0.0
        %815 = vmatpush1.msra.mxu0 0.0
        %816 = vmatprep.subr.mxu0 0.0
        %817 = vmatpush1.msra.mxu0 0.0
        %818 = vmatprep.subr.mxu0 0.0
        %819 = vmatpush1.msra.mxu0 0.0
        %820 = vmatprep.subr.mxu0 0.0
        %821 = vmatpush1.msra.mxu0 0.0
        %822 = vmatprep.subr.mxu0 0.0
        %823 = vmatpush1.msra.mxu0 0.0
        %824 = vmatprep.subr.mxu0 0.0
        %825 = vmatpush1.msra.mxu0 0.0
        %826 = vmatprep.subr.mxu0 0.0
        %827 = vmatpush1.msra.mxu0 0.0
        %828 = vmatprep.subr.mxu0 0.0
        %829 = vmatpush1.msra.mxu0 0.0
        %830 = vmatprep.subr.mxu0 0.0
        %831 = vmatpush1.msra.mxu0 0.0
        %832 = vmatprep.subr.mxu0 0.0
        %833 = vmatpush1.msra.mxu0 0.0
        %834 = vmatprep.subr.mxu0 0.0
        %835 = vmatpush1.msra.mxu0 0.0
        %836 = vmatprep.subr.mxu0 0.0
        %837 = vmatpush1.msra.mxu0 0.0
        %838 = vmatprep.subr.mxu0 0.0
        %839 = vmatpush1.msra.mxu0 0.0
        %840 = vmatprep.subr.mxu0 0.0
        %841 = vmatpush1.msra.mxu0 0.0
        %842 = vmatprep.subr.mxu0 0.0
        %843 = vmatpush1.msra.mxu0 0.0
        %844 = vmatprep.subr.mxu0 0.0
        %845 = vmatpush1.msra.mxu0 0.0
        %846 = vmatprep.subr.mxu0 0.0
        %847 = vmatpush1.msra.mxu0 0.0
        %848 = vmatprep.mubr.f32.mxu0 0.0
        %849 = vmatmul.mubr.f32.gmra.mrb[0].mxu0 %v502
        %v850 = vpop.f32.mrb[0].mxu0
        %v851 = vadd.f32 %v429, %v850
        %v852 = vpop.f32.mrb[0].mxu0
        %853 = vdwg.mxu0
        %854 = vmatprep.subr.mxu0 0.0
        %855 = vmatpush1.msra.mxu0 %v322
        %856 = vmatprep.subr.mxu0 0.0
        %857 = vmatpush1.msra.mxu0 %v323
        %858 = vmatprep.subr.mxu0 0.0
        %859 = vmatpush1.msra.mxu0 %v324
        %860 = vmatprep.subr.mxu0 0.0
        %861 = vmatpush1.msra.mxu0 %v325
        %862 = vmatprep.subr.mxu0 0.0
        %863 = vmatpush1.msra.mxu0 0.0
        %864 = vmatprep.subr.mxu0 0.0
        %865 = vmatpush1.msra.mxu0 0.0
        %866 = vmatprep.subr.mxu0 0.0
        %867 = vmatpush1.msra.mxu0 0.0
        %868 = vmatprep.subr.mxu0 0.0
        %869 = vmatpush1.msra.mxu0 0.0
        %870 = vmatprep.subr.mxu0 0.0
        %871 = vmatpush1.msra.mxu0 0.0
        %872 = vmatprep.subr.mxu0 0.0
        %873 = vmatpush1.msra.mxu0 0.0
        %874 = vmatprep.subr.mxu0 0.0
        %875 = vmatpush1.msra.mxu0 0.0
        %876 = vmatprep.subr.mxu0 0.0
        %877 = vmatpush1.msra.mxu0 0.0
        %878 = vmatprep.subr.mxu0 0.0
        %879 = vmatpush1.msra.mxu0 0.0
        %880 = vmatprep.subr.mxu0 0.0
        %881 = vmatpush1.msra.mxu0 0.0
        %882 = vmatprep.subr.mxu0 0.0
        %883 = vmatpush1.msra.mxu0 0.0
        %884 = vmatprep.subr.mxu0 0.0
        %885 = vmatpush1.msra.mxu0 0.0
        %886 = vmatprep.subr.mxu0 0.0
        %887 = vmatpush1.msra.mxu0 0.0
        %888 = vmatprep.subr.mxu0 0.0
        %889 = vmatpush1.msra.mxu0 0.0
        %890 = vmatprep.subr.mxu0 0.0
        %891 = vmatpush1.msra.mxu0 0.0
        %892 = vmatprep.subr.mxu0 0.0
        %893 = vmatpush1.msra.mxu0 0.0
        %894 = vmatprep.subr.mxu0 0.0
        %895 = vmatpush1.msra.mxu0 0.0
        %896 = vmatprep.subr.mxu0 0.0
        %897 = vmatpush1.msra.mxu0 0.0
        %898 = vmatprep.subr.mxu0 0.0
        %899 = vmatpush1.msra.mxu0 0.0
        %900 = vmatprep.subr.mxu0 0.0
        %901 = vmatpush1.msra.mxu0 0.0
        %902 = vmatprep.subr.mxu0 0.0
        %903 = vmatpush1.msra.mxu0 0.0
        %904 = vmatprep.subr.mxu0 0.0
        %905 = vmatpush1.msra.mxu0 0.0
        %906 = vmatprep.subr.mxu0 0.0
        %907 = vmatpush1.msra.mxu0 0.0
        %908 = vmatprep.subr.mxu0 0.0
        %909 = vmatpush1.msra.mxu0 0.0
        %910 = vmatprep.subr.mxu0 0.0
        %911 = vmatpush1.msra.mxu0 0.0
        %912 = vmatprep.subr.mxu0 0.0
        %913 = vmatpush1.msra.mxu0 0.0
        %914 = vmatprep.subr.mxu0 0.0
        %915 = vmatpush1.msra.mxu0 0.0
        %916 = vmatprep.subr.mxu0 0.0
        %917 = vmatpush1.msra.mxu0 0.0
        %918 = vmatprep.mubr.f32.mxu0 0.0
        %919 = vmatmul.mubr.f32.gmra.mrb[0].mxu0 %v502
        %v920 = vpop.f32.mrb[0].mxu0
        %v921 = vadd.f32 %v433, %v920
        %v922 = vpop.f32.mrb[0].mxu0
        %923 = vdwg.mxu0
        %924 = vmatprep.subr.mxu0 0.0
        %925 = vmatpush1.msra.mxu0 %v326
        %926 = vmatprep.subr.mxu0 0.0
        %927 = vmatpush1.msra.mxu0 %v327
        %928 = vmatprep.subr.mxu0 0.0
        %929 = vmatpush1.msra.mxu0 %v328
        %930 = vmatprep.subr.mxu0 0.0
        %931 = vmatpush1.msra.mxu0 %v329
        %932 = vmatprep.subr.mxu0 0.0
        %933 = vmatpush1.msra.mxu0 0.0
        %934 = vmatprep.subr.mxu0 0.0
        %935 = vmatpush1.msra.mxu0 0.0
        %936 = vmatprep.subr.mxu0 0.0
        %937 = vmatpush1.msra.mxu0 0.0
        %938 = vmatprep.subr.mxu0 0.0
        %939 = vmatpush1.msra.mxu0 0.0
        %940 = vmatprep.subr.mxu0 0.0
        %941 = vmatpush1.msra.mxu0 0.0
        %942 = vmatprep.subr.mxu0 0.0
        %943 = vmatpush1.msra.mxu0 0.0
        %944 = vmatprep.subr.mxu0 0.0
        %945 = vmatpush1.msra.mxu0 0.0
        %946 = vmatprep.subr.mxu0 0.0
        %947 = vmatpush1.msra.mxu0 0.0
        %948 = vmatprep.subr.mxu0 0.0
        %949 = vmatpush1.msra.mxu0 0.0
        %950 = vmatprep.subr.mxu0 0.0
        %951 = vmatpush1.msra.mxu0 0.0
        %952 = vmatprep.subr.mxu0 0.0
        %953 = vmatpush1.msra.mxu0 0.0
        %954 = vmatprep.subr.mxu0 0.0
        %955 = vmatpush1.msra.mxu0 0.0
        %956 = vmatprep.subr.mxu0 0.0
        %957 = vmatpush1.msra.mxu0 0.0
        %958 = vmatprep.subr.mxu0 0.0
        %959 = vmatpush1.msra.mxu0 0.0
        %960 = vmatprep.subr.mxu0 0.0
        %961 = vmatpush1.msra.mxu0 0.0
        %962 = vmatprep.subr.mxu0 0.0
        %963 = vmatpush1.msra.mxu0 0.0
        %964 = vmatprep.subr.mxu0 0.0
        %965 = vmatpush1.msra.mxu0 0.0
        %966 = vmatprep.subr.mxu0 0.0
        %967 = vmatpush1.msra.mxu0 0.0
        %968 = vmatprep.subr.mxu0 0.0
        %969 = vmatpush1.msra.mxu0 0.0
        %970 = vmatprep.subr.mxu0 0.0
        %971 = vmatpush1.msra.mxu0 0.0
        %972 = vmatprep.subr.mxu0 0.0
        %973 = vmatpush1.msra.mxu0 0.0
        %974 = vmatprep.subr.mxu0 0.0
        %975 = vmatpush1.msra.mxu0 0.0
        %976 = vmatprep.subr.mxu0 0.0
        %977 = vmatpush1.msra.mxu0 0.0
        %978 = vmatprep.subr.mxu0 0.0
        %979 = vmatpush1.msra.mxu0 0.0
        %980 = vmatprep.subr.mxu0 0.0
        %981 = vmatpush1.msra.mxu0 0.0
        %982 = vmatprep.subr.mxu0 0.0
        %983 = vmatpush1.msra.mxu0 0.0
        %984 = vmatprep.subr.mxu0 0.0
        %985 = vmatpush1.msra.mxu0 0.0
        %986 = vmatprep.subr.mxu0 0.0
        %987 = vmatpush1.msra.mxu0 0.0
        %988 = vmatprep.mubr.f32.mxu0 0.0
        %989 = vmatmul.mubr.f32.gmra.mrb[0].mxu0 %v502
        %v990 = vpop.f32.mrb[0].mxu0
        %v991 = vadd.f32 %v437, %v990
        %v992 = vpop.f32.mrb[0].mxu0
        %993 = vdwg.mxu0
        %994 = vmatprep.subr.mxu0 0.0
        %995 = vmatpush1.msra.mxu0 %v330
        %996 = vmatprep.subr.mxu0 0.0
        %997 = vmatpush1.msra.mxu0 %v331
        %998 = vmatprep.subr.mxu0 0.0
        %999 = vmatpush1.msra.mxu0 %v332
        %1000 = vmatprep.subr.mxu0 0.0
        %1001 = vmatpush1.msra.mxu0 %v333
        %1002 = vmatprep.subr.mxu0 0.0
        %1003 = vmatpush1.msra.mxu0 0.0
        %1004 = vmatprep.subr.mxu0 0.0
        %1005 = vmatpush1.msra.mxu0 0.0
        %1006 = vmatprep.subr.mxu0 0.0
        %1007 = vmatpush1.msra.mxu0 0.0
        %1008 = vmatprep.subr.mxu0 0.0
        %1009 = vmatpush1.msra.mxu0 0.0
        %1010 = vmatprep.subr.mxu0 0.0
        %1011 = vmatpush1.msra.mxu0 0.0
        %1012 = vmatprep.subr.mxu0 0.0
        %1013 = vmatpush1.msra.mxu0 0.0
        %1014 = vmatprep.subr.mxu0 0.0
        %1015 = vmatpush1.msra.mxu0 0.0
        %1016 = vmatprep.subr.mxu0 0.0
        %1017 = vmatpush1.msra.mxu0 0.0
        %1018 = vmatprep.subr.mxu0 0.0
        %1019 = vmatpush1.msra.mxu0 0.0
        %1020 = vmatprep.subr.mxu0 0.0
        %1021 = vmatpush1.msra.mxu0 0.0
        %1022 = vmatprep.subr.mxu0 0.0
        %1023 = vmatpush1.msra.mxu0 0.0
        %1024 = vmatprep.subr.mxu0 0.0
        %1025 = vmatpush1.msra.mxu0 0.0
        %1026 = vmatprep.subr.mxu0 0.0
        %1027 = vmatpush1.msra.mxu0 0.0
        %1028 = vmatprep.subr.mxu0 0.0
        %1029 = vmatpush1.msra.mxu0 0.0
        %1030 = vmatprep.subr.mxu0 0.0
        %1031 = vmatpush1.msra.mxu0 0.0
        %1032 = vmatprep.subr.mxu0 0.0
        %1033 = vmatpush1.msra.mxu0 0.0
        %1034 = vmatprep.subr.mxu0 0.0
        %1035 = vmatpush1.msra.mxu0 0.0
        %1036 = vmatprep.subr.mxu0 0.0
        %1037 = vmatpush1.msra.mxu0 0.0
        %1038 = vmatprep.subr.mxu0 0.0
        %1039 = vmatpush1.msra.mxu0 0.0
        %1040 = vmatprep.subr.mxu0 0.0
        %1041 = vmatpush1.msra.mxu0 0.0
        %1042 = vmatprep.subr.mxu0 0.0
        %1043 = vmatpush1.msra.mxu0 0.0
        %1044 = vmatprep.subr.mxu0 0.0
        %1045 = vmatpush1.msra.mxu0 0.0
        %1046 = vmatprep.subr.mxu0 0.0
        %1047 = vmatpush1.msra.mxu0 0.0
        %1048 = vmatprep.subr.mxu0 0.0
        %1049 = vmatpush1.msra.mxu0 0.0
        %1050 = vmatprep.subr.mxu0 0.0
        %1051 = vmatpush1.msra.mxu0 0.0
        %1052 = vmatprep.subr.mxu0 0.0
        %1053 = vmatpush1.msra.mxu0 0.0
        %1054 = vmatprep.subr.mxu0 0.0
        %1055 = vmatpush1.msra.mxu0 0.0
        %1056 = vmatprep.subr.mxu0 0.0
        %1057 = vmatpush1.msra.mxu0 0.0
        %1058 = vmatprep.mubr.f32.mxu0 0.0
        %1059 = vmatmul.mubr.f32.gmra.mrb[0].mxu0 %v502
        %v1060 = vpop.f32.mrb[0].mxu0
        %v1061 = vadd.f32 %v441, %v1060
        %v1062 = vpop.f32.mrb[0].mxu0
        %1063 = vdwg.mxu0
        %1064 = vmatprep.subr.mxu0 0.0
        %1065 = vmatpush1.msra.mxu0 %v334
        %1066 = vmatprep.subr.mxu0 0.0
        %1067 = vmatpush1.msra.mxu0 %v335
        %1068 = vmatprep.subr.mxu0 0.0
        %1069 = vmatpush1.msra.mxu0 %v336
        %1070 = vmatprep.subr.mxu0 0.0
        %1071 = vmatpush1.msra.mxu0 %v337
        %1072 = vmatprep.subr.mxu0 0.0
        %1073 = vmatpush1.msra.mxu0 0.0
        %1074 = vmatprep.subr.mxu0 0.0
        %1075 = vmatpush1.msra.mxu0 0.0
        %1076 = vmatprep.subr.mxu0 0.0
        %1077 = vmatpush1.msra.mxu0 0.0
        %1078 = vmatprep.subr.mxu0 0.0
        %1079 = vmatpush1.msra.mxu0 0.0
        %1080 = vmatprep.subr.mxu0 0.0
        %1081 = vmatpush1.msra.mxu0 0.0
        %1082 = vmatprep.subr.mxu0 0.0
        %1083 = vmatpush1.msra.mxu0 0.0
        %1084 = vmatprep.subr.mxu0 0.0
        %1085 = vmatpush1.msra.mxu0 0.0
        %1086 = vmatprep.subr.mxu0 0.0
        %1087 = vmatpush1.msra.mxu0 0.0
        %1088 = vmatprep.subr.mxu0 0.0
        %1089 = vmatpush1.msra.mxu0 0.0
        %1090 = vmatprep.subr.mxu0 0.0
        %1091 = vmatpush1.msra.mxu0 0.0
        %1092 = vmatprep.subr.mxu0 0.0
        %1093 = vmatpush1.msra.mxu0 0.0
        %1094 = vmatprep.subr.mxu0 0.0
        %1095 = vmatpush1.msra.mxu0 0.0
        %1096 = vmatprep.subr.mxu0 0.0
        %1097 = vmatpush1.msra.mxu0 0.0
        %1098 = vmatprep.subr.mxu0 0.0
        %1099 = vmatpush1.msra.mxu0 0.0
        %1100 = vmatprep.subr.mxu0 0.0
        %1101 = vmatpush1.msra.mxu0 0.0
        %1102 = vmatprep.subr.mxu0 0.0
        %1103 = vmatpush1.msra.mxu0 0.0
        %1104 = vmatprep.subr.mxu0 0.0
        %1105 = vmatpush1.msra.mxu0 0.0
        %1106 = vmatprep.subr.mxu0 0.0
        %1107 = vmatpush1.msra.mxu0 0.0
        %1108 = vmatprep.subr.mxu0 0.0
        %1109 = vmatpush1.msra.mxu0 0.0
        %1110 = vmatprep.subr.mxu0 0.0
        %1111 = vmatpush1.msra.mxu0 0.0
        %1112 = vmatprep.subr.mxu0 0.0
        %1113 = vmatpush1.msra.mxu0 0.0
        %1114 = vmatprep.subr.mxu0 0.0
        %1115 = vmatpush1.msra.mxu0 0.0
        %1116 = vmatprep.subr.mxu0 0.0
        %1117 = vmatpush1.msra.mxu0 0.0
        %1118 = vmatprep.subr.mxu0 0.0
        %1119 = vmatpush1.msra.mxu0 0.0
        %1120 = vmatprep.subr.mxu0 0.0
        %1121 = vmatpush1.msra.mxu0 0.0
        %1122 = vmatprep.subr.mxu0 0.0
        %1123 = vmatpush1.msra.mxu0 0.0
        %1124 = vmatprep.subr.mxu0 0.0
        %1125 = vmatpush1.msra.mxu0 0.0
        %1126 = vmatprep.subr.mxu0 0.0
        %1127 = vmatpush1.msra.mxu0 0.0
        %1128 = vmatprep.mubr.f32.mxu0 0.0
        %1129 = vmatmul.mubr.f32.gmra.mrb[0].mxu0 %v502
        %v1130 = vpop.f32.mrb[0].mxu0
        %v1131 = vadd.f32 %v445, %v1130
        %v1132 = vpop.f32.mrb[0].mxu0
        %1133 = vdwg.mxu0
        %1134 = vmatprep.subr.mxu0 0.0
        %1135 = vmatpush1.msra.mxu0 %v338
        %1136 = vmatprep.subr.mxu0 0.0
        %1137 = vmatpush1.msra.mxu0 %v339
        %1138 = vmatprep.subr.mxu0 0.0
        %1139 = vmatpush1.msra.mxu0 %v340
        %1140 = vmatprep.subr.mxu0 0.0
        %1141 = vmatpush1.msra.mxu0 %v341
        %1142 = vmatprep.subr.mxu0 0.0
        %1143 = vmatpush1.msra.mxu0 0.0
        %1144 = vmatprep.subr.mxu0 0.0
        %1145 = vmatpush1.msra.mxu0 0.0
        %1146 = vmatprep.subr.mxu0 0.0
        %1147 = vmatpush1.msra.mxu0 0.0
        %1148 = vmatprep.subr.mxu0 0.0
        %1149 = vmatpush1.msra.mxu0 0.0
        %1150 = vmatprep.subr.mxu0 0.0
        %1151 = vmatpush1.msra.mxu0 0.0
        %1152 = vmatprep.subr.mxu0 0.0
        %1153 = vmatpush1.msra.mxu0 0.0
        %1154 = vmatprep.subr.mxu0 0.0
        %1155 = vmatpush1.msra.mxu0 0.0
        %1156 = vmatprep.subr.mxu0 0.0
        %1157 = vmatpush1.msra.mxu0 0.0
        %1158 = vmatprep.subr.mxu0 0.0
        %1159 = vmatpush1.msra.mxu0 0.0
        %1160 = vmatprep.subr.mxu0 0.0
        %1161 = vmatpush1.msra.mxu0 0.0
        %1162 = vmatprep.subr.mxu0 0.0
        %1163 = vmatpush1.msra.mxu0 0.0
        %1164 = vmatprep.subr.mxu0 0.0
        %1165 = vmatpush1.msra.mxu0 0.0
        %1166 = vmatprep.subr.mxu0 0.0
        %1167 = vmatpush1.msra.mxu0 0.0
        %1168 = vmatprep.subr.mxu0 0.0
        %1169 = vmatpush1.msra.mxu0 0.0
        %1170 = vmatprep.subr.mxu0 0.0
        %1171 = vmatpush1.msra.mxu0 0.0
        %1172 = vmatprep.subr.mxu0 0.0
        %1173 = vmatpush1.msra.mxu0 0.0
        %1174 = vmatprep.subr.mxu0 0.0
        %1175 = vmatpush1.msra.mxu0 0.0
        %1176 = vmatprep.subr.mxu0 0.0
        %1177 = vmatpush1.msra.mxu0 0.0
        %1178 = vmatprep.subr.mxu0 0.0
        %1179 = vmatpush1.msra.mxu0 0.0
        %1180 = vmatprep.subr.mxu0 0.0
        %1181 = vmatpush1.msra.mxu0 0.0
        %1182 = vmatprep.subr.mxu0 0.0
        %1183 = vmatpush1.msra.mxu0 0.0
        %1184 = vmatprep.subr.mxu0 0.0
        %1185 = vmatpush1.msra.mxu0 0.0
        %1186 = vmatprep.subr.mxu0 0.0
        %1187 = vmatpush1.msra.mxu0 0.0
        %1188 = vmatprep.subr.mxu0 0.0
        %1189 = vmatpush1.msra.mxu0 0.0
        %1190 = vmatprep.subr.mxu0 0.0
        %1191 = vmatpush1.msra.mxu0 0.0
        %1192 = vmatprep.subr.mxu0 0.0
        %1193 = vmatpush1.msra.mxu0 0.0
        %1194 = vmatprep.subr.mxu0 0.0
        %1195 = vmatpush1.msra.mxu0 0.0
        %1196 = vmatprep.subr.mxu0 0.0
        %1197 = vmatpush1.msra.mxu0 0.0
        %1198 = vmatprep.mubr.f32.mxu0 0.0
        %1199 = vmatmul.mubr.f32.gmra.mrb[0].mxu0 %v502
        %v1200 = vpop.f32.mrb[0].mxu0
        %v1201 = vadd.f32 %v449, %v1200
        %v1202 = vpop.f32.mrb[0].mxu0
        %1203 = vdwg.mxu0
        %1204 = vmatprep.subr.mxu0 0.0
        %1205 = vmatpush1.msra.mxu0 %v342
        %1206 = vmatprep.subr.mxu0 0.0
        %1207 = vmatpush1.msra.mxu0 %v343
        %1208 = vmatprep.subr.mxu0 0.0
        %1209 = vmatpush1.msra.mxu0 %v344
        %1210 = vmatprep.subr.mxu0 0.0
        %1211 = vmatpush1.msra.mxu0 %v345
        %1212 = vmatprep.subr.mxu0 0.0
        %1213 = vmatpush1.msra.mxu0 0.0
        %1214 = vmatprep.subr.mxu0 0.0
        %1215 = vmatpush1.msra.mxu0 0.0
        %1216 = vmatprep.subr.mxu0 0.0
        %1217 = vmatpush1.msra.mxu0 0.0
        %1218 = vmatprep.subr.mxu0 0.0
        %1219 = vmatpush1.msra.mxu0 0.0
        %1220 = vmatprep.subr.mxu0 0.0
        %1221 = vmatpush1.msra.mxu0 0.0
        %1222 = vmatprep.subr.mxu0 0.0
        %1223 = vmatpush1.msra.mxu0 0.0
        %1224 = vmatprep.subr.mxu0 0.0
        %1225 = vmatpush1.msra.mxu0 0.0
        %1226 = vmatprep.subr.mxu0 0.0
        %1227 = vmatpush1.msra.mxu0 0.0
        %1228 = vmatprep.subr.mxu0 0.0
        %1229 = vmatpush1.msra.mxu0 0.0
        %1230 = vmatprep.subr.mxu0 0.0
        %1231 = vmatpush1.msra.mxu0 0.0
        %1232 = vmatprep.subr.mxu0 0.0
        %1233 = vmatpush1.msra.mxu0 0.0
        %1234 = vmatprep.subr.mxu0 0.0
        %1235 = vmatpush1.msra.mxu0 0.0
        %1236 = vmatprep.subr.mxu0 0.0
        %1237 = vmatpush1.msra.mxu0 0.0
        %1238 = vmatprep.subr.mxu0 0.0
        %1239 = vmatpush1.msra.mxu0 0.0
        %1240 = vmatprep.subr.mxu0 0.0
        %1241 = vmatpush1.msra.mxu0 0.0
        %1242 = vmatprep.subr.mxu0 0.0
        %1243 = vmatpush1.msra.mxu0 0.0
        %1244 = vmatprep.subr.mxu0 0.0
        %1245 = vmatpush1.msra.mxu0 0.0
        %1246 = vmatprep.subr.mxu0 0.0
        %1247 = vmatpush1.msra.mxu0 0.0
        %1248 = vmatprep.subr.mxu0 0.0
        %1249 = vmatpush1.msra.mxu0 0.0
        %1250 = vmatprep.subr.mxu0 0.0
        %1251 = vmatpush1.msra.mxu0 0.0
        %1252 = vmatprep.subr.mxu0 0.0
        %1253 = vmatpush1.msra.mxu0 0.0
        %1254 = vmatprep.subr.mxu0 0.0
        %1255 = vmatpush1.msra.mxu0 0.0
        %1256 = vmatprep.subr.mxu0 0.0
        %1257 = vmatpush1.msra.mxu0 0.0
        %1258 = vmatprep.subr.mxu0 0.0
        %1259 = vmatpush1.msra.mxu0 0.0
        %1260 = vmatprep.subr.mxu0 0.0
        %1261 = vmatpush1.msra.mxu0 0.0
        %1262 = vmatprep.subr.mxu0 0.0
        %1263 = vmatpush1.msra.mxu0 0.0
        %1264 = vmatprep.subr.mxu0 0.0
        %1265 = vmatpush1.msra.mxu0 0.0
        %1266 = vmatprep.subr.mxu0 0.0
        %1267 = vmatpush1.msra.mxu0 0.0
        %1268 = vmatprep.mubr.f32.mxu0 0.0
        %1269 = vmatmul.mubr.f32.gmra.mrb[0].mxu0 %v502
        %v1270 = vpop.f32.mrb[0].mxu0
        %v1271 = vadd.f32 %v453, %v1270
        %v1272 = vpop.f32.mrb[0].mxu0
        %1273 = vdwg.mxu0
        %1274 = vmatprep.subr.mxu0 0.0
        %1275 = vmatpush1.msra.mxu0 %v346
        %1276 = vmatprep.subr.mxu0 0.0
        %1277 = vmatpush1.msra.mxu0 %v347
        %1278 = vmatprep.subr.mxu0 0.0
        %1279 = vmatpush1.msra.mxu0 %v348
        %1280 = vmatprep.subr.mxu0 0.0
        %1281 = vmatpush1.msra.mxu0 %v349
        %1282 = vmatprep.subr.mxu0 0.0
        %1283 = vmatpush1.msra.mxu0 0.0
        %1284 = vmatprep.subr.mxu0 0.0
        %1285 = vmatpush1.msra.mxu0 0.0
        %1286 = vmatprep.subr.mxu0 0.0
        %1287 = vmatpush1.msra.mxu0 0.0
        %1288 = vmatprep.subr.mxu0 0.0
        %1289 = vmatpush1.msra.mxu0 0.0
        %1290 = vmatprep.subr.mxu0 0.0
        %1291 = vmatpush1.msra.mxu0 0.0
        %1292 = vmatprep.subr.mxu0 0.0
        %1293 = vmatpush1.msra.mxu0 0.0
        %1294 = vmatprep.subr.mxu0 0.0
        %1295 = vmatpush1.msra.mxu0 0.0
        %1296 = vmatprep.subr.mxu0 0.0
        %1297 = vmatpush1.msra.mxu0 0.0
        %1298 = vmatprep.subr.mxu0 0.0
        %1299 = vmatpush1.msra.mxu0 0.0
        %1300 = vmatprep.subr.mxu0 0.0
        %1301 = vmatpush1.msra.mxu0 0.0
        %1302 = vmatprep.subr.mxu0 0.0
        %1303 = vmatpush1.msra.mxu0 0.0
        %1304 = vmatprep.subr.mxu0 0.0
        %1305 = vmatpush1.msra.mxu0 0.0
        %1306 = vmatprep.subr.mxu0 0.0
        %1307 = vmatpush1.msra.mxu0 0.0
        %1308 = vmatprep.subr.mxu0 0.0
        %1309 = vmatpush1.msra.mxu0 0.0
        %1310 = vmatprep.subr.mxu0 0.0
        %1311 = vmatpush1.msra.mxu0 0.0
        %1312 = vmatprep.subr.mxu0 0.0
        %1313 = vmatpush1.msra.mxu0 0.0
        %1314 = vmatprep.subr.mxu0 0.0
        %1315 = vmatpush1.msra.mxu0 0.0
        %1316 = vmatprep.subr.mxu0 0.0
        %1317 = vmatpush1.msra.mxu0 0.0
        %1318 = vmatprep.subr.mxu0 0.0
        %1319 = vmatpush1.msra.mxu0 0.0
        %1320 = vmatprep.subr.mxu0 0.0
        %1321 = vmatpush1.msra.mxu0 0.0
        %1322 = vmatprep.subr.mxu0 0.0
        %1323 = vmatpush1.msra.mxu0 0.0
        %1324 = vmatprep.subr.mxu0 0.0
        %1325 = vmatpush1.msra.mxu0 0.0
        %1326 = vmatprep.subr.mxu0 0.0
        %1327 = vmatpush1.msra.mxu0 0.0
        %1328 = vmatprep.subr.mxu0 0.0
        %1329 = vmatpush1.msra.mxu0 0.0
        %1330 = vmatprep.subr.mxu0 0.0
        %1331 = vmatpush1.msra.mxu0 0.0
        %1332 = vmatprep.subr.mxu0 0.0
        %1333 = vmatpush1.msra.mxu0 0.0
        %1334 = vmatprep.subr.mxu0 0.0
        %1335 = vmatpush1.msra.mxu0 0.0
        %1336 = vmatprep.subr.mxu0 0.0
        %1337 = vmatpush1.msra.mxu0 0.0
        %1338 = vmatprep.mubr.f32.mxu0 0.0
        %1339 = vmatmul.mubr.f32.gmra.mrb[0].mxu0 %v502
        %v1340 = vpop.f32.mrb[0].mxu0
        %v1341 = vadd.f32 %v457, %v1340
        %v1342 = vpop.f32.mrb[0].mxu0
        %1343 = vdwg.mxu0
        %1344 = vmatprep.subr.mxu0 0.0
        %1345 = vmatpush1.msra.mxu0 %v350
        %1346 = vmatprep.subr.mxu0 0.0
        %1347 = vmatpush1.msra.mxu0 %v351
        %1348 = vmatprep.subr.mxu0 0.0
        %1349 = vmatpush1.msra.mxu0 %v352
        %1350 = vmatprep.subr.mxu0 0.0
        %1351 = vmatpush1.msra.mxu0 %v353
        %1352 = vmatprep.subr.mxu0 0.0
        %1353 = vmatpush1.msra.mxu0 0.0
        %1354 = vmatprep.subr.mxu0 0.0
        %1355 = vmatpush1.msra.mxu0 0.0
        %1356 = vmatprep.subr.mxu0 0.0
        %1357 = vmatpush1.msra.mxu0 0.0
        %1358 = vmatprep.subr.mxu0 0.0
        %1359 = vmatpush1.msra.mxu0 0.0
        %1360 = vmatprep.subr.mxu0 0.0
        %1361 = vmatpush1.msra.mxu0 0.0
        %1362 = vmatprep.subr.mxu0 0.0
        %1363 = vmatpush1.msra.mxu0 0.0
        %1364 = vmatprep.subr.mxu0 0.0
        %1365 = vmatpush1.msra.mxu0 0.0
        %1366 = vmatprep.subr.mxu0 0.0
        %1367 = vmatpush1.msra.mxu0 0.0
        %1368 = vmatprep.subr.mxu0 0.0
        %1369 = vmatpush1.msra.mxu0 0.0
        %1370 = vmatprep.subr.mxu0 0.0
        %1371 = vmatpush1.msra.mxu0 0.0
        %1372 = vmatprep.subr.mxu0 0.0
        %1373 = vmatpush1.msra.mxu0 0.0
        %1374 = vmatprep.subr.mxu0 0.0
        %1375 = vmatpush1.msra.mxu0 0.0
        %1376 = vmatprep.subr.mxu0 0.0
        %1377 = vmatpush1.msra.mxu0 0.0
        %1378 = vmatprep.subr.mxu0 0.0
        %1379 = vmatpush1.msra.mxu0 0.0
        %1380 = vmatprep.subr.mxu0 0.0
        %1381 = vmatpush1.msra.mxu0 0.0
        %1382 = vmatprep.subr.mxu0 0.0
        %1383 = vmatpush1.msra.mxu0 0.0
        %1384 = vmatprep.subr.mxu0 0.0
        %1385 = vmatpush1.msra.mxu0 0.0
        %1386 = vmatprep.subr.mxu0 0.0
        %1387 = vmatpush1.msra.mxu0 0.0
        %1388 = vmatprep.subr.mxu0 0.0
        %1389 = vmatpush1.msra.mxu0 0.0
        %1390 = vmatprep.subr.mxu0 0.0
        %1391 = vmatpush1.msra.mxu0 0.0
        %1392 = vmatprep.subr.mxu0 0.0
        %1393 = vmatpush1.msra.mxu0 0.0
        %1394 = vmatprep.subr.mxu0 0.0
        %1395 = vmatpush1.msra.mxu0 0.0
        %1396 = vmatprep.subr.mxu0 0.0
        %1397 = vmatpush1.msra.mxu0 0.0
        %1398 = vmatprep.subr.mxu0 0.0
        %1399 = vmatpush1.msra.mxu0 0.0
        %1400 = vmatprep.subr.mxu0 0.0
        %1401 = vmatpush1.msra.mxu0 0.0
        %1402 = vmatprep.subr.mxu0 0.0
        %1403 = vmatpush1.msra.mxu0 0.0
        %1404 = vmatprep.subr.mxu0 0.0
        %1405 = vmatpush1.msra.mxu0 0.0
        %1406 = vmatprep.subr.mxu0 0.0
        %1407 = vmatpush1.msra.mxu0 0.0
        %1408 = vmatprep.mubr.f32.mxu0 0.0
        %1409 = vmatmul.mubr.f32.gmra.mrb[0].mxu0 %v502
        %v1410 = vpop.f32.mrb[0].mxu0
        %v1411 = vadd.f32 %v461, %v1410
        %v1412 = vpop.f32.mrb[0].mxu0
        %1413 = vdwg.mxu0
        %1414 = vmatprep.subr.mxu0 0.0
        %1415 = vmatpush1.msra.mxu0 %v354
        %1416 = vmatprep.subr.mxu0 0.0
        %1417 = vmatpush1.msra.mxu0 %v355
        %1418 = vmatprep.subr.mxu0 0.0
        %1419 = vmatpush1.msra.mxu0 %v356
        %1420 = vmatprep.subr.mxu0 0.0
        %1421 = vmatpush1.msra.mxu0 %v357
        %1422 = vmatprep.subr.mxu0 0.0
        %1423 = vmatpush1.msra.mxu0 0.0
        %1424 = vmatprep.subr.mxu0 0.0
        %1425 = vmatpush1.msra.mxu0 0.0
        %1426 = vmatprep.subr.mxu0 0.0
        %1427 = vmatpush1.msra.mxu0 0.0
        %1428 = vmatprep.subr.mxu0 0.0
        %1429 = vmatpush1.msra.mxu0 0.0
        %1430 = vmatprep.subr.mxu0 0.0
        %1431 = vmatpush1.msra.mxu0 0.0
        %1432 = vmatprep.subr.mxu0 0.0
        %1433 = vmatpush1.msra.mxu0 0.0
        %1434 = vmatprep.subr.mxu0 0.0
        %1435 = vmatpush1.msra.mxu0 0.0
        %1436 = vmatprep.subr.mxu0 0.0
        %1437 = vmatpush1.msra.mxu0 0.0
        %1438 = vmatprep.subr.mxu0 0.0
        %1439 = vmatpush1.msra.mxu0 0.0
        %1440 = vmatprep.subr.mxu0 0.0
        %1441 = vmatpush1.msra.mxu0 0.0
        %1442 = vmatprep.subr.mxu0 0.0
        %1443 = vmatpush1.msra.mxu0 0.0
        %1444 = vmatprep.subr.mxu0 0.0
        %1445 = vmatpush1.msra.mxu0 0.0
        %1446 = vmatprep.subr.mxu0 0.0
        %1447 = vmatpush1.msra.mxu0 0.0
        %1448 = vmatprep.subr.mxu0 0.0
        %1449 = vmatpush1.msra.mxu0 0.0
        %1450 = vmatprep.subr.mxu0 0.0
        %1451 = vmatpush1.msra.mxu0 0.0
        %1452 = vmatprep.subr.mxu0 0.0
        %1453 = vmatpush1.msra.mxu0 0.0
        %1454 = vmatprep.subr.mxu0 0.0
        %1455 = vmatpush1.msra.mxu0 0.0
        %1456 = vmatprep.subr.mxu0 0.0
        %1457 = vmatpush1.msra.mxu0 0.0
        %1458 = vmatprep.subr.mxu0 0.0
        %1459 = vmatpush1.msra.mxu0 0.0
        %1460 = vmatprep.subr.mxu0 0.0
        %1461 = vmatpush1.msra.mxu0 0.0
        %1462 = vmatprep.subr.mxu0 0.0
        %1463 = vmatpush1.msra.mxu0 0.0
        %1464 = vmatprep.subr.mxu0 0.0
        %1465 = vmatpush1.msra.mxu0 0.0
        %1466 = vmatprep.subr.mxu0 0.0
        %1467 = vmatpush1.msra.mxu0 0.0
        %1468 = vmatprep.subr.mxu0 0.0
        %1469 = vmatpush1.msra.mxu0 0.0
        %1470 = vmatprep.subr.mxu0 0.0
        %1471 = vmatpush1.msra.mxu0 0.0
        %1472 = vmatprep.subr.mxu0 0.0
        %1473 = vmatpush1.msra.mxu0 0.0
        %1474 = vmatprep.subr.mxu0 0.0
        %1475 = vmatpush1.msra.mxu0 0.0
        %1476 = vmatprep.subr.mxu0 0.0
        %1477 = vmatpush1.msra.mxu0 0.0
        %1478 = vmatprep.mubr.f32.mxu0 0.0
        %1479 = vmatmul.mubr.f32.gmra.mrb[0].mxu0 %v502
        %v1480 = vpop.f32.mrb[0].mxu0
        %v1481 = vadd.f32 %v465, %v1480
        %v1482 = vpop.f32.mrb[0].mxu0
        %1483 = vdwg.mxu0
        %1484 = vmatprep.subr.mxu0 0.0
        %1485 = vmatpush1.msra.mxu0 %v358
        %1486 = vmatprep.subr.mxu0 0.0
        %1487 = vmatpush1.msra.mxu0 %v359
        %1488 = vmatprep.subr.mxu0 0.0
        %1489 = vmatpush1.msra.mxu0 %v360
        %1490 = vmatprep.subr.mxu0 0.0
        %1491 = vmatpush1.msra.mxu0 %v361
        %1492 = vmatprep.subr.mxu0 0.0
        %1493 = vmatpush1.msra.mxu0 0.0
        %1494 = vmatprep.subr.mxu0 0.0
        %1495 = vmatpush1.msra.mxu0 0.0
        %1496 = vmatprep.subr.mxu0 0.0
        %1497 = vmatpush1.msra.mxu0 0.0
        %1498 = vmatprep.subr.mxu0 0.0
        %1499 = vmatpush1.msra.mxu0 0.0
        %1500 = vmatprep.subr.mxu0 0.0
        %1501 = vmatpush1.msra.mxu0 0.0
        %1502 = vmatprep.subr.mxu0 0.0
        %1503 = vmatpush1.msra.mxu0 0.0
        %1504 = vmatprep.subr.mxu0 0.0
        %1505 = vmatpush1.msra.mxu0 0.0
        %1506 = vmatprep.subr.mxu0 0.0
        %1507 = vmatpush1.msra.mxu0 0.0
        %1508 = vmatprep.subr.mxu0 0.0
        %1509 = vmatpush1.msra.mxu0 0.0
        %1510 = vmatprep.subr.mxu0 0.0
        %1511 = vmatpush1.msra.mxu0 0.0
        %1512 = vmatprep.subr.mxu0 0.0
        %1513 = vmatpush1.msra.mxu0 0.0
        %1514 = vmatprep.subr.mxu0 0.0
        %1515 = vmatpush1.msra.mxu0 0.0
        %1516 = vmatprep.subr.mxu0 0.0
        %1517 = vmatpush1.msra.mxu0 0.0
        %1518 = vmatprep.subr.mxu0 0.0
        %1519 = vmatpush1.msra.mxu0 0.0
        %1520 = vmatprep.subr.mxu0 0.0
        %1521 = vmatpush1.msra.mxu0 0.0
        %1522 = vmatprep.subr.mxu0 0.0
        %1523 = vmatpush1.msra.mxu0 0.0
        %1524 = vmatprep.subr.mxu0 0.0
        %1525 = vmatpush1.msra.mxu0 0.0
        %1526 = vmatprep.subr.mxu0 0.0
        %1527 = vmatpush1.msra.mxu0 0.0
        %1528 = vmatprep.subr.mxu0 0.0
        %1529 = vmatpush1.msra.mxu0 0.0
        %1530 = vmatprep.subr.mxu0 0.0
        %1531 = vmatpush1.msra.mxu0 0.0
        %1532 = vmatprep.subr.mxu0 0.0
        %1533 = vmatpush1.msra.mxu0 0.0
        %1534 = vmatprep.subr.mxu0 0.0
        %1535 = vmatpush1.msra.mxu0 0.0
        %1536 = vmatprep.subr.mxu0 0.0
        %1537 = vmatpush1.msra.mxu0 0.0
        %1538 = vmatprep.subr.mxu0 0.0
        %1539 = vmatpush1.msra.mxu0 0.0
        %1540 = vmatprep.subr.mxu0 0.0
        %1541 = vmatpush1.msra.mxu0 0.0
        %1542 = vmatprep.subr.mxu0 0.0
        %1543 = vmatpush1.msra.mxu0 0.0
        %1544 = vmatprep.subr.mxu0 0.0
        %1545 = vmatpush1.msra.mxu0 0.0
        %1546 = vmatprep.subr.mxu0 0.0
        %1547 = vmatpush1.msra.mxu0 0.0
        %1548 = vmatprep.mubr.f32.mxu0 0.0
        %1549 = vmatmul.mubr.f32.gmra.mrb[0].mxu0 %v502
        %v1550 = vpop.f32.mrb[0].mxu0
        %v1551 = vadd.f32 %v469, %v1550
        %v1552 = vpop.f32.mrb[0].mxu0
        %1553 = vdwg.mxu0
        %1554 = vmatprep.subr.mxu0 0.0
        %1555 = vmatpush1.msra.mxu0 %v362
        %1556 = vmatprep.subr.mxu0 0.0
        %1557 = vmatpush1.msra.mxu0 %v363
        %1558 = vmatprep.subr.mxu0 0.0
        %1559 = vmatpush1.msra.mxu0 %v364
        %1560 = vmatprep.subr.mxu0 0.0
        %1561 = vmatpush1.msra.mxu0 %v365
        %1562 = vmatprep.subr.mxu0 0.0
        %1563 = vmatpush1.msra.mxu0 0.0
        %1564 = vmatprep.subr.mxu0 0.0
        %1565 = vmatpush1.msra.mxu0 0.0
        %1566 = vmatprep.subr.mxu0 0.0
        %1567 = vmatpush1.msra.mxu0 0.0
        %1568 = vmatprep.subr.mxu0 0.0
        %1569 = vmatpush1.msra.mxu0 0.0
        %1570 = vmatprep.subr.mxu0 0.0
        %1571 = vmatpush1.msra.mxu0 0.0
        %1572 = vmatprep.subr.mxu0 0.0
        %1573 = vmatpush1.msra.mxu0 0.0
        %1574 = vmatprep.subr.mxu0 0.0
        %1575 = vmatpush1.msra.mxu0 0.0
        %1576 = vmatprep.subr.mxu0 0.0
        %1577 = vmatpush1.msra.mxu0 0.0
        %1578 = vmatprep.subr.mxu0 0.0
        %1579 = vmatpush1.msra.mxu0 0.0
        %1580 = vmatprep.subr.mxu0 0.0
        %1581 = vmatpush1.msra.mxu0 0.0
        %1582 = vmatprep.subr.mxu0 0.0
        %1583 = vmatpush1.msra.mxu0 0.0
        %1584 = vmatprep.subr.mxu0 0.0
        %1585 = vmatpush1.msra.mxu0 0.0
        %1586 = vmatprep.subr.mxu0 0.0
        %1587 = vmatpush1.msra.mxu0 0.0
        %1588 = vmatprep.subr.mxu0 0.0
        %1589 = vmatpush1.msra.mxu0 0.0
        %1590 = vmatprep.subr.mxu0 0.0
        %1591 = vmatpush1.msra.mxu0 0.0
        %1592 = vmatprep.subr.mxu0 0.0
        %1593 = vmatpush1.msra.mxu0 0.0
        %1594 = vmatprep.subr.mxu0 0.0
        %1595 = vmatpush1.msra.mxu0 0.0
        %1596 = vmatprep.subr.mxu0 0.0
        %1597 = vmatpush1.msra.mxu0 0.0
        %1598 = vmatprep.subr.mxu0 0.0
        %1599 = vmatpush1.msra.mxu0 0.0
        %1600 = vmatprep.subr.mxu0 0.0
        %1601 = vmatpush1.msra.mxu0 0.0
        %1602 = vmatprep.subr.mxu0 0.0
        %1603 = vmatpush1.msra.mxu0 0.0
        %1604 = vmatprep.subr.mxu0 0.0
        %1605 = vmatpush1.msra.mxu0 0.0
        %1606 = vmatprep.subr.mxu0 0.0
        %1607 = vmatpush1.msra.mxu0 0.0
        %1608 = vmatprep.subr.mxu0 0.0
        %1609 = vmatpush1.msra.mxu0 0.0
        %1610 = vmatprep.subr.mxu0 0.0
        %1611 = vmatpush1.msra.mxu0 0.0
        %1612 = vmatprep.subr.mxu0 0.0
        %1613 = vmatpush1.msra.mxu0 0.0
        %1614 = vmatprep.subr.mxu0 0.0
        %1615 = vmatpush1.msra.mxu0 0.0
        %1616 = vmatprep.subr.mxu0 0.0
        %1617 = vmatpush1.msra.mxu0 0.0
        %1618 = vmatprep.mubr.f32.mxu0 0.0
        %1619 = vmatmul.mubr.f32.gmra.mrb[0].mxu0 %v502
        %v1620 = vpop.f32.mrb[0].mxu0
        %v1621 = vadd.f32 %v473, %v1620
        %v1622 = vpop.f32.mrb[0].mxu0
        %1623 = vdwg.mxu0
        %1624 = vmatprep.subr.mxu0 0.0
        %1625 = vmatpush1.msra.mxu0 %v366
        %1626 = vmatprep.subr.mxu0 0.0
        %1627 = vmatpush1.msra.mxu0 %v367
        %1628 = vmatprep.subr.mxu0 0.0
        %1629 = vmatpush1.msra.mxu0 %v368
        %1630 = vmatprep.subr.mxu0 0.0
        %1631 = vmatpush1.msra.mxu0 %v369
        %1632 = vmatprep.subr.mxu0 0.0
        %1633 = vmatpush1.msra.mxu0 0.0
        %1634 = vmatprep.subr.mxu0 0.0
        %1635 = vmatpush1.msra.mxu0 0.0
        %1636 = vmatprep.subr.mxu0 0.0
        %1637 = vmatpush1.msra.mxu0 0.0
        %1638 = vmatprep.subr.mxu0 0.0
        %1639 = vmatpush1.msra.mxu0 0.0
        %1640 = vmatprep.subr.mxu0 0.0
        %1641 = vmatpush1.msra.mxu0 0.0
        %1642 = vmatprep.subr.mxu0 0.0
        %1643 = vmatpush1.msra.mxu0 0.0
        %1644 = vmatprep.subr.mxu0 0.0
        %1645 = vmatpush1.msra.mxu0 0.0
        %1646 = vmatprep.subr.mxu0 0.0
        %1647 = vmatpush1.msra.mxu0 0.0
        %1648 = vmatprep.subr.mxu0 0.0
        %1649 = vmatpush1.msra.mxu0 0.0
        %1650 = vmatprep.subr.mxu0 0.0
        %1651 = vmatpush1.msra.mxu0 0.0
        %1652 = vmatprep.subr.mxu0 0.0
        %1653 = vmatpush1.msra.mxu0 0.0
        %1654 = vmatprep.subr.mxu0 0.0
        %1655 = vmatpush1.msra.mxu0 0.0
        %1656 = vmatprep.subr.mxu0 0.0
        %1657 = vmatpush1.msra.mxu0 0.0
        %1658 = vmatprep.subr.mxu0 0.0
        %1659 = vmatpush1.msra.mxu0 0.0
        %1660 = vmatprep.subr.mxu0 0.0
        %1661 = vmatpush1.msra.mxu0 0.0
        %1662 = vmatprep.subr.mxu0 0.0
        %1663 = vmatpush1.msra.mxu0 0.0
        %1664 = vmatprep.subr.mxu0 0.0
        %1665 = vmatpush1.msra.mxu0 0.0
        %1666 = vmatprep.subr.mxu0 0.0
        %1667 = vmatpush1.msra.mxu0 0.0
        %1668 = vmatprep.subr.mxu0 0.0
        %1669 = vmatpush1.msra.mxu0 0.0
        %1670 = vmatprep.subr.mxu0 0.0
        %1671 = vmatpush1.msra.mxu0 0.0
        %1672 = vmatprep.subr.mxu0 0.0
        %1673 = vmatpush1.msra.mxu0 0.0
        %1674 = vmatprep.subr.mxu0 0.0
        %1675 = vmatpush1.msra.mxu0 0.0
        %1676 = vmatprep.subr.mxu0 0.0
        %1677 = vmatpush1.msra.mxu0 0.0
        %1678 = vmatprep.subr.mxu0 0.0
        %1679 = vmatpush1.msra.mxu0 0.0
        %1680 = vmatprep.subr.mxu0 0.0
        %1681 = vmatpush1.msra.mxu0 0.0
        %1682 = vmatprep.subr.mxu0 0.0
        %1683 = vmatpush1.msra.mxu0 0.0
        %1684 = vmatprep.subr.mxu0 0.0
        %1685 = vmatpush1.msra.mxu0 0.0
        %1686 = vmatprep.subr.mxu0 0.0
        %1687 = vmatpush1.msra.mxu0 0.0
        %1688 = vmatprep.mubr.f32.mxu0 0.0
        %1689 = vmatmul.mubr.f32.gmra.mrb[0].mxu0 %v502
        %v1690 = vpop.f32.mrb[0].mxu0
        %v1691 = vadd.f32 %v477, %v1690
        %v1692 = vpop.f32.mrb[0].mxu0
        %1693 = vdwg.mxu0
        %1694 = vmatprep.subr.mxu0 0.0
        %1695 = vmatpush1.msra.mxu0 %v370
        %1696 = vmatprep.subr.mxu0 0.0
        %1697 = vmatpush1.msra.mxu0 %v371
        %1698 = vmatprep.subr.mxu0 0.0
        %1699 = vmatpush1.msra.mxu0 %v372
        %1700 = vmatprep.subr.mxu0 0.0
        %1701 = vmatpush1.msra.mxu0 %v373
        %1702 = vmatprep.subr.mxu0 0.0
        %1703 = vmatpush1.msra.mxu0 0.0
        %1704 = vmatprep.subr.mxu0 0.0
        %1705 = vmatpush1.msra.mxu0 0.0
        %1706 = vmatprep.subr.mxu0 0.0
        %1707 = vmatpush1.msra.mxu0 0.0
        %1708 = vmatprep.subr.mxu0 0.0
        %1709 = vmatpush1.msra.mxu0 0.0
        %1710 = vmatprep.subr.mxu0 0.0
        %1711 = vmatpush1.msra.mxu0 0.0
        %1712 = vmatprep.subr.mxu0 0.0
        %1713 = vmatpush1.msra.mxu0 0.0
        %1714 = vmatprep.subr.mxu0 0.0
        %1715 = vmatpush1.msra.mxu0 0.0
        %1716 = vmatprep.subr.mxu0 0.0
        %1717 = vmatpush1.msra.mxu0 0.0
        %1718 = vmatprep.subr.mxu0 0.0
        %1719 = vmatpush1.msra.mxu0 0.0
        %1720 = vmatprep.subr.mxu0 0.0
        %1721 = vmatpush1.msra.mxu0 0.0
        %1722 = vmatprep.subr.mxu0 0.0
        %1723 = vmatpush1.msra.mxu0 0.0
        %1724 = vmatprep.subr.mxu0 0.0
        %1725 = vmatpush1.msra.mxu0 0.0
        %1726 = vmatprep.subr.mxu0 0.0
        %1727 = vmatpush1.msra.mxu0 0.0
        %1728 = vmatprep.subr.mxu0 0.0
        %1729 = vmatpush1.msra.mxu0 0.0
        %1730 = vmatprep.subr.mxu0 0.0
        %1731 = vmatpush1.msra.mxu0 0.0
        %1732 = vmatprep.subr.mxu0 0.0
        %1733 = vmatpush1.msra.mxu0 0.0
        %1734 = vmatprep.subr.mxu0 0.0
        %1735 = vmatpush1.msra.mxu0 0.0
        %1736 = vmatprep.subr.mxu0 0.0
        %1737 = vmatpush1.msra.mxu0 0.0
        %1738 = vmatprep.subr.mxu0 0.0
        %1739 = vmatpush1.msra.mxu0 0.0
        %1740 = vmatprep.subr.mxu0 0.0
        %1741 = vmatpush1.msra.mxu0 0.0
        %1742 = vmatprep.subr.mxu0 0.0
        %1743 = vmatpush1.msra.mxu0 0.0
        %1744 = vmatprep.subr.mxu0 0.0
        %1745 = vmatpush1.msra.mxu0 0.0
        %1746 = vmatprep.subr.mxu0 0.0
        %1747 = vmatpush1.msra.mxu0 0.0
        %1748 = vmatprep.subr.mxu0 0.0
        %1749 = vmatpush1.msra.mxu0 0.0
        %1750 = vmatprep.subr.mxu0 0.0
        %1751 = vmatpush1.msra.mxu0 0.0
        %1752 = vmatprep.subr.mxu0 0.0
        %1753 = vmatpush1.msra.mxu0 0.0
        %1754 = vmatprep.subr.mxu0 0.0
        %1755 = vmatpush1.msra.mxu0 0.0
        %1756 = vmatprep.subr.mxu0 0.0
        %1757 = vmatpush1.msra.mxu0 0.0
        %1758 = vmatprep.mubr.f32.mxu0 0.0
        %1759 = vmatmul.mubr.f32.gmra.mrb[0].mxu0 %v502
        %v1760 = vpop.f32.mrb[0].mxu0
        %v1761 = vadd.f32 %v481, %v1760
        %v1762 = vpop.f32.mrb[0].mxu0
        %1763 = vdwg.mxu0
        %vm1764 = vcmask 64512
        %v1766 = vsel %vm1764, %v571, 0
        %v1769 = vsel %vm1764, %v991, 0
        %1771 = vmatprep.subr.mxu0 0.0
        %1772 = vmatpush1.xpose.msra.mxu0 %v1769
        %1773 = vmatprep.subr.mxu0 0.0
        %1774 = vmatpush1.xpose.msra.mxu0 0.0
        %1775 = vmatprep.subr.mxu0 0.0
        %1776 = vmatpush1.xpose.msra.mxu0 0.0
        %1777 = vmatprep.subr.mxu0 0.0
        %1778 = vmatpush1.xpose.msra.mxu0 0.0
        %1779 = vmatprep.subr.mxu0 0.0
        %1780 = vmatpush1.xpose.msra.mxu0 0.0
        %1781 = vmatprep.subr.mxu0 0.0
        %1782 = vmatpush1.xpose.msra.mxu0 0.0
        %1783 = vmatprep.subr.mxu0 0.0
        %1784 = vmatpush1.xpose.msra.mxu0 0.0
        %1785 = vmatprep.subr.mxu0 0.0
        %1786 = vmatpush1.xpose.msra.mxu0 0.0
        %1787 = vmatprep.subr.mxu0 0.0
        %1788 = vmatpush1.xpose.msra.mxu0 0.0
        %1789 = vmatprep.subr.mxu0 0.0
        %1790 = vmatpush1.xpose.msra.mxu0 0.0
        %1791 = vmatprep.subr.mxu0 0.0
        %1792 = vmatpush1.xpose.msra.mxu0 0.0
        %1793 = vmatprep.subr.mxu0 0.0
        %1794 = vmatpush1.xpose.msra.mxu0 0.0
        %1795 = vmatprep.subr.mxu0 0.0
        %1796 = vmatpush1.xpose.msra.mxu0 0.0
        %1797 = vmatprep.subr.mxu0 0.0
        %1798 = vmatpush1.xpose.msra.mxu0 0.0
        %1799 = vmatprep.subr.mxu0 0.0
        %1800 = vmatpush1.xpose.msra.mxu0 0.0
        %1801 = vmatprep.subr.mxu0 0.0
        %1802 = vmatpush1.xpose.msra.mxu0 0.0
        %1803 = vmatprep.subr.mxu0 0.0
        %1804 = vmatpush1.xpose.msra.mxu0 0.0
        %1805 = vmatprep.subr.mxu0 0.0
        %1806 = vmatpush1.xpose.msra.mxu0 0.0
        %1807 = vmatprep.subr.mxu0 0.0
        %1808 = vmatpush1.xpose.msra.mxu0 0.0
        %1809 = vmatprep.subr.mxu0 0.0
        %1810 = vmatpush1.xpose.msra.mxu0 0.0
        %1811 = vmatprep.subr.mxu0 0.0
        %1812 = vmatpush1.xpose.msra.mxu0 0.0
        %1813 = vmatprep.subr.mxu0 0.0
        %1814 = vmatpush1.xpose.msra.mxu0 0.0
        %1815 = vmatprep.subr.mxu0 0.0
        %1816 = vmatpush1.xpose.msra.mxu0 0.0
        %1817 = vmatprep.subr.mxu0 0.0
        %1818 = vmatpush1.xpose.msra.mxu0 0.0
        %1819 = vmatprep.subr.mxu0 0.0
        %1820 = vmatpush1.xpose.msra.mxu0 0.0
        %1821 = vmatprep.subr.mxu0 0.0
        %1822 = vmatpush1.xpose.msra.mxu0 0.0
        %1823 = vmatprep.subr.mxu0 0.0
        %1824 = vmatpush1.xpose.msra.mxu0 0.0
        %1825 = vmatprep.subr.mxu0 0.0
        %1826 = vmatpush1.xpose.msra.mxu0 0.0
        %1827 = vmatprep.subr.mxu0 0.0
        %1828 = vmatpush1.xpose.msra.mxu0 0.0
        %1829 = vmatprep.subr.mxu0 0.0
        %1830 = vmatpush1.xpose.msra.mxu0 0.0
        %1831 = vmatprep.subr.mxu0 0.0
        %1832 = vmatpush1.xpose.msra.mxu0 0.0
        %1833 = vmatprep.subr.mxu0 0.0
        %1834 = vmatpush1.xpose.msra.mxu0 0.0
        %1835 = vmatprep.mubr.f32.mxu0 0.0
        %1836 = vmatmul.mubr.f32.gmra.mrb[0].mxu0 %v1766
        %v1837 = vpop.f32.mrb[0].mxu0
        %v1838 = vadd.f32 0.0, %v1837
        %v1839 = vpop.f32.mrb[0].mxu0
        %1840 = vdwg.mxu0
        %v1842 = vsel %vm1764, %v641, 0
        %v1845 = vsel %vm1764, %v1061, 0
        %1847 = vmatprep.subr.mxu0 0.0
        %1848 = vmatpush1.xpose.msra.mxu0 %v1845
        %1849 = vmatprep.subr.mxu0 0.0
        %1850 = vmatpush1.xpose.msra.mxu0 0.0
        %1851 = vmatprep.subr.mxu0 0.0
        %1852 = vmatpush1.xpose.msra.mxu0 0.0
        %1853 = vmatprep.subr.mxu0 0.0
        %1854 = vmatpush1.xpose.msra.mxu0 0.0
        %1855 = vmatprep.subr.mxu0 0.0
        %1856 = vmatpush1.xpose.msra.mxu0 0.0
        %1857 = vmatprep.subr.mxu0 0.0
        %1858 = vmatpush1.xpose.msra.mxu0 0.0
        %1859 = vmatprep.subr.mxu0 0.0
        %1860 = vmatpush1.xpose.msra.mxu0 0.0
        %1861 = vmatprep.subr.mxu0 0.0
        %1862 = vmatpush1.xpose.msra.mxu0 0.0
        %1863 = vmatprep.subr.mxu0 0.0
        %1864 = vmatpush1.xpose.msra.mxu0 0.0
        %1865 = vmatprep.subr.mxu0 0.0
        %1866 = vmatpush1.xpose.msra.mxu0 0.0
        %1867 = vmatprep.subr.mxu0 0.0
        %1868 = vmatpush1.xpose.msra.mxu0 0.0
        %1869 = vmatprep.subr.mxu0 0.0
        %1870 = vmatpush1.xpose.msra.mxu0 0.0
        %1871 = vmatprep.subr.mxu0 0.0
        %1872 = vmatpush1.xpose.msra.mxu0 0.0
        %1873 = vmatprep.subr.mxu0 0.0
        %1874 = vmatpush1.xpose.msra.mxu0 0.0
        %1875 = vmatprep.subr.mxu0 0.0
        %1876 = vmatpush1.xpose.msra.mxu0 0.0
        %1877 = vmatprep.subr.mxu0 0.0
        %1878 = vmatpush1.xpose.msra.mxu0 0.0
        %1879 = vmatprep.subr.mxu0 0.0
        %1880 = vmatpush1.xpose.msra.mxu0 0.0
        %1881 = vmatprep.subr.mxu0 0.0
        %1882 = vmatpush1.xpose.msra.mxu0 0.0
        %1883 = vmatprep.subr.mxu0 0.0
        %1884 = vmatpush1.xpose.msra.mxu0 0.0
        %1885 = vmatprep.subr.mxu0 0.0
        %1886 = vmatpush1.xpose.msra.mxu0 0.0
        %1887 = vmatprep.subr.mxu0 0.0
        %1888 = vmatpush1.xpose.msra.mxu0 0.0
        %1889 = vmatprep.subr.mxu0 0.0
        %1890 = vmatpush1.xpose.msra.mxu0 0.0
        %1891 = vmatprep.subr.mxu0 0.0
        %1892 = vmatpush1.xpose.msra.mxu0 0.0
        %1893 = vmatprep.subr.mxu0 0.0
        %1894 = vmatpush1.xpose.msra.mxu0 0.0
        %1895 = vmatprep.subr.mxu0 0.0
        %1896 = vmatpush1.xpose.msra.mxu0 0.0
        %1897 = vmatprep.subr.mxu0 0.0
        %1898 = vmatpush1.xpose.msra.mxu0 0.0
        %1899 = vmatprep.subr.mxu0 0.0
        %1900 = vmatpush1.xpose.msra.mxu0 0.0
        %1901 = vmatprep.subr.mxu0 0.0
        %1902 = vmatpush1.xpose.msra.mxu0 0.0
        %1903 = vmatprep.subr.mxu0 0.0
        %1904 = vmatpush1.xpose.msra.mxu0 0.0
        %1905 = vmatprep.subr.mxu0 0.0
        %1906 = vmatpush1.xpose.msra.mxu0 0.0
        %1907 = vmatprep.subr.mxu0 0.0
        %1908 = vmatpush1.xpose.msra.mxu0 0.0
        %1909 = vmatprep.subr.mxu0 0.0
        %1910 = vmatpush1.xpose.msra.mxu0 0.0
        %1911 = vmatprep.mubr.f32.mxu0 0.0
        %1912 = vmatmul.mubr.f32.gmra.mrb[0].mxu0 %v1842
        %v1913 = vpop.f32.mrb[0].mxu0
        %v1914 = vadd.f32 0.0, %v1913
        %v1915 = vpop.f32.mrb[0].mxu0
        %1916 = vdwg.mxu0
        %v1918 = vsel %vm1764, %v711, 0
        %v1921 = vsel %vm1764, %v1131, 0
        %1923 = vmatprep.subr.mxu0 0.0
        %1924 = vmatpush1.xpose.msra.mxu0 %v1921
        %1925 = vmatprep.subr.mxu0 0.0
        %1926 = vmatpush1.xpose.msra.mxu0 0.0
        %1927 = vmatprep.subr.mxu0 0.0
        %1928 = vmatpush1.xpose.msra.mxu0 0.0
        %1929 = vmatprep.subr.mxu0 0.0
        %1930 = vmatpush1.xpose.msra.mxu0 0.0
        %1931 = vmatprep.subr.mxu0 0.0
        %1932 = vmatpush1.xpose.msra.mxu0 0.0
        %1933 = vmatprep.subr.mxu0 0.0
        %1934 = vmatpush1.xpose.msra.mxu0 0.0
        %1935 = vmatprep.subr.mxu0 0.0
        %1936 = vmatpush1.xpose.msra.mxu0 0.0
        %1937 = vmatprep.subr.mxu0 0.0
        %1938 = vmatpush1.xpose.msra.mxu0 0.0
        %1939 = vmatprep.subr.mxu0 0.0
        %1940 = vmatpush1.xpose.msra.mxu0 0.0
        %1941 = vmatprep.subr.mxu0 0.0
        %1942 = vmatpush1.xpose.msra.mxu0 0.0
        %1943 = vmatprep.subr.mxu0 0.0
        %1944 = vmatpush1.xpose.msra.mxu0 0.0
        %1945 = vmatprep.subr.mxu0 0.0
        %1946 = vmatpush1.xpose.msra.mxu0 0.0
        %1947 = vmatprep.subr.mxu0 0.0
        %1948 = vmatpush1.xpose.msra.mxu0 0.0
        %1949 = vmatprep.subr.mxu0 0.0
        %1950 = vmatpush1.xpose.msra.mxu0 0.0
        %1951 = vmatprep.subr.mxu0 0.0
        %1952 = vmatpush1.xpose.msra.mxu0 0.0
        %1953 = vmatprep.subr.mxu0 0.0
        %1954 = vmatpush1.xpose.msra.mxu0 0.0
        %1955 = vmatprep.subr.mxu0 0.0
        %1956 = vmatpush1.xpose.msra.mxu0 0.0
        %1957 = vmatprep.subr.mxu0 0.0
        %1958 = vmatpush1.xpose.msra.mxu0 0.0
        %1959 = vmatprep.subr.mxu0 0.0
        %1960 = vmatpush1.xpose.msra.mxu0 0.0
        %1961 = vmatprep.subr.mxu0 0.0
        %1962 = vmatpush1.xpose.msra.mxu0 0.0
        %1963 = vmatprep.subr.mxu0 0.0
        %1964 = vmatpush1.xpose.msra.mxu0 0.0
        %1965 = vmatprep.subr.mxu0 0.0
        %1966 = vmatpush1.xpose.msra.mxu0 0.0
        %1967 = vmatprep.subr.mxu0 0.0
        %1968 = vmatpush1.xpose.msra.mxu0 0.0
        %1969 = vmatprep.subr.mxu0 0.0
        %1970 = vmatpush1.xpose.msra.mxu0 0.0
        %1971 = vmatprep.subr.mxu0 0.0
        %1972 = vmatpush1.xpose.msra.mxu0 0.0
        %1973 = vmatprep.subr.mxu0 0.0
        %1974 = vmatpush1.xpose.msra.mxu0 0.0
        %1975 = vmatprep.subr.mxu0 0.0
        %1976 = vmatpush1.xpose.msra.mxu0 0.0
        %1977 = vmatprep.subr.mxu0 0.0
        %1978 = vmatpush1.xpose.msra.mxu0 0.0
        %1979 = vmatprep.subr.mxu0 0.0
        %1980 = vmatpush1.xpose.msra.mxu0 0.0
        %1981 = vmatprep.subr.mxu0 0.0
        %1982 = vmatpush1.xpose.msra.mxu0 0.0
        %1983 = vmatprep.subr.mxu0 0.0
        %1984 = vmatpush1.xpose.msra.mxu0 0.0
        %1985 = vmatprep.subr.mxu0 0.0
        %1986 = vmatpush1.xpose.msra.mxu0 0.0
        %1987 = vmatprep.mubr.f32.mxu0 0.0
        %1988 = vmatmul.mubr.f32.gmra.mrb[0].mxu0 %v1918
        %v1989 = vpop.f32.mrb[0].mxu0
        %v1990 = vadd.f32 0.0, %v1989
        %v1991 = vpop.f32.mrb[0].mxu0
        %1992 = vdwg.mxu0
        %v1994 = vsel %vm1764, %v781, 0
        %v1997 = vsel %vm1764, %v1201, 0
        %1999 = vmatprep.subr.mxu0 0.0
        %2000 = vmatpush1.xpose.msra.mxu0 %v1997
        %2001 = vmatprep.subr.mxu0 0.0
        %2002 = vmatpush1.xpose.msra.mxu0 0.0
        %2003 = vmatprep.subr.mxu0 0.0
        %2004 = vmatpush1.xpose.msra.mxu0 0.0
        %2005 = vmatprep.subr.mxu0 0.0
        %2006 = vmatpush1.xpose.msra.mxu0 0.0
        %2007 = vmatprep.subr.mxu0 0.0
        %2008 = vmatpush1.xpose.msra.mxu0 0.0
        %2009 = vmatprep.subr.mxu0 0.0
        %2010 = vmatpush1.xpose.msra.mxu0 0.0
        %2011 = vmatprep.subr.mxu0 0.0
        %2012 = vmatpush1.xpose.msra.mxu0 0.0
        %2013 = vmatprep.subr.mxu0 0.0
        %2014 = vmatpush1.xpose.msra.mxu0 0.0
        %2015 = vmatprep.subr.mxu0 0.0
        %2016 = vmatpush1.xpose.msra.mxu0 0.0
        %2017 = vmatprep.subr.mxu0 0.0
        %2018 = vmatpush1.xpose.msra.mxu0 0.0
        %2019 = vmatprep.subr.mxu0 0.0
        %2020 = vmatpush1.xpose.msra.mxu0 0.0
        %2021 = vmatprep.subr.mxu0 0.0
        %2022 = vmatpush1.xpose.msra.mxu0 0.0
        %2023 = vmatprep.subr.mxu0 0.0
        %2024 = vmatpush1.xpose.msra.mxu0 0.0
        %2025 = vmatprep.subr.mxu0 0.0
        %2026 = vmatpush1.xpose.msra.mxu0 0.0
        %2027 = vmatprep.subr.mxu0 0.0
        %2028 = vmatpush1.xpose.msra.mxu0 0.0
        %2029 = vmatprep.subr.mxu0 0.0
        %2030 = vmatpush1.xpose.msra.mxu0 0.0
        %2031 = vmatprep.subr.mxu0 0.0
        %2032 = vmatpush1.xpose.msra.mxu0 0.0
        %2033 = vmatprep.subr.mxu0 0.0
        %2034 = vmatpush1.xpose.msra.mxu0 0.0
        %2035 = vmatprep.subr.mxu0 0.0
        %2036 = vmatpush1.xpose.msra.mxu0 0.0
        %2037 = vmatprep.subr.mxu0 0.0
        %2038 = vmatpush1.xpose.msra.mxu0 0.0
        %2039 = vmatprep.subr.mxu0 0.0
        %2040 = vmatpush1.xpose.msra.mxu0 0.0
        %2041 = vmatprep.subr.mxu0 0.0
        %2042 = vmatpush1.xpose.msra.mxu0 0.0
        %2043 = vmatprep.subr.mxu0 0.0
        %2044 = vmatpush1.xpose.msra.mxu0 0.0
        %2045 = vmatprep.subr.mxu0 0.0
        %2046 = vmatpush1.xpose.msra.mxu0 0.0
        %2047 = vmatprep.subr.mxu0 0.0
        %2048 = vmatpush1.xpose.msra.mxu0 0.0
        %2049 = vmatprep.subr.mxu0 0.0
        %2050 = vmatpush1.xpose.msra.mxu0 0.0
        %2051 = vmatprep.subr.mxu0 0.0
        %2052 = vmatpush1.xpose.msra.mxu0 0.0
        %2053 = vmatprep.subr.mxu0 0.0
        %2054 = vmatpush1.xpose.msra.mxu0 0.0
        %2055 = vmatprep.subr.mxu0 0.0
        %2056 = vmatpush1.xpose.msra.mxu0 0.0
        %2057 = vmatprep.subr.mxu0 0.0
        %2058 = vmatpush1.xpose.msra.mxu0 0.0
        %2059 = vmatprep.subr.mxu0 0.0
        %2060 = vmatpush1.xpose.msra.mxu0 0.0
        %2061 = vmatprep.subr.mxu0 0.0
        %2062 = vmatpush1.xpose.msra.mxu0 0.0
        %2063 = vmatprep.mubr.f32.mxu0 0.0
        %2064 = vmatmul.mubr.f32.gmra.mrb[0].mxu0 %v1994
        %v2065 = vpop.f32.mrb[0].mxu0
        %v2066 = vadd.f32 0.0, %v2065
        %v2067 = vpop.f32.mrb[0].mxu0
        %2068 = vdwg.mxu0
        %v2070 = vsel %vm1764, %v851, 0
        %v2073 = vsel %vm1764, %v1271, 0
        %2075 = vmatprep.subr.mxu0 0.0
        %2076 = vmatpush1.xpose.msra.mxu0 %v2073
        %2077 = vmatprep.subr.mxu0 0.0
        %2078 = vmatpush1.xpose.msra.mxu0 0.0
        %2079 = vmatprep.subr.mxu0 0.0
        %2080 = vmatpush1.xpose.msra.mxu0 0.0
        %2081 = vmatprep.subr.mxu0 0.0
        %2082 = vmatpush1.xpose.msra.mxu0 0.0
        %2083 = vmatprep.subr.mxu0 0.0
        %2084 = vmatpush1.xpose.msra.mxu0 0.0
        %2085 = vmatprep.subr.mxu0 0.0
        %2086 = vmatpush1.xpose.msra.mxu0 0.0
        %2087 = vmatprep.subr.mxu0 0.0
        %2088 = vmatpush1.xpose.msra.mxu0 0.0
        %2089 = vmatprep.subr.mxu0 0.0
        %2090 = vmatpush1.xpose.msra.mxu0 0.0
        %2091 = vmatprep.subr.mxu0 0.0
        %2092 = vmatpush1.xpose.msra.mxu0 0.0
        %2093 = vmatprep.subr.mxu0 0.0
        %2094 = vmatpush1.xpose.msra.mxu0 0.0
        %2095 = vmatprep.subr.mxu0 0.0
        %2096 = vmatpush1.xpose.msra.mxu0 0.0
        %2097 = vmatprep.subr.mxu0 0.0
        %2098 = vmatpush1.xpose.msra.mxu0 0.0
        %2099 = vmatprep.subr.mxu0 0.0
        %2100 = vmatpush1.xpose.msra.mxu0 0.0
        %2101 = vmatprep.subr.mxu0 0.0
        %2102 = vmatpush1.xpose.msra.mxu0 0.0
        %2103 = vmatprep.subr.mxu0 0.0
        %2104 = vmatpush1.xpose.msra.mxu0 0.0
        %2105 = vmatprep.subr.mxu0 0.0
        %2106 = vmatpush1.xpose.msra.mxu0 0.0
        %2107 = vmatprep.subr.mxu0 0.0
        %2108 = vmatpush1.xpose.msra.mxu0 0.0
        %2109 = vmatprep.subr.mxu0 0.0
        %2110 = vmatpush1.xpose.msra.mxu0 0.0
        %2111 = vmatprep.subr.mxu0 0.0
        %2112 = vmatpush1.xpose.msra.mxu0 0.0
        %2113 = vmatprep.subr.mxu0 0.0
        %2114 = vmatpush1.xpose.msra.mxu0 0.0
        %2115 = vmatprep.subr.mxu0 0.0
        %2116 = vmatpush1.xpose.msra.mxu0 0.0
        %2117 = vmatprep.subr.mxu0 0.0
        %2118 = vmatpush1.xpose.msra.mxu0 0.0
        %2119 = vmatprep.subr.mxu0 0.0
        %2120 = vmatpush1.xpose.msra.mxu0 0.0
        %2121 = vmatprep.subr.mxu0 0.0
        %2122 = vmatpush1.xpose.msra.mxu0 0.0
        %2123 = vmatprep.subr.mxu0 0.0
        %2124 = vmatpush1.xpose.msra.mxu0 0.0
        %2125 = vmatprep.subr.mxu0 0.0
        %2126 = vmatpush1.xpose.msra.mxu0 0.0
        %2127 = vmatprep.subr.mxu0 0.0
        %2128 = vmatpush1.xpose.msra.mxu0 0.0
        %2129 = vmatprep.subr.mxu0 0.0
        %2130 = vmatpush1.xpose.msra.mxu0 0.0
        %2131 = vmatprep.subr.mxu0 0.0
        %2132 = vmatpush1.xpose.msra.mxu0 0.0
        %2133 = vmatprep.subr.mxu0 0.0
        %2134 = vmatpush1.xpose.msra.mxu0 0.0
        %2135 = vmatprep.subr.mxu0 0.0
        %2136 = vmatpush1.xpose.msra.mxu0 0.0
        %2137 = vmatprep.subr.mxu0 0.0
        %2138 = vmatpush1.xpose.msra.mxu0 0.0
        %2139 = vmatprep.mubr.f32.mxu0 0.0
        %2140 = vmatmul.mubr.f32.gmra.mrb[0].mxu0 %v2070
        %v2141 = vpop.f32.mrb[0].mxu0
        %v2142 = vadd.f32 0.0, %v2141
        %v2143 = vpop.f32.mrb[0].mxu0
        %2144 = vdwg.mxu0
        %v2146 = vsel %vm1764, %v921, 0
        %v2149 = vsel %vm1764, %v1341, 0
        %2151 = vmatprep.subr.mxu0 0.0
        %2152 = vmatpush1.xpose.msra.mxu0 %v2149
        %2153 = vmatprep.subr.mxu0 0.0
        %2154 = vmatpush1.xpose.msra.mxu0 0.0
        %2155 = vmatprep.subr.mxu0 0.0
        %2156 = vmatpush1.xpose.msra.mxu0 0.0
        %2157 = vmatprep.subr.mxu0 0.0
        %2158 = vmatpush1.xpose.msra.mxu0 0.0
        %2159 = vmatprep.subr.mxu0 0.0
        %2160 = vmatpush1.xpose.msra.mxu0 0.0
        %2161 = vmatprep.subr.mxu0 0.0
        %2162 = vmatpush1.xpose.msra.mxu0 0.0
        %2163 = vmatprep.subr.mxu0 0.0
        %2164 = vmatpush1.xpose.msra.mxu0 0.0
        %2165 = vmatprep.subr.mxu0 0.0
        %2166 = vmatpush1.xpose.msra.mxu0 0.0
        %2167 = vmatprep.subr.mxu0 0.0
        %2168 = vmatpush1.xpose.msra.mxu0 0.0
        %2169 = vmatprep.subr.mxu0 0.0
        %2170 = vmatpush1.xpose.msra.mxu0 0.0
        %2171 = vmatprep.subr.mxu0 0.0
        %2172 = vmatpush1.xpose.msra.mxu0 0.0
        %2173 = vmatprep.subr.mxu0 0.0
        %2174 = vmatpush1.xpose.msra.mxu0 0.0
        %2175 = vmatprep.subr.mxu0 0.0
        %2176 = vmatpush1.xpose.msra.mxu0 0.0
        %2177 = vmatprep.subr.mxu0 0.0
        %2178 = vmatpush1.xpose.msra.mxu0 0.0
        %2179 = vmatprep.subr.mxu0 0.0
        %2180 = vmatpush1.xpose.msra.mxu0 0.0
        %2181 = vmatprep.subr.mxu0 0.0
        %2182 = vmatpush1.xpose.msra.mxu0 0.0
        %2183 = vmatprep.subr.mxu0 0.0
        %2184 = vmatpush1.xpose.msra.mxu0 0.0
        %2185 = vmatprep.subr.mxu0 0.0
        %2186 = vmatpush1.xpose.msra.mxu0 0.0
        %2187 = vmatprep.subr.mxu0 0.0
        %2188 = vmatpush1.xpose.msra.mxu0 0.0
        %2189 = vmatprep.subr.mxu0 0.0
        %2190 = vmatpush1.xpose.msra.mxu0 0.0
        %2191 = vmatprep.subr.mxu0 0.0
        %2192 = vmatpush1.xpose.msra.mxu0 0.0
        %2193 = vmatprep.subr.mxu0 0.0
        %2194 = vmatpush1.xpose.msra.mxu0 0.0
        %2195 = vmatprep.subr.mxu0 0.0
        %2196 = vmatpush1.xpose.msra.mxu0 0.0
        %2197 = vmatprep.subr.mxu0 0.0
        %2198 = vmatpush1.xpose.msra.mxu0 0.0
        %2199 = vmatprep.subr.mxu0 0.0
        %2200 = vmatpush1.xpose.msra.mxu0 0.0
        %2201 = vmatprep.subr.mxu0 0.0
        %2202 = vmatpush1.xpose.msra.mxu0 0.0
        %2203 = vmatprep.subr.mxu0 0.0
        %2204 = vmatpush1.xpose.msra.mxu0 0.0
        %2205 = vmatprep.subr.mxu0 0.0
        %2206 = vmatpush1.xpose.msra.mxu0 0.0
        %2207 = vmatprep.subr.mxu0 0.0
        %2208 = vmatpush1.xpose.msra.mxu0 0.0
        %2209 = vmatprep.subr.mxu0 0.0
        %2210 = vmatpush1.xpose.msra.mxu0 0.0
        %2211 = vmatprep.subr.mxu0 0.0
        %2212 = vmatpush1.xpose.msra.mxu0 0.0
        %2213 = vmatprep.subr.mxu0 0.0
        %2214 = vmatpush1.xpose.msra.mxu0 0.0
        %2215 = vmatprep.mubr.f32.mxu0 0.0
        %2216 = vmatmul.mubr.f32.gmra.mrb[0].mxu0 %v2146
        %v2217 = vpop.f32.mrb[0].mxu0
        %v2218 = vadd.f32 0.0, %v2217
        %v2219 = vpop.f32.mrb[0].mxu0
        %2220 = vdwg.mxu0
        %v2221 = vmul.f32 %v1838, 0.35355338
        %v2222 = vmul.f32 %v1914, 0.35355338
        %v2223 = vmul.f32 %v1990, 0.35355338
        %v2224 = vmul.f32 %v2066, 0.35355338
        %v2225 = vmul.f32 %v2142, 0.35355338
        %v2226 = vmul.f32 %v2218, 0.35355338
        %v2227 = vld [vmem:[%s7] sm:$0xff]
        %v2228 = vld [vmem:[%s7 + $0x8] sm:$0xff]
        %v2229 = vld [vmem:[%s7 + $0x10] sm:$0xff]
        %v2230 = vld [vmem:[%s7 + $0x18] sm:$0xff]
        %v2231 = vld [vmem:[%s7 + $0x20] sm:$0xff]
        %v2232 = vld [vmem:[%s7 + $0x28] sm:$0xff]
        %v2233 = vadd.f32 %v2221, %v2227
        %v2234 = vadd.f32 %v2222, %v2228
        %v2235 = vadd.f32 %v2223, %v2229
        %v2236 = vadd.f32 %v2224, %v2230
        %v2237 = vadd.f32 %v2225, %v2231
        %v2238 = vadd.f32 %v2226, %v2232
        %v2239 = vsel %vm1764, %v2233, -inf
        %2240 = vmax.xlane.f32.xlu0 %v2239
        %v2241 = vpop.xlane.xlu0 %2240
        %v2242 = vsel %vm1764, %v2234, -inf
        %2243 = vmax.xlane.f32.xlu0 %v2242
        %v2244 = vpop.xlane.xlu0 %2243
        %v2245 = vsel %vm1764, %v2235, -inf
        %2246 = vmax.xlane.f32.xlu0 %v2245
        %v2247 = vpop.xlane.xlu0 %2246
        %v2248 = vsel %vm1764, %v2236, -inf
        %2249 = vmax.xlane.f32.xlu0 %v2248
        %v2250 = vpop.xlane.xlu0 %2249
        %v2251 = vsel %vm1764, %v2237, -inf
        %2252 = vmax.xlane.f32.xlu0 %v2251
        %v2253 = vpop.xlane.xlu0 %2252
        %v2254 = vsel %vm1764, %v2238, -inf
        %2255 = vmax.xlane.f32.xlu0 %v2254
        %v2256 = vpop.xlane.xlu0 %2255
        %v2257 = vsub.f32 %v2233, %v2241
        %v2258 = vsub.f32 %v2234, %v2244
        %v2259 = vsub.f32 %v2235, %v2247
        %v2260 = vsub.f32 %v2236, %v2250
        %v2261 = vsub.f32 %v2237, %v2253
        %v2262 = vsub.f32 %v2238, %v2256
        %v2263 = vmul.f32 %v2257, 1.442695
        %v2264 = vpow.pop %v2263
        %v2265 = vmul.f32 %v2258, 1.442695
        %v2266 = vpow.pop %v2265
        %v2267 = vmul.f32 %v2259, 1.442695
        %v2268 = vpow.pop %v2267
        %v2269 = vmul.f32 %v2260, 1.442695
        %v2270 = vpow.pop %v2269
        %v2271 = vmul.f32 %v2261, 1.442695
        %v2272 = vpow.pop %v2271
        %v2273 = vmul.f32 %v2262, 1.442695
        %v2274 = vpow.pop %v2273
        %v2275 = vsel %vm1764, %v2264, 0.0
        %2276 = vadd.xlane.f32.xlu0 %v2275
        %v2277 = vpop.xlane.xlu0 %2276
        %v2278 = vsel %vm1764, %v2266, 0.0
        %2279 = vadd.xlane.f32.xlu0 %v2278
        %v2280 = vpop.xlane.xlu0 %2279
        %v2281 = vsel %vm1764, %v2268, 0.0
        %2282 = vadd.xlane.f32.xlu0 %v2281
        %v2283 = vpop.xlane.xlu0 %2282
        %v2284 = vsel %vm1764, %v2270, 0.0
        %2285 = vadd.xlane.f32.xlu0 %v2284
        %v2286 = vpop.xlane.xlu0 %2285
        %v2287 = vsel %vm1764, %v2272, 0.0
        %2288 = vadd.xlane.f32.xlu0 %v2287
        %v2289 = vpop.xlane.xlu0 %2288
        %v2290 = vsel %vm1764, %v2274, 0.0
        %2291 = vadd.xlane.f32.xlu0 %v2290
        %v2292 = vpop.xlane.xlu0 %2291
        %v2294 = vsel %vm1764, %v2264, 0
        %2296 = vmatprep.subr.mxu0 0.0
        %2297 = vmatpush1.msra.mxu0 %v1411
        %2298 = vmatprep.subr.mxu0 0.0
        %2299 = vmatpush1.msra.mxu0 0.0
        %2300 = vmatprep.subr.mxu0 0.0
        %2301 = vmatpush1.msra.mxu0 0.0
        %2302 = vmatprep.subr.mxu0 0.0
        %2303 = vmatpush1.msra.mxu0 0.0
        %2304 = vmatprep.subr.mxu0 0.0
        %2305 = vmatpush1.msra.mxu0 0.0
        %2306 = vmatprep.subr.mxu0 0.0
        %2307 = vmatpush1.msra.mxu0 0.0
        %2308 = vmatprep.subr.mxu0 0.0
        %2309 = vmatpush1.msra.mxu0 0.0
        %2310 = vmatprep.subr.mxu0 0.0
        %2311 = vmatpush1.msra.mxu0 0.0
        %2312 = vmatprep.subr.mxu0 0.0
        %2313 = vmatpush1.msra.mxu0 0.0
        %2314 = vmatprep.subr.mxu0 0.0
        %2315 = vmatpush1.msra.mxu0 0.0
        %2316 = vmatprep.subr.mxu0 0.0
        %2317 = vmatpush1.msra.mxu0 0.0
        %2318 = vmatprep.subr.mxu0 0.0
        %2319 = vmatpush1.msra.mxu0 0.0
        %2320 = vmatprep.subr.mxu0 0.0
        %2321 = vmatpush1.msra.mxu0 0.0
        %2322 = vmatprep.subr.mxu0 0.0
        %2323 = vmatpush1.msra.mxu0 0.0
        %2324 = vmatprep.subr.mxu0 0.0
        %2325 = vmatpush1.msra.mxu0 0.0
        %2326 = vmatprep.subr.mxu0 0.0
        %2327 = vmatpush1.msra.mxu0 0.0
        %2328 = vmatprep.subr.mxu0 0.0
        %2329 = vmatpush1.msra.mxu0 0.0
        %2330 = vmatprep.subr.mxu0 0.0
        %2331 = vmatpush1.msra.mxu0 0.0
        %2332 = vmatprep.subr.mxu0 0.0
        %2333 = vmatpush1.msra.mxu0 0.0
        %2334 = vmatprep.subr.mxu0 0.0
        %2335 = vmatpush1.msra.mxu0 0.0
        %2336 = vmatprep.subr.mxu0 0.0
        %2337 = vmatpush1.msra.mxu0 0.0
        %2338 = vmatprep.subr.mxu0 0.0
        %2339 = vmatpush1.msra.mxu0 0.0
        %2340 = vmatprep.subr.mxu0 0.0
        %2341 = vmatpush1.msra.mxu0 0.0
        %2342 = vmatprep.subr.mxu0 0.0
        %2343 = vmatpush1.msra.mxu0 0.0
        %2344 = vmatprep.subr.mxu0 0.0
        %2345 = vmatpush1.msra.mxu0 0.0
        %2346 = vmatprep.subr.mxu0 0.0
        %2347 = vmatpush1.msra.mxu0 0.0
        %2348 = vmatprep.subr.mxu0 0.0
        %2349 = vmatpush1.msra.mxu0 0.0
        %2350 = vmatprep.subr.mxu0 0.0
        %2351 = vmatpush1.msra.mxu0 0.0
        %2352 = vmatprep.subr.mxu0 0.0
        %2353 = vmatpush1.msra.mxu0 0.0
        %2354 = vmatprep.subr.mxu0 0.0
        %2355 = vmatpush1.msra.mxu0 0.0
        %2356 = vmatprep.subr.mxu0 0.0
        %2357 = vmatpush1.msra.mxu0 0.0
        %2358 = vmatprep.subr.mxu0 0.0
        %2359 = vmatpush1.msra.mxu0 0.0
        %2360 = vmatprep.mubr.f32.mxu0 0.0
        %2361 = vmatmul.mubr.f32.gmra.mrb[0].mxu0 %v2294
        %v2362 = vpop.f32.mrb[0].mxu0
        %v2363 = vadd.f32 0.0, %v2362
        %v2364 = vpop.f32.mrb[0].mxu0
        %2365 = vdwg.mxu0
        %v2367 = vsel %vm1764, %v2266, 0
        %2369 = vmatprep.subr.mxu0 0.0
        %2370 = vmatpush1.msra.mxu0 %v1481
        %2371 = vmatprep.subr.mxu0 0.0
        %2372 = vmatpush1.msra.mxu0 0.0
        %2373 = vmatprep.subr.mxu0 0.0
        %2374 = vmatpush1.msra.mxu0 0.0
        %2375 = vmatprep.subr.mxu0 0.0
        %2376 = vmatpush1.msra.mxu0 0.0
        %2377 = vmatprep.subr.mxu0 0.0
        %2378 = vmatpush1.msra.mxu0 0.0
        %2379 = vmatprep.subr.mxu0 0.0
        %2380 = vmatpush1.msra.mxu0 0.0
        %2381 = vmatprep.subr.mxu0 0.0
        %2382 = vmatpush1.msra.mxu0 0.0
        %2383 = vmatprep.subr.mxu0 0.0
        %2384 = vmatpush1.msra.mxu0 0.0
        %2385 = vmatprep.subr.mxu0 0.0
        %2386 = vmatpush1.msra.mxu0 0.0
        %2387 = vmatprep.subr.mxu0 0.0
        %2388 = vmatpush1.msra.mxu0 0.0
        %2389 = vmatprep.subr.mxu0 0.0
        %2390 = vmatpush1.msra.mxu0 0.0
        %2391 = vmatprep.subr.mxu0 0.0
        %2392 = vmatpush1.msra.mxu0 0.0
        %2393 = vmatprep.subr.mxu0 0.0
        %2394 = vmatpush1.msra.mxu0 0.0
        %2395 = vmatprep.subr.mxu0 0.0
        %2396 = vmatpush1.msra.mxu0 0.0
        %2397 = vmatprep.subr.mxu0 0.0
        %2398 = vmatpush1.msra.mxu0 0.0
        %2399 = vmatprep.subr.mxu0 0.0
        %2400 = vmatpush1.msra.mxu0 0.0
        %2401 = vmatprep.subr.mxu0 0.0
        %2402 = vmatpush1.msra.mxu0 0.0
        %2403 = vmatprep.subr.mxu0 0.0
        %2404 = vmatpush1.msra.mxu0 0.0
        %2405 = vmatprep.subr.mxu0 0.0
        %2406 = vmatpush1.msra.mxu0 0.0
        %2407 = vmatprep.subr.mxu0 0.0
        %2408 = vmatpush1.msra.mxu0 0.0
        %2409 = vmatprep.subr.mxu0 0.0
        %2410 = vmatpush1.msra.mxu0 0.0
        %2411 = vmatprep.subr.mxu0 0.0
        %2412 = vmatpush1.msra.mxu0 0.0
        %2413 = vmatprep.subr.mxu0 0.0
        %2414 = vmatpush1.msra.mxu0 0.0
        %2415 = vmatprep.subr.mxu0 0.0
        %2416 = vmatpush1.msra.mxu0 0.0
        %2417 = vmatprep.subr.mxu0 0.0
        %2418 = vmatpush1.msra.mxu0 0.0
        %2419 = vmatprep.subr.mxu0 0.0
        %2420 = vmatpush1.msra.mxu0 0.0
        %2421 = vmatprep.subr.mxu0 0.0
        %2422 = vmatpush1.msra.mxu0 0.0
        %2423 = vmatprep.subr.mxu0 0.0
        %2424 = vmatpush1.msra.mxu0 0.0
        %2425 = vmatprep.subr.mxu0 0.0
        %2426 = vmatpush1.msra.mxu0 0.0
        %2427 = vmatprep.subr.mxu0 0.0
        %2428 = vmatpush1.msra.mxu0 0.0
        %2429 = vmatprep.subr.mxu0 0.0
        %2430 = vmatpush1.msra.mxu0 0.0
        %2431 = vmatprep.subr.mxu0 0.0
        %2432 = vmatpush1.msra.mxu0 0.0
        %2433 = vmatprep.mubr.f32.mxu0 0.0
        %2434 = vmatmul.mubr.f32.gmra.mrb[0].mxu0 %v2367
        %v2435 = vpop.f32.mrb[0].mxu0
        %v2436 = vadd.f32 0.0, %v2435
        %v2437 = vpop.f32.mrb[0].mxu0
        %2438 = vdwg.mxu0
        %v2440 = vsel %vm1764, %v2268, 0
        %2442 = vmatprep.subr.mxu0 0.0
        %2443 = vmatpush1.msra.mxu0 %v1551
        %2444 = vmatprep.subr.mxu0 0.0
        %2445 = vmatpush1.msra.mxu0 0.0
        %2446 = vmatprep.subr.mxu0 0.0
        %2447 = vmatpush1.msra.mxu0 0.0
        %2448 = vmatprep.subr.mxu0 0.0
        %2449 = vmatpush1.msra.mxu0 0.0
        %2450 = vmatprep.subr.mxu0 0.0
        %2451 = vmatpush1.msra.mxu0 0.0
        %2452 = vmatprep.subr.mxu0 0.0
        %2453 = vmatpush1.msra.mxu0 0.0
        %2454 = vmatprep.subr.mxu0 0.0
        %2455 = vmatpush1.msra.mxu0 0.0
        %2456 = vmatprep.subr.mxu0 0.0
        %2457 = vmatpush1.msra.mxu0 0.0
        %2458 = vmatprep.subr.mxu0 0.0
        %2459 = vmatpush1.msra.mxu0 0.0
        %2460 = vmatprep.subr.mxu0 0.0
        %2461 = vmatpush1.msra.mxu0 0.0
        %2462 = vmatprep.subr.mxu0 0.0
        %2463 = vmatpush1.msra.mxu0 0.0
        %2464 = vmatprep.subr.mxu0 0.0
        %2465 = vmatpush1.msra.mxu0 0.0
        %2466 = vmatprep.subr.mxu0 0.0
        %2467 = vmatpush1.msra.mxu0 0.0
        %2468 = vmatprep.subr.mxu0 0.0
        %2469 = vmatpush1.msra.mxu0 0.0
        %2470 = vmatprep.subr.mxu0 0.0
        %2471 = vmatpush1.msra.mxu0 0.0
        %2472 = vmatprep.subr.mxu0 0.0
        %2473 = vmatpush1.msra.mxu0 0.0
        %2474 = vmatprep.subr.mxu0 0.0
        %2475 = vmatpush1.msra.mxu0 0.0
        %2476 = vmatprep.subr.mxu0 0.0
        %2477 = vmatpush1.msra.mxu0 0.0
        %2478 = vmatprep.subr.mxu0 0.0
        %2479 = vmatpush1.msra.mxu0 0.0
        %2480 = vmatprep.subr.mxu0 0.0
        %2481 = vmatpush1.msra.mxu0 0.0
        %2482 = vmatprep.subr.mxu0 0.0
        %2483 = vmatpush1.msra.mxu0 0.0
        %2484 = vmatprep.subr.mxu0 0.0
        %2485 = vmatpush1.msra.mxu0 0.0
        %2486 = vmatprep.subr.mxu0 0.0
        %2487 = vmatpush1.msra.mxu0 0.0
        %2488 = vmatprep.subr.mxu0 0.0
        %2489 = vmatpush1.msra.mxu0 0.0
        %2490 = vmatprep.subr.mxu0 0.0
        %2491 = vmatpush1.msra.mxu0 0.0
        %2492 = vmatprep.subr.mxu0 0.0
        %2493 = vmatpush1.msra.mxu0 0.0
        %2494 = vmatprep.subr.mxu0 0.0
        %2495 = vmatpush1.msra.mxu0 0.0
        %2496 = vmatprep.subr.mxu0 0.0
        %2497 = vmatpush1.msra.mxu0 0.0
        %2498 = vmatprep.subr.mxu0 0.0
        %2499 = vmatpush1.msra.mxu0 0.0
        %2500 = vmatprep.subr.mxu0 0.0
        %2501 = vmatpush1.msra.mxu0 0.0
        %2502 = vmatprep.subr.mxu0 0.0
        %2503 = vmatpush1.msra.mxu0 0.0
        %2504 = vmatprep.subr.mxu0 0.0
        %2505 = vmatpush1.msra.mxu0 0.0
        %2506 = vmatprep.mubr.f32.mxu0 0.0
        %2507 = vmatmul.mubr.f32.gmra.mrb[0].mxu0 %v2440
        %v2508 = vpop.f32.mrb[0].mxu0
        %v2509 = vadd.f32 0.0, %v2508
        %v2510 = vpop.f32.mrb[0].mxu0
        %2511 = vdwg.mxu0
        %v2513 = vsel %vm1764, %v2270, 0
        %2515 = vmatprep.subr.mxu0 0.0
        %2516 = vmatpush1.msra.mxu0 %v1621
        %2517 = vmatprep.subr.mxu0 0.0
        %2518 = vmatpush1.msra.mxu0 0.0
        %2519 = vmatprep.subr.mxu0 0.0
        %2520 = vmatpush1.msra.mxu0 0.0
        %2521 = vmatprep.subr.mxu0 0.0
        %2522 = vmatpush1.msra.mxu0 0.0
        %2523 = vmatprep.subr.mxu0 0.0
        %2524 = vmatpush1.msra.mxu0 0.0
        %2525 = vmatprep.subr.mxu0 0.0
        %2526 = vmatpush1.msra.mxu0 0.0
        %2527 = vmatprep.subr.mxu0 0.0
        %2528 = vmatpush1.msra.mxu0 0.0
        %2529 = vmatprep.subr.mxu0 0.0
        %2530 = vmatpush1.msra.mxu0 0.0
        %2531 = vmatprep.subr.mxu0 0.0
        %2532 = vmatpush1.msra.mxu0 0.0
        %2533 = vmatprep.subr.mxu0 0.0
        %2534 = vmatpush1.msra.mxu0 0.0
        %2535 = vmatprep.subr.mxu0 0.0
        %2536 = vmatpush1.msra.mxu0 0.0
        %2537 = vmatprep.subr.mxu0 0.0
        %2538 = vmatpush1.msra.mxu0 0.0
        %2539 = vmatprep.subr.mxu0 0.0
        %2540 = vmatpush1.msra.mxu0 0.0
        %2541 = vmatprep.subr.mxu0 0.0
        %2542 = vmatpush1.msra.mxu0 0.0
        %2543 = vmatprep.subr.mxu0 0.0
        %2544 = vmatpush1.msra.mxu0 0.0
        %2545 = vmatprep.subr.mxu0 0.0
        %2546 = vmatpush1.msra.mxu0 0.0
        %2547 = vmatprep.subr.mxu0 0.0
        %2548 = vmatpush1.msra.mxu0 0.0
        %2549 = vmatprep.subr.mxu0 0.0
        %2550 = vmatpush1.msra.mxu0 0.0
        %2551 = vmatprep.subr.mxu0 0.0
        %2552 = vmatpush1.msra.mxu0 0.0
        %2553 = vmatprep.subr.mxu0 0.0
        %2554 = vmatpush1.msra.mxu0 0.0
        %2555 = vmatprep.subr.mxu0 0.0
        %2556 = vmatpush1.msra.mxu0 0.0
        %2557 = vmatprep.subr.mxu0 0.0
        %2558 = vmatpush1.msra.mxu0 0.0
        %2559 = vmatprep.subr.mxu0 0.0
        %2560 = vmatpush1.msra.mxu0 0.0
        %2561 = vmatprep.subr.mxu0 0.0
        %2562 = vmatpush1.msra.mxu0 0.0
        %2563 = vmatprep.subr.mxu0 0.0
        %2564 = vmatpush1.msra.mxu0 0.0
        %2565 = vmatprep.subr.mxu0 0.0
        %2566 = vmatpush1.msra.mxu0 0.0
        %2567 = vmatprep.subr.mxu0 0.0
        %2568 = vmatpush1.msra.mxu0 0.0
        %2569 = vmatprep.subr.mxu0 0.0
        %2570 = vmatpush1.msra.mxu0 0.0
        %2571 = vmatprep.subr.mxu0 0.0
        %2572 = vmatpush1.msra.mxu0 0.0
        %2573 = vmatprep.subr.mxu0 0.0
        %2574 = vmatpush1.msra.mxu0 0.0
        %2575 = vmatprep.subr.mxu0 0.0
        %2576 = vmatpush1.msra.mxu0 0.0
        %2577 = vmatprep.subr.mxu0 0.0
        %2578 = vmatpush1.msra.mxu0 0.0
        %2579 = vmatprep.mubr.f32.mxu0 0.0
        %2580 = vmatmul.mubr.f32.gmra.mrb[0].mxu0 %v2513
        %v2581 = vpop.f32.mrb[0].mxu0
        %v2582 = vadd.f32 0.0, %v2581
        %v2583 = vpop.f32.mrb[0].mxu0
        %2584 = vdwg.mxu0
        %v2586 = vsel %vm1764, %v2272, 0
        %2588 = vmatprep.subr.mxu0 0.0
        %2589 = vmatpush1.msra.mxu0 %v1691
        %2590 = vmatprep.subr.mxu0 0.0
        %2591 = vmatpush1.msra.mxu0 0.0
        %2592 = vmatprep.subr.mxu0 0.0
        %2593 = vmatpush1.msra.mxu0 0.0
        %2594 = vmatprep.subr.mxu0 0.0
        %2595 = vmatpush1.msra.mxu0 0.0
        %2596 = vmatprep.subr.mxu0 0.0
        %2597 = vmatpush1.msra.mxu0 0.0
        %2598 = vmatprep.subr.mxu0 0.0
        %2599 = vmatpush1.msra.mxu0 0.0
        %2600 = vmatprep.subr.mxu0 0.0
        %2601 = vmatpush1.msra.mxu0 0.0
        %2602 = vmatprep.subr.mxu0 0.0
        %2603 = vmatpush1.msra.mxu0 0.0
        %2604 = vmatprep.subr.mxu0 0.0
        %2605 = vmatpush1.msra.mxu0 0.0
        %2606 = vmatprep.subr.mxu0 0.0
        %2607 = vmatpush1.msra.mxu0 0.0
        %2608 = vmatprep.subr.mxu0 0.0
        %2609 = vmatpush1.msra.mxu0 0.0
        %2610 = vmatprep.subr.mxu0 0.0
        %2611 = vmatpush1.msra.mxu0 0.0
        %2612 = vmatprep.subr.mxu0 0.0
        %2613 = vmatpush1.msra.mxu0 0.0
        %2614 = vmatprep.subr.mxu0 0.0
        %2615 = vmatpush1.msra.mxu0 0.0
        %2616 = vmatprep.subr.mxu0 0.0
        %2617 = vmatpush1.msra.mxu0 0.0
        %2618 = vmatprep.subr.mxu0 0.0
        %2619 = vmatpush1.msra.mxu0 0.0
        %2620 = vmatprep.subr.mxu0 0.0
        %2621 = vmatpush1.msra.mxu0 0.0
        %2622 = vmatprep.subr.mxu0 0.0
        %2623 = vmatpush1.msra.mxu0 0.0
        %2624 = vmatprep.subr.mxu0 0.0
        %2625 = vmatpush1.msra.mxu0 0.0
        %2626 = vmatprep.subr.mxu0 0.0
        %2627 = vmatpush1.msra.mxu0 0.0
        %2628 = vmatprep.subr.mxu0 0.0
        %2629 = vmatpush1.msra.mxu0 0.0
        %2630 = vmatprep.subr.mxu0 0.0
        %2631 = vmatpush1.msra.mxu0 0.0
        %2632 = vmatprep.subr.mxu0 0.0
        %2633 = vmatpush1.msra.mxu0 0.0
        %2634 = vmatprep.subr.mxu0 0.0
        %2635 = vmatpush1.msra.mxu0 0.0
        %2636 = vmatprep.subr.mxu0 0.0
        %2637 = vmatpush1.msra.mxu0 0.0
        %2638 = vmatprep.subr.mxu0 0.0
        %2639 = vmatpush1.msra.mxu0 0.0
        %2640 = vmatprep.subr.mxu0 0.0
        %2641 = vmatpush1.msra.mxu0 0.0
        %2642 = vmatprep.subr.mxu0 0.0
        %2643 = vmatpush1.msra.mxu0 0.0
        %2644 = vmatprep.subr.mxu0 0.0
        %2645 = vmatpush1.msra.mxu0 0.0
        %2646 = vmatprep.subr.mxu0 0.0
        %2647 = vmatpush1.msra.mxu0 0.0
        %2648 = vmatprep.subr.mxu0 0.0
        %2649 = vmatpush1.msra.mxu0 0.0
        %2650 = vmatprep.subr.mxu0 0.0
        %2651 = vmatpush1.msra.mxu0 0.0
        %2652 = vmatprep.mubr.f32.mxu0 0.0
        %2653 = vmatmul.mubr.f32.gmra.mrb[0].mxu0 %v2586
        %v2654 = vpop.f32.mrb[0].mxu0
        %v2655 = vadd.f32 0.0, %v2654
        %v2656 = vpop.f32.mrb[0].mxu0
        %2657 = vdwg.mxu0
        %v2659 = vsel %vm1764, %v2274, 0
        %2661 = vmatprep.subr.mxu0 0.0
        %2662 = vmatpush1.msra.mxu0 %v1761
        %2663 = vmatprep.subr.mxu0 0.0
        %2664 = vmatpush1.msra.mxu0 0.0
        %2665 = vmatprep.subr.mxu0 0.0
        %2666 = vmatpush1.msra.mxu0 0.0
        %2667 = vmatprep.subr.mxu0 0.0
        %2668 = vmatpush1.msra.mxu0 0.0
        %2669 = vmatprep.subr.mxu0 0.0
        %2670 = vmatpush1.msra.mxu0 0.0
        %2671 = vmatprep.subr.mxu0 0.0
        %2672 = vmatpush1.msra.mxu0 0.0
        %2673 = vmatprep.subr.mxu0 0.0
        %2674 = vmatpush1.msra.mxu0 0.0
        %2675 = vmatprep.subr.mxu0 0.0
        %2676 = vmatpush1.msra.mxu0 0.0
        %2677 = vmatprep.subr.mxu0 0.0
        %2678 = vmatpush1.msra.mxu0 0.0
        %2679 = vmatprep.subr.mxu0 0.0
        %2680 = vmatpush1.msra.mxu0 0.0
        %2681 = vmatprep.subr.mxu0 0.0
        %2682 = vmatpush1.msra.mxu0 0.0
        %2683 = vmatprep.subr.mxu0 0.0
        %2684 = vmatpush1.msra.mxu0 0.0
        %2685 = vmatprep.subr.mxu0 0.0
        %2686 = vmatpush1.msra.mxu0 0.0
        %2687 = vmatprep.subr.mxu0 0.0
        %2688 = vmatpush1.msra.mxu0 0.0
        %2689 = vmatprep.subr.mxu0 0.0
        %2690 = vmatpush1.msra.mxu0 0.0
        %2691 = vmatprep.subr.mxu0 0.0
        %2692 = vmatpush1.msra.mxu0 0.0
        %2693 = vmatprep.subr.mxu0 0.0
        %2694 = vmatpush1.msra.mxu0 0.0
        %2695 = vmatprep.subr.mxu0 0.0
        %2696 = vmatpush1.msra.mxu0 0.0
        %2697 = vmatprep.subr.mxu0 0.0
        %2698 = vmatpush1.msra.mxu0 0.0
        %2699 = vmatprep.subr.mxu0 0.0
        %2700 = vmatpush1.msra.mxu0 0.0
        %2701 = vmatprep.subr.mxu0 0.0
        %2702 = vmatpush1.msra.mxu0 0.0
        %2703 = vmatprep.subr.mxu0 0.0
        %2704 = vmatpush1.msra.mxu0 0.0
        %2705 = vmatprep.subr.mxu0 0.0
        %2706 = vmatpush1.msra.mxu0 0.0
        %2707 = vmatprep.subr.mxu0 0.0
        %2708 = vmatpush1.msra.mxu0 0.0
        %2709 = vmatprep.subr.mxu0 0.0
        %2710 = vmatpush1.msra.mxu0 0.0
        %2711 = vmatprep.subr.mxu0 0.0
        %2712 = vmatpush1.msra.mxu0 0.0
        %2713 = vmatprep.subr.mxu0 0.0
        %2714 = vmatpush1.msra.mxu0 0.0
        %2715 = vmatprep.subr.mxu0 0.0
        %2716 = vmatpush1.msra.mxu0 0.0
        %2717 = vmatprep.subr.mxu0 0.0
        %2718 = vmatpush1.msra.mxu0 0.0
        %2719 = vmatprep.subr.mxu0 0.0
        %2720 = vmatpush1.msra.mxu0 0.0
        %2721 = vmatprep.subr.mxu0 0.0
        %2722 = vmatpush1.msra.mxu0 0.0
        %2723 = vmatprep.subr.mxu0 0.0
        %2724 = vmatpush1.msra.mxu0 0.0
        %2725 = vmatprep.mubr.f32.mxu0 0.0
        %2726 = vmatmul.mubr.f32.gmra.mrb[0].mxu0 %v2659
        %v2727 = vpop.f32.mrb[0].mxu0
        %v2728 = vadd.f32 0.0, %v2727
        %v2729 = vpop.f32.mrb[0].mxu0
        %2730 = vdwg.mxu0
        %v2731 = vrcp.pop %v2277
        %v2732 = vrcp.pop %v2280
        %v2733 = vrcp.pop %v2283
        %v2734 = vrcp.pop %v2286
        %v2735 = vrcp.pop %v2289
        %v2736 = vrcp.pop %v2292
        %v2737 = vmul.f32 %v2277, %v2731
        %v2738 = vmul.f32 %v2280, %v2732
        %v2739 = vmul.f32 %v2283, %v2733
        %v2740 = vmul.f32 %v2286, %v2734
        %v2741 = vmul.f32 %v2289, %v2735
        %v2742 = vmul.f32 %v2292, %v2736
        %v2743 = vsub.f32 2.0, %v2737
        %v2744 = vsub.f32 2.0, %v2738
        %v2745 = vsub.f32 2.0, %v2739
        %v2746 = vsub.f32 2.0, %v2740
        %v2747 = vsub.f32 2.0, %v2741
        %v2748 = vsub.f32 2.0, %v2742
        %v2749 = vmul.f32 %v2731, %v2743
        %v2750 = vmul.f32 %v2732, %v2744
        %v2751 = vmul.f32 %v2733, %v2745
        %v2752 = vmul.f32 %v2734, %v2746
        %v2753 = vmul.f32 %v2735, %v2747
        %v2754 = vmul.f32 %v2736, %v2748
        %v2755 = vmul.f32 %v2363, %v2749
        %v2756 = vmul.f32 %v2436, %v2750
        %v2757 = vmul.f32 %v2509, %v2751
        %v2758 = vmul.f32 %v2582, %v2752
        %v2759 = vmul.f32 %v2655, %v2753
        %v2760 = vmul.f32 %v2728, %v2754
        %v2761 = vld [vmem:[%s3] sm:$0xff]
        %v2762 = vld [vmem:[%s3 + $0x8] sm:$0xff]
        %v2763 = vld [vmem:[%s3 + $0x10] sm:$0xff]
        %v2764 = vld [vmem:[%s3 + $0x18] sm:$0xff]
        %v2765 = vld [vmem:[%s3 + $0x20] sm:$0xff]
        %v2766 = vld [vmem:[%s3 + $0x28] sm:$0xff]
        %v2768 = vsel %vm1764, %v2755, 0
        %2770 = vmatprep.subr.mxu0 0.0
        %2771 = vmatpush1.msra.mxu0 %v2761
        %2772 = vmatprep.subr.mxu0 0.0
        %2773 = vmatpush1.msra.mxu0 0.0
        %2774 = vmatprep.subr.mxu0 0.0
        %2775 = vmatpush1.msra.mxu0 0.0
        %2776 = vmatprep.subr.mxu0 0.0
        %2777 = vmatpush1.msra.mxu0 0.0
        %2778 = vmatprep.subr.mxu0 0.0
        %2779 = vmatpush1.msra.mxu0 0.0
        %2780 = vmatprep.subr.mxu0 0.0
        %2781 = vmatpush1.msra.mxu0 0.0
        %2782 = vmatprep.subr.mxu0 0.0
        %2783 = vmatpush1.msra.mxu0 0.0
        %2784 = vmatprep.subr.mxu0 0.0
        %2785 = vmatpush1.msra.mxu0 0.0
        %2786 = vmatprep.subr.mxu0 0.0
        %2787 = vmatpush1.msra.mxu0 0.0
        %2788 = vmatprep.subr.mxu0 0.0
        %2789 = vmatpush1.msra.mxu0 0.0
        %2790 = vmatprep.subr.mxu0 0.0
        %2791 = vmatpush1.msra.mxu0 0.0
        %2792 = vmatprep.subr.mxu0 0.0
        %2793 = vmatpush1.msra.mxu0 0.0
        %2794 = vmatprep.subr.mxu0 0.0
        %2795 = vmatpush1.msra.mxu0 0.0
        %2796 = vmatprep.subr.mxu0 0.0
        %2797 = vmatpush1.msra.mxu0 0.0
        %2798 = vmatprep.subr.mxu0 0.0
        %2799 = vmatpush1.msra.mxu0 0.0
        %2800 = vmatprep.subr.mxu0 0.0
        %2801 = vmatpush1.msra.mxu0 0.0
        %2802 = vmatprep.subr.mxu0 0.0
        %2803 = vmatpush1.msra.mxu0 0.0
        %2804 = vmatprep.subr.mxu0 0.0
        %2805 = vmatpush1.msra.mxu0 0.0
        %2806 = vmatprep.subr.mxu0 0.0
        %2807 = vmatpush1.msra.mxu0 0.0
        %2808 = vmatprep.subr.mxu0 0.0
        %2809 = vmatpush1.msra.mxu0 0.0
        %2810 = vmatprep.subr.mxu0 0.0
        %2811 = vmatpush1.msra.mxu0 0.0
        %2812 = vmatprep.subr.mxu0 0.0
        %2813 = vmatpush1.msra.mxu0 0.0
        %2814 = vmatprep.subr.mxu0 0.0
        %2815 = vmatpush1.msra.mxu0 0.0
        %2816 = vmatprep.subr.mxu0 0.0
        %2817 = vmatpush1.msra.mxu0 0.0
        %2818 = vmatprep.subr.mxu0 0.0
        %2819 = vmatpush1.msra.mxu0 0.0
        %2820 = vmatprep.subr.mxu0 0.0
        %2821 = vmatpush1.msra.mxu0 0.0
        %2822 = vmatprep.subr.mxu0 0.0
        %2823 = vmatpush1.msra.mxu0 0.0
        %2824 = vmatprep.subr.mxu0 0.0
        %2825 = vmatpush1.msra.mxu0 0.0
        %2826 = vmatprep.subr.mxu0 0.0
        %2827 = vmatpush1.msra.mxu0 0.0
        %2828 = vmatprep.subr.mxu0 0.0
        %2829 = vmatpush1.msra.mxu0 0.0
        %2830 = vmatprep.subr.mxu0 0.0
        %2831 = vmatpush1.msra.mxu0 0.0
        %2832 = vmatprep.subr.mxu0 0.0
        %2833 = vmatpush1.msra.mxu0 0.0
        %2834 = vmatprep.mubr.f32.mxu0 0.0
        %2835 = vmatmul.mubr.f32.gmra.mrb[0].mxu0 %v2768
        %v2836 = vpop.f32.mrb[0].mxu0
        %v2837 = vadd.f32 0.0, %v2836
        %v2838 = vpop.f32.mrb[0].mxu0
        %2839 = vdwg.mxu0
        %v2841 = vsel %vm1764, %v2756, 0
        %2843 = vmatprep.subr.mxu0 0.0
        %2844 = vmatpush1.msra.mxu0 %v2762
        %2845 = vmatprep.subr.mxu0 0.0
        %2846 = vmatpush1.msra.mxu0 0.0
        %2847 = vmatprep.subr.mxu0 0.0
        %2848 = vmatpush1.msra.mxu0 0.0
        %2849 = vmatprep.subr.mxu0 0.0
        %2850 = vmatpush1.msra.mxu0 0.0
        %2851 = vmatprep.subr.mxu0 0.0
        %2852 = vmatpush1.msra.mxu0 0.0
        %2853 = vmatprep.subr.mxu0 0.0
        %2854 = vmatpush1.msra.mxu0 0.0
        %2855 = vmatprep.subr.mxu0 0.0
        %2856 = vmatpush1.msra.mxu0 0.0
        %2857 = vmatprep.subr.mxu0 0.0
        %2858 = vmatpush1.msra.mxu0 0.0
        %2859 = vmatprep.subr.mxu0 0.0
        %2860 = vmatpush1.msra.mxu0 0.0
        %2861 = vmatprep.subr.mxu0 0.0
        %2862 = vmatpush1.msra.mxu0 0.0
        %2863 = vmatprep.subr.mxu0 0.0
        %2864 = vmatpush1.msra.mxu0 0.0
        %2865 = vmatprep.subr.mxu0 0.0
        %2866 = vmatpush1.msra.mxu0 0.0
        %2867 = vmatprep.subr.mxu0 0.0
        %2868 = vmatpush1.msra.mxu0 0.0
        %2869 = vmatprep.subr.mxu0 0.0
        %2870 = vmatpush1.msra.mxu0 0.0
        %2871 = vmatprep.subr.mxu0 0.0
        %2872 = vmatpush1.msra.mxu0 0.0
        %2873 = vmatprep.subr.mxu0 0.0
        %2874 = vmatpush1.msra.mxu0 0.0
        %2875 = vmatprep.subr.mxu0 0.0
        %2876 = vmatpush1.msra.mxu0 0.0
        %2877 = vmatprep.subr.mxu0 0.0
        %2878 = vmatpush1.msra.mxu0 0.0
        %2879 = vmatprep.subr.mxu0 0.0
        %2880 = vmatpush1.msra.mxu0 0.0
        %2881 = vmatprep.subr.mxu0 0.0
        %2882 = vmatpush1.msra.mxu0 0.0
        %2883 = vmatprep.subr.mxu0 0.0
        %2884 = vmatpush1.msra.mxu0 0.0
        %2885 = vmatprep.subr.mxu0 0.0
        %2886 = vmatpush1.msra.mxu0 0.0
        %2887 = vmatprep.subr.mxu0 0.0
        %2888 = vmatpush1.msra.mxu0 0.0
        %2889 = vmatprep.subr.mxu0 0.0
        %2890 = vmatpush1.msra.mxu0 0.0
        %2891 = vmatprep.subr.mxu0 0.0
        %2892 = vmatpush1.msra.mxu0 0.0
        %2893 = vmatprep.subr.mxu0 0.0
        %2894 = vmatpush1.msra.mxu0 0.0
        %2895 = vmatprep.subr.mxu0 0.0
        %2896 = vmatpush1.msra.mxu0 0.0
        %2897 = vmatprep.subr.mxu0 0.0
        %2898 = vmatpush1.msra.mxu0 0.0
        %2899 = vmatprep.subr.mxu0 0.0
        %2900 = vmatpush1.msra.mxu0 0.0
        %2901 = vmatprep.subr.mxu0 0.0
        %2902 = vmatpush1.msra.mxu0 0.0
        %2903 = vmatprep.subr.mxu0 0.0
        %2904 = vmatpush1.msra.mxu0 0.0
        %2905 = vmatprep.subr.mxu0 0.0
        %2906 = vmatpush1.msra.mxu0 0.0
        %2907 = vmatprep.mubr.f32.mxu0 0.0
        %2908 = vmatmul.mubr.f32.gmra.mrb[0].mxu0 %v2841
        %v2909 = vpop.f32.mrb[0].mxu0
        %v2910 = vadd.f32 0.0, %v2909
        %v2911 = vpop.f32.mrb[0].mxu0
        %2912 = vdwg.mxu0
        %v2914 = vsel %vm1764, %v2757, 0
        %2916 = vmatprep.subr.mxu0 0.0
        %2917 = vmatpush1.msra.mxu0 %v2763
        %2918 = vmatprep.subr.mxu0 0.0
        %2919 = vmatpush1.msra.mxu0 0.0
        %2920 = vmatprep.subr.mxu0 0.0
        %2921 = vmatpush1.msra.mxu0 0.0
        %2922 = vmatprep.subr.mxu0 0.0
        %2923 = vmatpush1.msra.mxu0 0.0
        %2924 = vmatprep.subr.mxu0 0.0
        %2925 = vmatpush1.msra.mxu0 0.0
        %2926 = vmatprep.subr.mxu0 0.0
        %2927 = vmatpush1.msra.mxu0 0.0
        %2928 = vmatprep.subr.mxu0 0.0
        %2929 = vmatpush1.msra.mxu0 0.0
        %2930 = vmatprep.subr.mxu0 0.0
        %2931 = vmatpush1.msra.mxu0 0.0
        %2932 = vmatprep.subr.mxu0 0.0
        %2933 = vmatpush1.msra.mxu0 0.0
        %2934 = vmatprep.subr.mxu0 0.0
        %2935 = vmatpush1.msra.mxu0 0.0
        %2936 = vmatprep.subr.mxu0 0.0
        %2937 = vmatpush1.msra.mxu0 0.0
        %2938 = vmatprep.subr.mxu0 0.0
        %2939 = vmatpush1.msra.mxu0 0.0
        %2940 = vmatprep.subr.mxu0 0.0
        %2941 = vmatpush1.msra.mxu0 0.0
        %2942 = vmatprep.subr.mxu0 0.0
        %2943 = vmatpush1.msra.mxu0 0.0
        %2944 = vmatprep.subr.mxu0 0.0
        %2945 = vmatpush1.msra.mxu0 0.0
        %2946 = vmatprep.subr.mxu0 0.0
        %2947 = vmatpush1.msra.mxu0 0.0
        %2948 = vmatprep.subr.mxu0 0.0
        %2949 = vmatpush1.msra.mxu0 0.0
        %2950 = vmatprep.subr.mxu0 0.0
        %2951 = vmatpush1.msra.mxu0 0.0
        %2952 = vmatprep.subr.mxu0 0.0
        %2953 = vmatpush1.msra.mxu0 0.0
        %2954 = vmatprep.subr.mxu0 0.0
        %2955 = vmatpush1.msra.mxu0 0.0
        %2956 = vmatprep.subr.mxu0 0.0
        %2957 = vmatpush1.msra.mxu0 0.0
        %2958 = vmatprep.subr.mxu0 0.0
        %2959 = vmatpush1.msra.mxu0 0.0
        %2960 = vmatprep.subr.mxu0 0.0
        %2961 = vmatpush1.msra.mxu0 0.0
        %2962 = vmatprep.subr.mxu0 0.0
        %2963 = vmatpush1.msra.mxu0 0.0
        %2964 = vmatprep.subr.mxu0 0.0
        %2965 = vmatpush1.msra.mxu0 0.0
        %2966 = vmatprep.subr.mxu0 0.0
        %2967 = vmatpush1.msra.mxu0 0.0
        %2968 = vmatprep.subr.mxu0 0.0
        %2969 = vmatpush1.msra.mxu0 0.0
        %2970 = vmatprep.subr.mxu0 0.0
        %2971 = vmatpush1.msra.mxu0 0.0
        %2972 = vmatprep.subr.mxu0 0.0
        %2973 = vmatpush1.msra.mxu0 0.0
        %2974 = vmatprep.subr.mxu0 0.0
        %2975 = vmatpush1.msra.mxu0 0.0
        %2976 = vmatprep.subr.mxu0 0.0
        %2977 = vmatpush1.msra.mxu0 0.0
        %2978 = vmatprep.subr.mxu0 0.0
        %2979 = vmatpush1.msra.mxu0 0.0
        %2980 = vmatprep.mubr.f32.mxu0 0.0
        %2981 = vmatmul.mubr.f32.gmra.mrb[0].mxu0 %v2914
        %v2982 = vpop.f32.mrb[0].mxu0
        %v2983 = vadd.f32 0.0, %v2982
        %v2984 = vpop.f32.mrb[0].mxu0
        %2985 = vdwg.mxu0
        %v2987 = vsel %vm1764, %v2758, 0
        %2989 = vmatprep.subr.mxu0 0.0
        %2990 = vmatpush1.msra.mxu0 %v2764
        %2991 = vmatprep.subr.mxu0 0.0
        %2992 = vmatpush1.msra.mxu0 0.0
        %2993 = vmatprep.subr.mxu0 0.0
        %2994 = vmatpush1.msra.mxu0 0.0
        %2995 = vmatprep.subr.mxu0 0.0
        %2996 = vmatpush1.msra.mxu0 0.0
        %2997 = vmatprep.subr.mxu0 0.0
        %2998 = vmatpush1.msra.mxu0 0.0
        %2999 = vmatprep.subr.mxu0 0.0
        %3000 = vmatpush1.msra.mxu0 0.0
        %3001 = vmatprep.subr.mxu0 0.0
        %3002 = vmatpush1.msra.mxu0 0.0
        %3003 = vmatprep.subr.mxu0 0.0
        %3004 = vmatpush1.msra.mxu0 0.0
        %3005 = vmatprep.subr.mxu0 0.0
        %3006 = vmatpush1.msra.mxu0 0.0
        %3007 = vmatprep.subr.mxu0 0.0
        %3008 = vmatpush1.msra.mxu0 0.0
        %3009 = vmatprep.subr.mxu0 0.0
        %3010 = vmatpush1.msra.mxu0 0.0
        %3011 = vmatprep.subr.mxu0 0.0
        %3012 = vmatpush1.msra.mxu0 0.0
        %3013 = vmatprep.subr.mxu0 0.0
        %3014 = vmatpush1.msra.mxu0 0.0
        %3015 = vmatprep.subr.mxu0 0.0
        %3016 = vmatpush1.msra.mxu0 0.0
        %3017 = vmatprep.subr.mxu0 0.0
        %3018 = vmatpush1.msra.mxu0 0.0
        %3019 = vmatprep.subr.mxu0 0.0
        %3020 = vmatpush1.msra.mxu0 0.0
        %3021 = vmatprep.subr.mxu0 0.0
        %3022 = vmatpush1.msra.mxu0 0.0
        %3023 = vmatprep.subr.mxu0 0.0
        %3024 = vmatpush1.msra.mxu0 0.0
        %3025 = vmatprep.subr.mxu0 0.0
        %3026 = vmatpush1.msra.mxu0 0.0
        %3027 = vmatprep.subr.mxu0 0.0
        %3028 = vmatpush1.msra.mxu0 0.0
        %3029 = vmatprep.subr.mxu0 0.0
        %3030 = vmatpush1.msra.mxu0 0.0
        %3031 = vmatprep.subr.mxu0 0.0
        %3032 = vmatpush1.msra.mxu0 0.0
        %3033 = vmatprep.subr.mxu0 0.0
        %3034 = vmatpush1.msra.mxu0 0.0
        %3035 = vmatprep.subr.mxu0 0.0
        %3036 = vmatpush1.msra.mxu0 0.0
        %3037 = vmatprep.subr.mxu0 0.0
        %3038 = vmatpush1.msra.mxu0 0.0
        %3039 = vmatprep.subr.mxu0 0.0
        %3040 = vmatpush1.msra.mxu0 0.0
        %3041 = vmatprep.subr.mxu0 0.0
        %3042 = vmatpush1.msra.mxu0 0.0
        %3043 = vmatprep.subr.mxu0 0.0
        %3044 = vmatpush1.msra.mxu0 0.0
        %3045 = vmatprep.subr.mxu0 0.0
        %3046 = vmatpush1.msra.mxu0 0.0
        %3047 = vmatprep.subr.mxu0 0.0
        %3048 = vmatpush1.msra.mxu0 0.0
        %3049 = vmatprep.subr.mxu0 0.0
        %3050 = vmatpush1.msra.mxu0 0.0
        %3051 = vmatprep.subr.mxu0 0.0
        %3052 = vmatpush1.msra.mxu0 0.0
        %3053 = vmatprep.mubr.f32.mxu0 0.0
        %3054 = vmatmul.mubr.f32.gmra.mrb[0].mxu0 %v2987
        %v3055 = vpop.f32.mrb[0].mxu0
        %v3056 = vadd.f32 0.0, %v3055
        %v3057 = vpop.f32.mrb[0].mxu0
        %3058 = vdwg.mxu0
        %v3060 = vsel %vm1764, %v2759, 0
        %3062 = vmatprep.subr.mxu0 0.0
        %3063 = vmatpush1.msra.mxu0 %v2765
        %3064 = vmatprep.subr.mxu0 0.0
        %3065 = vmatpush1.msra.mxu0 0.0
        %3066 = vmatprep.subr.mxu0 0.0
        %3067 = vmatpush1.msra.mxu0 0.0
        %3068 = vmatprep.subr.mxu0 0.0
        %3069 = vmatpush1.msra.mxu0 0.0
        %3070 = vmatprep.subr.mxu0 0.0
        %3071 = vmatpush1.msra.mxu0 0.0
        %3072 = vmatprep.subr.mxu0 0.0
        %3073 = vmatpush1.msra.mxu0 0.0
        %3074 = vmatprep.subr.mxu0 0.0
        %3075 = vmatpush1.msra.mxu0 0.0
        %3076 = vmatprep.subr.mxu0 0.0
        %3077 = vmatpush1.msra.mxu0 0.0
        %3078 = vmatprep.subr.mxu0 0.0
        %3079 = vmatpush1.msra.mxu0 0.0
        %3080 = vmatprep.subr.mxu0 0.0
        %3081 = vmatpush1.msra.mxu0 0.0
        %3082 = vmatprep.subr.mxu0 0.0
        %3083 = vmatpush1.msra.mxu0 0.0
        %3084 = vmatprep.subr.mxu0 0.0
        %3085 = vmatpush1.msra.mxu0 0.0
        %3086 = vmatprep.subr.mxu0 0.0
        %3087 = vmatpush1.msra.mxu0 0.0
        %3088 = vmatprep.subr.mxu0 0.0
        %3089 = vmatpush1.msra.mxu0 0.0
        %3090 = vmatprep.subr.mxu0 0.0
        %3091 = vmatpush1.msra.mxu0 0.0
        %3092 = vmatprep.subr.mxu0 0.0
        %3093 = vmatpush1.msra.mxu0 0.0
        %3094 = vmatprep.subr.mxu0 0.0
        %3095 = vmatpush1.msra.mxu0 0.0
        %3096 = vmatprep.subr.mxu0 0.0
        %3097 = vmatpush1.msra.mxu0 0.0
        %3098 = vmatprep.subr.mxu0 0.0
        %3099 = vmatpush1.msra.mxu0 0.0
        %3100 = vmatprep.subr.mxu0 0.0
        %3101 = vmatpush1.msra.mxu0 0.0
        %3102 = vmatprep.subr.mxu0 0.0
        %3103 = vmatpush1.msra.mxu0 0.0
        %3104 = vmatprep.subr.mxu0 0.0
        %3105 = vmatpush1.msra.mxu0 0.0
        %3106 = vmatprep.subr.mxu0 0.0
        %3107 = vmatpush1.msra.mxu0 0.0
        %3108 = vmatprep.subr.mxu0 0.0
        %3109 = vmatpush1.msra.mxu0 0.0
        %3110 = vmatprep.subr.mxu0 0.0
        %3111 = vmatpush1.msra.mxu0 0.0
        %3112 = vmatprep.subr.mxu0 0.0
        %3113 = vmatpush1.msra.mxu0 0.0
        %3114 = vmatprep.subr.mxu0 0.0
        %3115 = vmatpush1.msra.mxu0 0.0
        %3116 = vmatprep.subr.mxu0 0.0
        %3117 = vmatpush1.msra.mxu0 0.0
        %3118 = vmatprep.subr.mxu0 0.0
        %3119 = vmatpush1.msra.mxu0 0.0
        %3120 = vmatprep.subr.mxu0 0.0
        %3121 = vmatpush1.msra.mxu0 0.0
        %3122 = vmatprep.subr.mxu0 0.0
        %3123 = vmatpush1.msra.mxu0 0.0
        %3124 = vmatprep.subr.mxu0 0.0
        %3125 = vmatpush1.msra.mxu0 0.0
        %3126 = vmatprep.mubr.f32.mxu0 0.0
        %3127 = vmatmul.mubr.f32.gmra.mrb[0].mxu0 %v3060
        %v3128 = vpop.f32.mrb[0].mxu0
        %v3129 = vadd.f32 0.0, %v3128
        %v3130 = vpop.f32.mrb[0].mxu0
        %3131 = vdwg.mxu0
        %v3133 = vsel %vm1764, %v2760, 0
        %3135 = vmatprep.subr.mxu0 0.0
        %3136 = vmatpush1.msra.mxu0 %v2766
        %3137 = vmatprep.subr.mxu0 0.0
        %3138 = vmatpush1.msra.mxu0 0.0
        %3139 = vmatprep.subr.mxu0 0.0
        %3140 = vmatpush1.msra.mxu0 0.0
        %3141 = vmatprep.subr.mxu0 0.0
        %3142 = vmatpush1.msra.mxu0 0.0
        %3143 = vmatprep.subr.mxu0 0.0
        %3144 = vmatpush1.msra.mxu0 0.0
        %3145 = vmatprep.subr.mxu0 0.0
        %3146 = vmatpush1.msra.mxu0 0.0
        %3147 = vmatprep.subr.mxu0 0.0
        %3148 = vmatpush1.msra.mxu0 0.0
        %3149 = vmatprep.subr.mxu0 0.0
        %3150 = vmatpush1.msra.mxu0 0.0
        %3151 = vmatprep.subr.mxu0 0.0
        %3152 = vmatpush1.msra.mxu0 0.0
        %3153 = vmatprep.subr.mxu0 0.0
        %3154 = vmatpush1.msra.mxu0 0.0
        %3155 = vmatprep.subr.mxu0 0.0
        %3156 = vmatpush1.msra.mxu0 0.0
        %3157 = vmatprep.subr.mxu0 0.0
        %3158 = vmatpush1.msra.mxu0 0.0
        %3159 = vmatprep.subr.mxu0 0.0
        %3160 = vmatpush1.msra.mxu0 0.0
        %3161 = vmatprep.subr.mxu0 0.0
        %3162 = vmatpush1.msra.mxu0 0.0
        %3163 = vmatprep.subr.mxu0 0.0
        %3164 = vmatpush1.msra.mxu0 0.0
        %3165 = vmatprep.subr.mxu0 0.0
        %3166 = vmatpush1.msra.mxu0 0.0
        %3167 = vmatprep.subr.mxu0 0.0
        %3168 = vmatpush1.msra.mxu0 0.0
        %3169 = vmatprep.subr.mxu0 0.0
        %3170 = vmatpush1.msra.mxu0 0.0
        %3171 = vmatprep.subr.mxu0 0.0
        %3172 = vmatpush1.msra.mxu0 0.0
        %3173 = vmatprep.subr.mxu0 0.0
        %3174 = vmatpush1.msra.mxu0 0.0
        %3175 = vmatprep.subr.mxu0 0.0
        %3176 = vmatpush1.msra.mxu0 0.0
        %3177 = vmatprep.subr.mxu0 0.0
        %3178 = vmatpush1.msra.mxu0 0.0
        %3179 = vmatprep.subr.mxu0 0.0
        %3180 = vmatpush1.msra.mxu0 0.0
        %3181 = vmatprep.subr.mxu0 0.0
        %3182 = vmatpush1.msra.mxu0 0.0
        %3183 = vmatprep.subr.mxu0 0.0
        %3184 = vmatpush1.msra.mxu0 0.0
        %3185 = vmatprep.subr.mxu0 0.0
        %3186 = vmatpush1.msra.mxu0 0.0
        %3187 = vmatprep.subr.mxu0 0.0
        %3188 = vmatpush1.msra.mxu0 0.0
        %3189 = vmatprep.subr.mxu0 0.0
        %3190 = vmatpush1.msra.mxu0 0.0
        %3191 = vmatprep.subr.mxu0 0.0
        %3192 = vmatpush1.msra.mxu0 0.0
        %3193 = vmatprep.subr.mxu0 0.0
        %3194 = vmatpush1.msra.mxu0 0.0
        %3195 = vmatprep.subr.mxu0 0.0
        %3196 = vmatpush1.msra.mxu0 0.0
        %3197 = vmatprep.subr.mxu0 0.0
        %3198 = vmatpush1.msra.mxu0 0.0
        %3199 = vmatprep.mubr.f32.mxu0 0.0
        %3200 = vmatmul.mubr.f32.gmra.mrb[0].mxu0 %v3133
        %v3201 = vpop.f32.mrb[0].mxu0
        %v3202 = vadd.f32 0.0, %v3201
        %v3203 = vpop.f32.mrb[0].mxu0
        %3204 = vdwg.mxu0
        %v3205 = vadd.f32 %v2837, %v2910
        %v3206 = vadd.f32 %v3205, %v2983
        %v3207 = vadd.f32 %v3206, %v3056
        %v3208 = vadd.f32 %v3207, %v3129
        %v3209 = vadd.f32 %v3208, %v3202
        %v3210 = vld [vmem:[%s4] sm:$0x1]
        %v3212 = vlaneseq
        %v3213 = vshrl.u32 %v3212, 7
        %v3214 = vsub.s32 0, %v3213
        %v3215 = vrot.slane %v3210, %v3214
        %v3217 = vadd.f32 %v3209, %v3215
        %v3218 = vadd.f32 %v3217, %v301
        %v3219 = vsel %vm500, %v3218, 0.0
        %3220 = vadd.xlane.f32.xlu0 %v3219
        %v3221 = vpop.xlane.xlu0 %3220
        %v3222 = vrcp.pop 32.0
        %v3223 = vmul.f32 %v3221, %v3222
        %v3224 = vsub.f32 %v3218, %v3223
        %v3225 = vmul.f32 %v3224, %v3224
        %v3226 = vsel %vm500, %v3225, 0.0
        %3227 = vadd.xlane.f32.xlu0 %v3226
        %v3228 = vpop.xlane.xlu0 %3227
        %v3229 = vmul.f32 %v3228, %v3222
        %v3230 = vadd.f32 %v3229, 1e-12
        %v3231 = vrsqrt.pop %v3230
        %v3232 = vmul.f32 %v3224, %v3231
        %v3233 = vld [vmem:[%s5] sm:$0x1]
        %v3235 = vlaneseq
        %v3236 = vshrl.u32 %v3235, 7
        %v3237 = vsub.s32 0, %v3236
        %v3238 = vrot.slane %v3233, %v3237
        %v3240 = vmul.f32 %v3232, %v3238
        %v3241 = vld [vmem:[%s6] sm:$0x1]
        %v3243 = vlaneseq
        %v3244 = vshrl.u32 %v3243, 7
        %v3245 = vsub.s32 0, %v3244
        %v3246 = vrot.slane %v3241, %v3245
        %v3248 = vadd.f32 %v3240, %v3246
        %3249 = vst.msk [vmem:[%s296] sm:$0xff] %vm500, %v3248
        %s3250 = sand.u32 %s203, 1
        %s3251 = scalar_lea.sflag [#allocation3], %s3250
        %s3252 = sand.u32 %s203, 1
        %s3253 = smul.addr %s3252, 8
        %s3254 = scalar_lea.vmem [#allocation2], %s3253
        // Predicated region
        $region53: #{tpu_custom_call.1} parent=51 // pred_check
          %p3255 = pneg %p213
        $region54: #{tpu_custom_call.1} parent=51 // pred_check_branch
          %3257 = sbr.rel (%p3255) target = $region56
        $region55: #{tpu_custom_call.1} parent=51 // pred_region
          %s3259 = ssub.s32 128, 128
          %3260 = vsyncadd %s3251, %s3259
          %s3261 = smul.addr %s22, 128
          %s3262 = scalar_lea.hbm %s8, %s3261
          %s3264 = sshll.u32 %s3254, 4
          %s3265 = int_to_ptr.vmem [resolvable:$true] %s3264
          %3267 = dma.vmem_to_hbm [thread:$0]  %s3265, 128, %s3262, %s3251
        $region56: #{tpu_custom_call.1} parent=51 // pred_fallthru
          _
      $region52: #{tpu_custom_call.1} parent=5 // pred_fallthru
        _
      %p3268 = scmp.le.s32.totalorder 2, %s17
      // Predicated region
      $region57: #{tpu_custom_call.1} parent=5 // pred_check
        %p3269 = pneg %p3268
      $region58: #{tpu_custom_call.1} parent=5 // pred_check_branch
        %3271 = sbr.rel (%p3269) target = $region60
      $region59: #{tpu_custom_call.1} parent=5 // pred_region
        %s3272 = ssub.s32 %s17, 2
        // Predicated region
        $region61: #{tpu_custom_call.1} parent=59 // pred_check
          %p3273 = pneg %p219
        $region62: #{tpu_custom_call.1} parent=59 // pred_check_branch
          %3275 = sbr.rel (%p3273) target = $region64
        $region63: #{tpu_custom_call.1} parent=59 // pred_region
          %s3276 = sand.u32 %s204, 1
          %s3277 = scalar_lea.sflag [#allocation3], %s3276
          %s3278 = sand.u32 %s204, 1
          %s3279 = smul.addr %s3278, 8
          %s3280 = scalar_lea.vmem [#allocation2], %s3279
          %3281 = dma.done %s3277, 128
        $region64: #{tpu_custom_call.1} parent=59 // pred_fallthru
          _
      $region60: #{tpu_custom_call.1} parent=5 // pred_fallthru
        _
    $region6: #{tpu_custom_call.1} parent=1 // loop_footer
      %s21 = sadd.s32 1, %s17
    $region7: #{tpu_custom_call.1} parent=1 // loop_footer_branch
      %16 = sbr.rel target = $region3
    $region8: #{tpu_custom_call.1} parent=1 // loop_exit
      _
    %3282 = vsyncpa [#allocation3], 1
    %s3283 = scalar_lea.sflag [#allocation3], 1
    %3284 = vsyncpa %s3283, 1

</llo_original>
